<compile_context>
chip_gen: v5e
topology: v5e:2x2
jax: 0.10.0
libtpu: 0.0.40
codegen_flags: <defaults>
</compile_context>

<pallas_src>
import jax
import jax.numpy as jnp
import numpy as np
from jax.experimental import pallas as pl
from jax.experimental.pallas import tpu as pltpu

# ---- constants from the PyTorch module ----
IN_CHANNELS = 16
OUT_CHANNELS = 32
KERNEL_SIZE = 3
STRIDE = 2
PADDING = 1
BN_EPS = 1e-5


def _conv_stats_kernel(w_ref, p_ref, y_ref, stats_ref, acc_ref):
    # w_ref:     (Cout, KC)        GEMM weight (constant block index -> DMA'd once)
    # p_ref:     (1, KC, TS)       im2col patches, spatial on lanes
    # y_ref:     (1, Cout, TS)     conv-transpose output tile (lane-dense stores)
    # stats_ref: (1, Cout, 2)      per-sample (sum, sumsq) over spatial, written once
    # acc_ref:   (Cout, 2) scratch running per-channel sum / sumsq for this sample
    t = pl.program_id(1)

    y = jnp.dot(w_ref[...], p_ref[0], preferred_element_type=jnp.float32)
    y_ref[0] = y.astype(y_ref.dtype)

    @pl.when(t == 0)
    def _():
        acc_ref[...] = jnp.zeros_like(acc_ref)

    # Padded spatial lanes hold zero patches (and no bias is added), so they
    # contribute exactly 0 to both statistics.
    acc_ref[:, 0:1] += jnp.sum(y, axis=1, keepdims=True)
    acc_ref[:, 1:2] += jnp.sum(y * y, axis=1, keepdims=True)

    @pl.when(t == pl.num_programs(1) - 1)
    def _():
        stats_ref[0] = acc_ref[...]


def _norm_sub_kernel(y_ref, sc_ref, sub_ref, o_ref):
    # out = scale_c * (y - spatial_mean_nc)  ==  y * sc - sub   (pure streaming op)
    # y_ref/o_ref: (1, Cout, TS); sc_ref: (1, Cout, 1); sub_ref: (1, Cout, 1)
    o_ref[0] = y_ref[0] * sc_ref[0] - sub_ref[0]


def _pick_spatial_tile(S, ts_max=1536):
    """Smallest number of lane tiles <= ts_max that minimizes spatial padding."""
    nt = max(1, -(-S // ts_max))                       # cdiv(S, ts_max)
    ts = ((-(-S // nt) + 127) // 128) * 128            # round up per-tile size to 128
    return ts, nt


def model_forward(x, weight, bias, gamma, beta):
    """x: (N, Cin, D, H, W); weight: (Cin, Cout, K, K, K). Returns (N, Cout, Do, Ho, Wo)."""
    N, Cin, D, H, W = x.shape
    K, s, p = KERNEL_SIZE, STRIDE, PADDING
    Cout = weight.shape[1]
    Do = (D - 1) * s - 2 * p + K
    Ho = (H - 1) * s - 2 * p + K
    Wo = (W - 1) * s - 2 * p + K
    S = Do * Ho * Wo
    KC = K * K * K * Cin

    TS, NT = _pick_spatial_tile(S)
    S_pad = NT * TS

    # ---- glue (data movement only): zero-dilate + pad, build transposed im2col ----
    Dd, Hd, Wd = s * (D - 1) + 1, s * (H - 1) + 1, s * (W - 1) + 1
    x_d = jnp.zeros((N, Cin, Dd, Hd, Wd), x.dtype).at[:, :, ::s, ::s, ::s].set(x)
    pp = K - 1 - p
    x_dp = jnp.pad(x_d, ((0, 0), (0, 0), (pp, pp), (pp, pp), (pp, pp)))
    taps = []
    for kd in range(K):
        for kh in range(K):
            for kw in range(K):
                taps.append(x_dp[:, :, kd:kd + Do, kh:kh + Ho, kw:kw + Wo])
    # rows of KC are tap-major, Cin-minor; spatial flattened row-major over (D, H, W)
    patches = jnp.stack(taps, axis=1).reshape(N, KC, S)
    patches = jnp.pad(patches, ((0, 0), (0, 0), (0, S_pad - S)))          # (N, KC, S_pad)

    # transposed-conv weight -> (Cout, KC) GEMM weight (spatially flipped)
    w_k = jnp.transpose(jnp.flip(weight, axis=(2, 3, 4)), (2, 3, 4, 0, 1))  # (K,K,K,Cin,Cout)
    w_mat_t = jnp.transpose(w_k.reshape(KC, Cout), (1, 0))                   # (Cout, KC)

    # NOTE: the conv bias cancels exactly — BatchNorm subtracts the batch mean and the
    # final op subtracts the per-(n,c) spatial mean, so any per-channel constant never
    # reaches the output (variance is also shift-invariant). It is therefore not added.
    _ = bias

    # ---- Pallas kernel 1: conv-transpose GEMM + per-sample channel sum / sumsq ----
    y, stats = pl.pallas_call(
        _conv_stats_kernel,
        out_shape=(
            jax.ShapeDtypeStruct((N, Cout, S_pad), jnp.float32),
            jax.ShapeDtypeStruct((N, Cout, 2), jnp.float32),
        ),
        grid_spec=pltpu.PrefetchScalarGridSpec(
            num_scalar_prefetch=0,
            grid=(N, NT),
            in_specs=[
                pl.BlockSpec((Cout, KC), lambda n, t: (0, 0)),
                pl.BlockSpec((1, KC, TS), lambda n, t: (n, 0, t)),
            ],
            out_specs=(
                pl.BlockSpec((1, Cout, TS), lambda n, t: (n, 0, t)),
                pl.BlockSpec((1, Cout, 2), lambda n, t: (n, 0, 0)),
            ),
            scratch_shapes=[pltpu.VMEM((Cout, 2), jnp.float32)],
        ),
        compiler_params=pltpu.CompilerParams(
            dimension_semantics=("parallel", "arbitrary"),
        ),
    )(w_mat_t, patches)

    # ---- glue: finish BN statistics, fold everything into per-(n,c) scale / subtract ----
    sum_nc = stats[:, :, 0]                       # (N, Cout) per-sample spatial sums
    sumsq_nc = stats[:, :, 1]
    count = N * S
    mean_c = jnp.sum(sum_nc, axis=0) / count
    var_c = jnp.sum(sumsq_nc, axis=0) / count - mean_c * mean_c   # biased (training BN)
    scale_c = gamma * jax.lax.rsqrt(var_c + BN_EPS)               # (Cout,)
    rowmean_nc = sum_nc / S                                       # per-(n,c) spatial mean
    sc = scale_c.reshape(1, Cout, 1)
    sub = (rowmean_nc * scale_c[None, :]).reshape(N, Cout, 1)

    # ---- Pallas kernel 2: out = y * scale - sub (streaming, lane-dense) ----
    out = pl.pallas_call(
        _norm_sub_kernel,
        out_shape=jax.ShapeDtypeStruct((N, Cout, S_pad), jnp.float32),
        grid_spec=pltpu.PrefetchScalarGridSpec(
            num_scalar_prefetch=0,
            grid=(N, NT),
            in_specs=[
                pl.BlockSpec((1, Cout, TS), lambda n, t: (n, 0, t)),
                pl.BlockSpec((1, Cout, 1), lambda n, t: (0, 0, 0)),
                pl.BlockSpec((1, Cout, 1), lambda n, t: (n, 0, 0)),
            ],
            out_specs=pl.BlockSpec((1, Cout, TS), lambda n, t: (n, 0, t)),
        ),
        compiler_params=pltpu.CompilerParams(
            dimension_semantics=("parallel", "parallel"),
        ),
    )(y, sc, sub)

    # (N, Cout, S_pad) -> drop spatial padding -> NCDHW (no transpose needed)
    return out[:, :, :S].reshape(N, Cout, Do, Ho, Wo)


def reference_forward(x, weight, bias, gamma, beta):
    """Pure-JAX reference (conv_transpose via lhs-dilated conv + BN + mean subtraction)."""
    K, s, p = KERNEL_SIZE, STRIDE, PADDING
    w_conv = jnp.transpose(jnp.flip(weight, axis=(2, 3, 4)), (1, 0, 2, 3, 4))  # (Cout,Cin,K,K,K)
    y = jax.lax.conv_general_dilated(
        x, w_conv, window_strides=(1, 1, 1),
        padding=[(K - 1 - p, K - 1 - p)] * 3,
        lhs_dilation=(s, s, s),
        dimension_numbers=("NCDHW", "OIDHW", "NCDHW"))
    y = y + bias[None, :, None, None, None]
    mean = jnp.mean(y, axis=(0, 2, 3, 4), keepdims=True)
    var = jnp.var(y, axis=(0, 2, 3, 4), keepdims=True)
    yn = (y - mean) * jax.lax.rsqrt(var + BN_EPS)
    yn = yn * gamma[None, :, None, None, None] + beta[None, :, None, None, None]
    return yn - jnp.mean(yn, axis=(2, 3, 4), keepdims=True)


if __name__ == "__main__":
    key = jax.random.PRNGKey(0)
    k1, k2, k3, k4, k5 = jax.random.split(key, 5)

    N, D, H, W = 2, 8, 8, 8
    x = jax.random.normal(k1, (N, IN_CHANNELS, D, H, W), jnp.float32)

    fan = IN_CHANNELS * KERNEL_SIZE ** 3
    bound = 1.0 / np.sqrt(fan)
    weight = jax.random.uniform(
        k2, (IN_CHANNELS, OUT_CHANNELS, KERNEL_SIZE, KERNEL_SIZE, KERNEL_SIZE),
        jnp.float32, -bound, bound)
    bias = jax.random.uniform(k3, (OUT_CHANNELS,), jnp.float32, -bound, bound)
    gamma = 1.0 + 0.1 * jax.random.normal(k4, (OUT_CHANNELS,), jnp.float32)
    beta = 0.1 * jax.random.normal(k5, (OUT_CHANNELS,), jnp.float32)

    out = jax.jit(model_forward)(x, weight, bias, gamma, beta)
    out = jax.block_until_ready(out)

    ref = reference_forward(x, weight, bias, gamma, beta)
    np.testing.assert_allclose(np.asarray(out), np.asarray(ref), rtol=2e-3, atol=2e-3)
    print("KERNEL_OK")
</pallas_src>

<mosaic_0001>
module attributes {stable_mosaic.version = 11 : i64} {
  func.func @_conv_stats_kernel(%arg0: i32, %arg1: i32, %arg2: memref<32x432xf32, #tpu.memory_space<vmem>>, %arg3: memref<1x432x1152xf32, #tpu.memory_space<vmem>>, %arg4: memref<1x32x1152xf32, #tpu.memory_space<vmem>>, %arg5: memref<1x32x2xf32, #tpu.memory_space<vmem>>, %arg6: memref<32x2xf32, #tpu.memory_space<vmem>>) attributes {dimension_semantics = [#tpu.dimension_semantics<parallel>, #tpu.dimension_semantics<arbitrary>], iteration_bounds = array<i64: 2, 3>, scalar_prefetch = 0 : i64, scratch_operands = 1 : i64, tpu.core_type = #tpu.core_type<tc>, window_params = [{pipeline_mode = #tpu.pipeline_mode<synchronous>, transform_indices = @transform_0, window_bounds = array<i64: 32, 432>}, {transform_indices = @transform_1, window_bounds = array<i64: 1, 432, 1152>}, {transform_indices = @transform_2, window_bounds = array<i64: 1, 32, 1152>}, {transform_indices = @transform_3, window_bounds = array<i64: 1, 32, 2>}]} {
    %c0 = arith.constant 0 : index
    %c0_0 = arith.constant 0 : index
    %0 = vector.load %arg2[%c0, %c0_0] : memref<32x432xf32, #tpu.memory_space<vmem>>, vector<32x432xf32>
    %c0_1 = arith.constant 0 : index
    %c0_2 = arith.constant 0 : index
    %c0_3 = arith.constant 0 : index
    %1 = vector.load %arg3[%c0_1, %c0_2, %c0_3] : memref<1x432x1152xf32, #tpu.memory_space<vmem>>, vector<1x432x1152xf32>
    %2 = vector.shape_cast %1 : vector<1x432x1152xf32> to vector<432x1152xf32>
    %cst = arith.constant dense<0.000000e+00> : vector<32x1152xf32>
    %3 = tpu.matmul %0, %2, %cst {dimension_numbers = #tpu.dot_dimension_numbers<[1], [0], [0], [1], [0, 0, 1, 1], [], []>} : vector<32x432xf32>, vector<432x1152xf32>, vector<32x1152xf32> -> vector<32x1152xf32>
    %c0_4 = arith.constant 0 : index
    %c0_5 = arith.constant 0 : index
    %c0_6 = arith.constant 0 : index
    %4 = vector.load %arg4[%c0_4, %c0_5, %c0_6] : memref<1x32x1152xf32, #tpu.memory_space<vmem>>, vector<1x32x1152xf32>
    %5 = vector.shape_cast %4 : vector<1x32x1152xf32> to vector<32x1152xf32>
    %6 = vector.shape_cast %3 : vector<32x1152xf32> to vector<1x32x1152xf32>
    tpu.vector_store %arg4[%c0_4, %c0_5, %c0_6], %6 {strides = array<i32>} : memref<1x32x1152xf32, #tpu.memory_space<vmem>>, vector<1x32x1152xf32>,
    %c0_i32 = arith.constant 0 : i32
    %7 = arith.cmpi eq, %arg1, %c0_i32 : i32
    %8 = arith.extui %7 : i1 to i32
    %c0_i32_7 = arith.constant 0 : i32
    %9 = arith.cmpi ne, %8, %c0_i32_7 : i32
    scf.if %9 {
      %cst_18 = arith.constant 0.000000e+00 : f32
      %24 = vector.broadcast %cst_18 : f32 to vector<32x2xf32>
      %c0_19 = arith.constant 0 : index
      %c0_20 = arith.constant 0 : index
      %25 = vector.load %arg6[%c0_19, %c0_20] : memref<32x2xf32, #tpu.memory_space<vmem>>, vector<32x2xf32>
      tpu.vector_store %arg6[%c0_19, %c0_20], %24 {strides = array<i32>} : memref<32x2xf32, #tpu.memory_space<vmem>>, vector<32x2xf32>,
    } else {
    }
    %c0_8 = arith.constant 0 : index
    %c0_9 = arith.constant 0 : index
    %10 = vector.load %arg6[%c0_8, %c0_9] : memref<32x2xf32, #tpu.memory_space<vmem>>, vector<32x1xf32>
    %cst_10 = arith.constant dense<0.000000e+00> : vector<32xf32>
    %11 = vector.multi_reduction <add>, %3, %cst_10 [1] : vector<32x1152xf32> to vector<32xf32>
    %12 = vector.shape_cast %11 : vector<32xf32> to vector<32x1xf32>
    %13 = arith.addf %10, %12 : vector<32x1xf32>
    %c0_11 = arith.constant 0 : index
    %c0_12 = arith.constant 0 : index
    %14 = vector.load %arg6[%c0_11, %c0_12] : memref<32x2xf32, #tpu.memory_space<vmem>>, vector<32x1xf32>
    tpu.vector_store %arg6[%c0_11, %c0_12], %13 {strides = array<i32>} : memref<32x2xf32, #tpu.memory_space<vmem>>, vector<32x1xf32>,
    %c0_13 = arith.constant 0 : index
    %c1 = arith.constant 1 : index
    %15 = vector.load %arg6[%c0_13, %c1] : memref<32x2xf32, #tpu.memory_space<vmem>>, vector<32x1xf32>
    %16 = arith.mulf %3, %3 : vector<32x1152xf32>
    %cst_14 = arith.constant dense<0.000000e+00> : vector<32xf32>
    %17 = vector.multi_reduction <add>, %16, %cst_14 [1] : vector<32x1152xf32> to vector<32xf32>
    %18 = vector.shape_cast %17 : vector<32xf32> to vector<32x1xf32>
    %19 = arith.addf %15, %18 : vector<32x1xf32>
    %c0_15 = arith.constant 0 : index
    %c1_16 = arith.constant 1 : index
    %20 = vector.load %arg6[%c0_15, %c1_16] : memref<32x2xf32, #tpu.memory_space<vmem>>, vector<32x1xf32>
    tpu.vector_store %arg6[%c0_15, %c1_16], %19 {strides = array<i32>} : memref<32x2xf32, #tpu.memory_space<vmem>>, vector<32x1xf32>,
    %c2_i32 = arith.constant 2 : i32
    %21 = arith.cmpi eq, %arg1, %c2_i32 : i32
    %22 = arith.extui %21 : i1 to i32
    %c0_i32_17 = arith.constant 0 : i32
    %23 = arith.cmpi ne, %22, %c0_i32_17 : i32
    scf.if %23 {
      %c0_18 = arith.constant 0 : index
      %c0_19 = arith.constant 0 : index
      %24 = vector.load %arg6[%c0_18, %c0_19] : memref<32x2xf32, #tpu.memory_space<vmem>>, vector<32x2xf32>
      %c0_20 = arith.constant 0 : index
      %c0_21 = arith.constant 0 : index
      %c0_22 = arith.constant 0 : index
      %25 = vector.load %arg5[%c0_20, %c0_21, %c0_22] : memref<1x32x2xf32, #tpu.memory_space<vmem>>, vector<1x32x2xf32>
      %26 = vector.shape_cast %25 : vector<1x32x2xf32> to vector<32x2xf32>
      %27 = vector.shape_cast %24 : vector<32x2xf32> to vector<1x32x2xf32>
      tpu.vector_store %arg5[%c0_20, %c0_21, %c0_22], %27 {strides = array<i32>} : memref<1x32x2xf32, #tpu.memory_space<vmem>>, vector<1x32x2xf32>,
    } else {
    }
    return
  }
  func.func @transform_0(%arg0: i32, %arg1: i32) -> (i32, i32) {
    %c0_i32 = arith.constant 0 : i32
    %c0_i32_0 = arith.constant 0 : i32
    %c0_i32_1 = arith.constant 0 : i32
    return %c0_i32, %c0_i32_0 : i32, i32
  }
  func.func @transform_1(%arg0: i32, %arg1: i32) -> (i32, i32, i32) {
    %c0_i32 = arith.constant 0 : i32
    %c0_i32_0 = arith.constant 0 : i32
    return %arg0, %c0_i32, %arg1 : i32, i32, i32
  }
  func.func @transform_2(%arg0: i32, %arg1: i32) -> (i32, i32, i32) {
    %c0_i32 = arith.constant 0 : i32
    %c0_i32_0 = arith.constant 0 : i32
    return %arg0, %c0_i32, %arg1 : i32, i32, i32
  }
  func.func @transform_3(%arg0: i32, %arg1: i32) -> (i32, i32, i32) {
    %c0_i32 = arith.constant 0 : i32
    %c0_i32_0 = arith.constant 0 : i32
    %c0_i32_1 = arith.constant 0 : i32
    return %arg0, %c0_i32, %c0_i32_0 : i32, i32, i32
  }
}

module attributes {stable_mosaic.version = 11 : i64} {
  func.func @_norm_sub_kernel(%arg0: i32, %arg1: i32, %arg2: memref<1x32x1152xf32, #tpu.memory_space<vmem>>, %arg3: memref<1x32x1xf32, #tpu.memory_space<vmem>>, %arg4: memref<1x32x1xf32, #tpu.memory_space<vmem>>, %arg5: memref<1x32x1152xf32, #tpu.memory_space<vmem>>) attributes {dimension_semantics = [#tpu.dimension_semantics<parallel>, #tpu.dimension_semantics<parallel>], iteration_bounds = array<i64: 2, 3>, scalar_prefetch = 0 : i64, scratch_operands = 0 : i64, tpu.core_type = #tpu.core_type<tc>, window_params = [{transform_indices = @transform_0, window_bounds = array<i64: 1, 32, 1152>}, {pipeline_mode = #tpu.pipeline_mode<synchronous>, transform_indices = @transform_1, window_bounds = array<i64: 1, 32, 1>}, {transform_indices = @transform_2, window_bounds = array<i64: 1, 32, 1>}, {transform_indices = @transform_3, window_bounds = array<i64: 1, 32, 1152>}]} {
    %c0 = arith.constant 0 : index
    %c0_0 = arith.constant 0 : index
    %c0_1 = arith.constant 0 : index
    %0 = vector.load %arg2[%c0, %c0_0, %c0_1] : memref<1x32x1152xf32, #tpu.memory_space<vmem>>, vector<1x32x1152xf32>
    %1 = vector.shape_cast %0 : vector<1x32x1152xf32> to vector<32x1152xf32>
    %c0_2 = arith.constant 0 : index
    %c0_3 = arith.constant 0 : index
    %c0_4 = arith.constant 0 : index
    %2 = vector.load %arg3[%c0_2, %c0_3, %c0_4] : memref<1x32x1xf32, #tpu.memory_space<vmem>>, vector<1x32x1xf32>
    %3 = vector.shape_cast %2 : vector<1x32x1xf32> to vector<32x1xf32>
    %4 = vector.broadcast %3 : vector<32x1xf32> to vector<32x1152xf32>
    %5 = arith.mulf %1, %4 : vector<32x1152xf32>
    %c0_5 = arith.constant 0 : index
    %c0_6 = arith.constant 0 : index
    %c0_7 = arith.constant 0 : index
    %6 = vector.load %arg4[%c0_5, %c0_6, %c0_7] : memref<1x32x1xf32, #tpu.memory_space<vmem>>, vector<1x32x1xf32>
    %7 = vector.shape_cast %6 : vector<1x32x1xf32> to vector<32x1xf32>
    %8 = vector.broadcast %7 : vector<32x1xf32> to vector<32x1152xf32>
    %9 = arith.subf %5, %8 : vector<32x1152xf32>
    %c0_8 = arith.constant 0 : index
    %c0_9 = arith.constant 0 : index
    %c0_10 = arith.constant 0 : index
    %10 = vector.load %arg5[%c0_8, %c0_9, %c0_10] : memref<1x32x1152xf32, #tpu.memory_space<vmem>>, vector<1x32x1152xf32>
    %11 = vector.shape_cast %10 : vector<1x32x1152xf32> to vector<32x1152xf32>
    %12 = vector.shape_cast %9 : vector<32x1152xf32> to vector<1x32x1152xf32>
    tpu.vector_store %arg5[%c0_8, %c0_9, %c0_10], %12 {strides = array<i32>} : memref<1x32x1152xf32, #tpu.memory_space<vmem>>, vector<1x32x1152xf32>,
    return
  }
  func.func @transform_0(%arg0: i32, %arg1: i32) -> (i32, i32, i32) {
    %c0_i32 = arith.constant 0 : i32
    %c0_i32_0 = arith.constant 0 : i32
    return %arg0, %c0_i32, %arg1 : i32, i32, i32
  }
  func.func @transform_1(%arg0: i32, %arg1: i32) -> (i32, i32, i32) {
    %c0_i32 = arith.constant 0 : i32
    %c0_i32_0 = arith.constant 0 : i32
    %c0_i32_1 = arith.constant 0 : i32
    %c0_i32_2 = arith.constant 0 : i32
    return %c0_i32, %c0_i32_0, %c0_i32_1 : i32, i32, i32
  }
  func.func @transform_2(%arg0: i32, %arg1: i32) -> (i32, i32, i32) {
    %c0_i32 = arith.constant 0 : i32
    %c0_i32_0 = arith.constant 0 : i32
    %c0_i32_1 = arith.constant 0 : i32
    return %arg0, %c0_i32, %c0_i32_0 : i32, i32, i32
  }
  func.func @transform_3(%arg0: i32, %arg1: i32) -> (i32, i32, i32) {
    %c0_i32 = arith.constant 0 : i32
    %c0_i32_0 = arith.constant 0 : i32
    return %arg0, %c0_i32, %arg1 : i32, i32, i32
  }
}

</mosaic_0001>

<llo_original>
// kernel: model_forward.3
$region0: #{model_forward.3}
  #allocation0 [shape = 'u32[]', space=smem, size = 0x4, offset = 0x4, fixed_abs, tag = 'smem constant byte address 0x4 - core index']
  #allocation1 [shape = 'u32[72,128]{1,0:T(1,128)}', space=vmem, size = 0x9000, scoped, tag = 'internal scratch']
  %s0 = inlined_call_operand.vmem [shape: f32[2,32,3456], index: 0, kind: input, shape index: {}]
  %s1 = inlined_call_operand.vmem [shape: f32[1,32,1], index: 1, kind: input, shape index: {}]
  %s2 = inlined_call_operand.vmem [shape: f32[2,32,1], index: 2, kind: input, shape index: {}]
  %s3 = inlined_call_operand.vmem [shape: f32[2,32,3456], index: 3, kind: output, shape index: {}]
  %s4 = sld [smem:[#allocation0]]
  $region87: #{model_forward.3} parent=0
    _
  %s6 = ssub.s32 1, %s4
  %s7 = scalar_select 0, %s6, %s4
  $region1: #{model_forward.3} parent=0
    #allocation2 [shape = 'u8[294912]{0}', space=vmem, size = 0x48000, scoped, tag = 'input window, operand 0']
    #allocation3 [shape = 'u8[294912]{0}', space=vmem, size = 0x48000, scoped, tag = 'output window, operand 0']
    loop: start=0, step=1, limit=8
    $region2: #{model_forward.3} parent=1 // loop_pre_header
      _
    $region3: #{model_forward.3} parent=1 // loop_header
      %s9 = sphi 0, %s13
      %p10 = scmp.ge.s32.totalorder %s9, 8
      %s16 = sphi 0, %s28
      %s17 = sphi 0, %s24
      %s18 = sphi 0, %s16
      %s19 = sphi 0, %s17
      %s20 = sphi 0, %s18
      %s21 = sphi 0, %s19
      %s33 = sphi 0, %s35
      %s36 = sphi 0, %s33
      %s37 = sphi 0, %s36
      %s53 = sphi 0, %s37
      %s57 = sphi 0, %s57
      %s59 = sphi 0, %s57
      %s60 = sphi 0, %s59
      %s74 = sphi 0, %s60
      %s80 = sphi 0, %s82
      %s83 = sphi 0, %s80
      %s84 = sphi 0, %s83
      %s100 = sphi 0, %s84
      %s108 = sphi 0, %s110
      %s111 = sphi 0, %s108
      %s112 = sphi 0, %s111
      %s128 = sphi 0, %s112
    $region4: #{model_forward.3} parent=1 // loop_header_branch
      %12 = sbr.rel (%p10) target = $region8
    $region5: #{model_forward.3} parent=1 // loop_body
      %s14 = ssub.s32 %s9, 1
      %s15 = ssub.s32 %s9, 2
      %s22 = sadd.s32 1, %s17
      %p23 = scmp.ge.s32.totalorder %s22, 3
      %s24 = scalar_select %p23, 0, %s22
      %s25 = sadd.s32 1, %s16
      %s26 = scalar_select %p23, %s25, %s16
      %p27 = scmp.ge.s32.totalorder %s26, 2
      %s28 = scalar_select %p27, 0, %s26
      %s29 = ssub.s32 %s16, %s28
      %s30 = ssub.s32 %s17, %s24
      %s31 = sor.u32 %s29, %s30
      %p32 = scmp.eq.s32.totalorder %s31, 0
      %s34 = sadd.s32 %s33, 1
      %s35 = scalar_select %p32, %s33, %s34
      %p38 = pneg %p32
      %p39 = scmp.eq.s32.totalorder %s9, 5
      %p40 = por %p38, %p39
      %p41 = scmp.ne.s32.totalorder %s33, %s36
      %p42 = scmp.eq.s32.totalorder %s9, 0
      %p43 = por %p41, %p42
      %p44 = scmp.ne.s32.totalorder %s33, %s36
      %p45 = scmp.eq.s32.totalorder %s14, 5
      %p46 = por %p44, %p45
      %p47 = scmp.ne.s32.totalorder %s36, %s37
      %p48 = scmp.eq.s32.totalorder %s14, 0
      %p49 = por %p47, %p48
      %p50 = scmp.ne.s32.totalorder %s36, %s37
      %p51 = scmp.eq.s32.totalorder %s15, 5
      %p52 = por %p50, %p51
      %p54 = scmp.ne.s32.totalorder %s37, %s53
      %p55 = scmp.eq.s32.totalorder %s15, 0
      %p56 = por %p54, %p55
      %s58 = sadd.s32 %s57, 1
      %p61 = scmp.eq.s32.totalorder %s9, 5
      %p62 = scmp.ne.s32.totalorder %s57, %s59
      %p63 = scmp.eq.s32.totalorder %s9, 0
      %p64 = por %p62, %p63
      %p65 = scmp.ne.s32.totalorder %s57, %s59
      %p66 = scmp.eq.s32.totalorder %s14, 5
      %p67 = por %p65, %p66
      %p68 = scmp.ne.s32.totalorder %s59, %s60
      %p69 = scmp.eq.s32.totalorder %s14, 0
      %p70 = por %p68, %p69
      %p71 = scmp.ne.s32.totalorder %s59, %s60
      %p72 = scmp.eq.s32.totalorder %s15, 5
      %p73 = por %p71, %p72
      %p75 = scmp.ne.s32.totalorder %s60, %s74
      %p76 = scmp.eq.s32.totalorder %s15, 0
      %p77 = por %p75, %p76
      %s78 = ssub.s32 %s16, %s28
      %p79 = scmp.eq.s32.totalorder %s78, 0
      %s81 = sadd.s32 %s80, 1
      %s82 = scalar_select %p79, %s80, %s81
      %p85 = pneg %p79
      %p86 = scmp.eq.s32.totalorder %s9, 5
      %p87 = por %p85, %p86
      %p88 = scmp.ne.s32.totalorder %s80, %s83
      %p89 = scmp.eq.s32.totalorder %s9, 0
      %p90 = por %p88, %p89
      %p91 = scmp.ne.s32.totalorder %s80, %s83
      %p92 = scmp.eq.s32.totalorder %s14, 5
      %p93 = por %p91, %p92
      %p94 = scmp.ne.s32.totalorder %s83, %s84
      %p95 = scmp.eq.s32.totalorder %s14, 0
      %p96 = por %p94, %p95
      %p97 = scmp.ne.s32.totalorder %s83, %s84
      %p98 = scmp.eq.s32.totalorder %s15, 5
      %p99 = por %p97, %p98
      %p101 = scmp.ne.s32.totalorder %s84, %s100
      %p102 = scmp.eq.s32.totalorder %s15, 0
      %p103 = por %p101, %p102
      %s104 = ssub.s32 %s16, %s28
      %s105 = ssub.s32 %s17, %s24
      %s106 = sor.u32 %s104, %s105
      %p107 = scmp.eq.s32.totalorder %s106, 0
      %s109 = sadd.s32 %s108, 1
      %s110 = scalar_select %p107, %s108, %s109
      %p113 = pneg %p107
      %p114 = scmp.eq.s32.totalorder %s9, 5
      %p115 = por %p113, %p114
      %p116 = scmp.ne.s32.totalorder %s108, %s111
      %p117 = scmp.eq.s32.totalorder %s9, 0
      %p118 = por %p116, %p117
      %p119 = scmp.ne.s32.totalorder %s108, %s111
      %p120 = scmp.eq.s32.totalorder %s14, 5
      %p121 = por %p119, %p120
      %p122 = scmp.ne.s32.totalorder %s111, %s112
      %p123 = scmp.eq.s32.totalorder %s14, 0
      %p124 = por %p122, %p123
      %p125 = scmp.ne.s32.totalorder %s111, %s112
      %p126 = scmp.eq.s32.totalorder %s15, 5
      %p127 = por %p125, %p126
      %p129 = scmp.ne.s32.totalorder %s112, %s128
      %p130 = scmp.eq.s32.totalorder %s15, 0
      %p131 = por %p129, %p130
      %p132 = scmp.le.s32.totalorder 1, %s9
      %p133 = scmp.lt.s32.totalorder %s9, 7
      %p134 = pnand %p132, %p133
      %p135 = pneg %p134
      // Predicated region
      $region9: #{model_forward.3} parent=5 // pred_check
        _
      $region10: #{model_forward.3} parent=5 // pred_check_branch
        %137 = sbr.rel (%p134) target = $region12
      $region11: #{model_forward.3} parent=5 // pred_region
        %s138 = ssub.s32 %s9, 1
        // Predicated region
        $region13: #{model_forward.3} parent=11 // pred_check
          %p139 = pneg %p70
        $region14: #{model_forward.3} parent=11 // pred_check_branch
          %141 = sbr.rel (%p139) target = $region16
        $region15: #{model_forward.3} parent=11 // pred_region
          _
        $region16: #{model_forward.3} parent=11 // pred_fallthru
          _
      $region12: #{model_forward.3} parent=5 // pred_fallthru
        _
      %p142 = scmp.lt.s32.totalorder %s9, 6
      // Predicated region
      $region17: #{model_forward.3} parent=5 // pred_check
        %p143 = pneg %p142
      $region18: #{model_forward.3} parent=5 // pred_check_branch
        %145 = sbr.rel (%p143) target = $region20
      $region19: #{model_forward.3} parent=5 // pred_region
        // Predicated region
        $region21: #{model_forward.3} parent=19 // pred_check
          %p146 = pneg %p43
        $region22: #{model_forward.3} parent=19 // pred_check_branch
          %148 = sbr.rel (%p146) target = $region24
        $region23: #{model_forward.3} parent=19 // pred_region
          %s149 = sand.u32 %s33, 1
          %s150 = sand.u32 %s33, 1
          %s151 = smul.addr %s150, 288
          %s152 = scalar_lea.vmem [#allocation2], %s151
          %s153 = smul.u32 9, %s17
          %s154 = smul.addr %s16, 108
          %s155 = sadd.s32 %s153, %s154
          %s156 = smul.addr %s155, 8
          %s157 = scalar_lea.vmem %s0, %s156
          // Predicated region
          $region25: #{model_forward.3} parent=23 // pred_check
            _
          $region26: #{model_forward.3} parent=23 // pred_check_branch
            %159 = sbr.rel (0) target = $region28
          $region27: #{model_forward.3} parent=23 // pred_region
            // Predicated region
            $region29: #{model_forward.3} parent=27 // pred_check
              _
            $region30: #{model_forward.3} parent=27 // pred_check_branch
              %161 = sbr.rel (0) target = $region32
            $region31: #{model_forward.3} parent=27 // pred_region
              loop: start=0, step=1, limit=1
              $region33: #{model_forward.3} parent=31 // loop_pre_header
                _
              $region34: #{model_forward.3} parent=31 // loop_header
                %s163 = sphi 0, %s167
                %p164 = scmp.ge.s32.totalorder %s163, 1
                %s168 = sphi %s157, %s157
                %s169 = sphi %s152, %s152
              $region35: #{model_forward.3} parent=31 // loop_header_branch
                %166 = sbr.rel (%p164) target = $region39
              $region36: #{model_forward.3} parent=31 // loop_body
                %v170 = vld [vmem:[%s168] sm:$0xff]
                %171 = vst [vmem:[%s169] sm:$0xff] %v170
                %v172 = vld [vmem:[%s168 + $0x8] sm:$0xff]
                %173 = vst [vmem:[%s169 + $0x8] sm:$0xff] %v172
                %v174 = vld [vmem:[%s168 + $0x10] sm:$0xff]
                %175 = vst [vmem:[%s169 + $0x10] sm:$0xff] %v174
                %v176 = vld [vmem:[%s168 + $0x18] sm:$0xff]
                %177 = vst [vmem:[%s169 + $0x18] sm:$0xff] %v176
                %v178 = vld [vmem:[%s168 + $0x20] sm:$0xff]
                %179 = vst [vmem:[%s169 + $0x20] sm:$0xff] %v178
                %v180 = vld [vmem:[%s168 + $0x28] sm:$0xff]
                %181 = vst [vmem:[%s169 + $0x28] sm:$0xff] %v180
                %v182 = vld [vmem:[%s168 + $0x30] sm:$0xff]
                %183 = vst [vmem:[%s169 + $0x30] sm:$0xff] %v182
                %v184 = vld [vmem:[%s168 + $0x38] sm:$0xff]
                %185 = vst [vmem:[%s169 + $0x38] sm:$0xff] %v184
                %v186 = vld [vmem:[%s168 + $0x40] sm:$0xff]
                %187 = vst [vmem:[%s169 + $0x40] sm:$0xff] %v186
                %v188 = vld [vmem:[%s168 + $0xd8] sm:$0xff]
                %189 = vst [vmem:[%s169 + $0x48] sm:$0xff] %v188
                %v190 = vld [vmem:[%s168 + $0xe0] sm:$0xff]
                %191 = vst [vmem:[%s169 + $0x50] sm:$0xff] %v190
                %v192 = vld [vmem:[%s168 + $0xe8] sm:$0xff]
                %193 = vst [vmem:[%s169 + $0x58] sm:$0xff] %v192
                %v194 = vld [vmem:[%s168 + $0xf0] sm:$0xff]
                %195 = vst [vmem:[%s169 + $0x60] sm:$0xff] %v194
                %v196 = vld [vmem:[%s168 + $0xf8] sm:$0xff]
                %197 = vst [vmem:[%s169 + $0x68] sm:$0xff] %v196
                %v198 = vld [vmem:[%s168 + $0x100] sm:$0xff]
                %199 = vst [vmem:[%s169 + $0x70] sm:$0xff] %v198
                %v200 = vld [vmem:[%s168 + $0x108] sm:$0xff]
                %201 = vst [vmem:[%s169 + $0x78] sm:$0xff] %v200
                %v202 = vld [vmem:[%s168 + $0x110] sm:$0xff]
                %203 = vst [vmem:[%s169 + $0x80] sm:$0xff] %v202
                %v204 = vld [vmem:[%s168 + $0x118] sm:$0xff]
                %205 = vst [vmem:[%s169 + $0x88] sm:$0xff] %v204
                %v206 = vld [vmem:[%s168 + $0x1b0] sm:$0xff]
                %207 = vst [vmem:[%s169 + $0x90] sm:$0xff] %v206
                %v208 = vld [vmem:[%s168 + $0x1b8] sm:$0xff]
                %209 = vst [vmem:[%s169 + $0x98] sm:$0xff] %v208
                %v210 = vld [vmem:[%s168 + $0x1c0] sm:$0xff]
                %211 = vst [vmem:[%s169 + $0xa0] sm:$0xff] %v210
                %v212 = vld [vmem:[%s168 + $0x1c8] sm:$0xff]
                %213 = vst [vmem:[%s169 + $0xa8] sm:$0xff] %v212
                %v214 = vld [vmem:[%s168 + $0x1d0] sm:$0xff]
                %215 = vst [vmem:[%s169 + $0xb0] sm:$0xff] %v214
                %v216 = vld [vmem:[%s168 + $0x1d8] sm:$0xff]
                %217 = vst [vmem:[%s169 + $0xb8] sm:$0xff] %v216
                %v218 = vld [vmem:[%s168 + $0x1e0] sm:$0xff]
                %219 = vst [vmem:[%s169 + $0xc0] sm:$0xff] %v218
                %v220 = vld [vmem:[%s168 + $0x1e8] sm:$0xff]
                %221 = vst [vmem:[%s169 + $0xc8] sm:$0xff] %v220
                %v222 = vld [vmem:[%s168 + $0x1f0] sm:$0xff]
                %223 = vst [vmem:[%s169 + $0xd0] sm:$0xff] %v222
                %v224 = vld [vmem:[%s168 + $0x288] sm:$0xff]
                %225 = vst [vmem:[%s169 + $0xd8] sm:$0xff] %v224
                %v226 = vld [vmem:[%s168 + $0x290] sm:$0xff]
                %227 = vst [vmem:[%s169 + $0xe0] sm:$0xff] %v226
                %v228 = vld [vmem:[%s168 + $0x298] sm:$0xff]
                %229 = vst [vmem:[%s169 + $0xe8] sm:$0xff] %v228
                %v230 = vld [vmem:[%s168 + $0x2a0] sm:$0xff]
                %231 = vst [vmem:[%s169 + $0xf0] sm:$0xff] %v230
                %v232 = vld [vmem:[%s168 + $0x2a8] sm:$0xff]
                %233 = vst [vmem:[%s169 + $0xf8] sm:$0xff] %v232
                %v234 = vld [vmem:[%s168 + $0x2b0] sm:$0xff]
                %235 = vst [vmem:[%s169 + $0x100] sm:$0xff] %v234
                %v236 = vld [vmem:[%s168 + $0x2b8] sm:$0xff]
                %237 = vst [vmem:[%s169 + $0x108] sm:$0xff] %v236
                %v238 = vld [vmem:[%s168 + $0x2c0] sm:$0xff]
                %239 = vst [vmem:[%s169 + $0x110] sm:$0xff] %v238
                %v240 = vld [vmem:[%s168 + $0x2c8] sm:$0xff]
                %241 = vst [vmem:[%s169 + $0x118] sm:$0xff] %v240
              $region37: #{model_forward.3} parent=31 // loop_footer
                %s167 = sadd.s32 1, %s163
              $region38: #{model_forward.3} parent=31 // loop_footer_branch
                %162 = sbr.rel target = $region34
              $region39: #{model_forward.3} parent=31 // loop_exit
                _
            $region32: #{model_forward.3} parent=27 // pred_fallthru
              _
            // Predicated region
            $region40: #{model_forward.3} parent=27 // pred_check
              _
            $region41: #{model_forward.3} parent=27 // pred_check_branch
              %243 = sbr.rel target = $region43
            $region42: #{model_forward.3} parent=27 // pred_region
              _
            $region43: #{model_forward.3} parent=27 // pred_fallthru
              _
          $region28: #{model_forward.3} parent=23 // pred_fallthru
            _
          %244 = vnop
        $region24: #{model_forward.3} parent=19 // pred_fallthru
          _
        // Predicated region
        $region44: #{model_forward.3} parent=19 // pred_check
          %p245 = pneg %p90
        $region45: #{model_forward.3} parent=19 // pred_check_branch
          %247 = sbr.rel (%p245) target = $region47
        $region46: #{model_forward.3} parent=19 // pred_region
          %p248 = scmp.lt.s32.totalorder %s16, 1
          %s249 = scalar_select %p248, %s16, 1
          %s250 = smul.addr %s249, 4
          %s251 = smul.addr %s250, 8
          %s252 = scalar_lea.vmem %s2, %s251
        $region47: #{model_forward.3} parent=19 // pred_fallthru
          _
      $region20: #{model_forward.3} parent=5 // pred_fallthru
        _
      %p253 = scmp.le.s32.totalorder 1, %s9
      %p254 = scmp.lt.s32.totalorder %s9, 7
      %p255 = pnand %p253, %p254
      %p256 = pneg %p255
      // Predicated region
      $region48: #{model_forward.3} parent=5 // pred_check
        _
      $region49: #{model_forward.3} parent=5 // pred_check_branch
        %258 = sbr.rel (%p255) target = $region51
      $region50: #{model_forward.3} parent=5 // pred_region
        %s259 = ssub.s32 %s9, 1
        %s260 = sand.u32 %s36, 1
        %s261 = sand.u32 %s36, 1
        %s262 = smul.addr %s261, 288
        %s263 = scalar_lea.vmem [#allocation2], %s262
        // Predicated region
        $region52: #{model_forward.3} parent=50 // pred_check
          %p264 = pneg %p49
        $region53: #{model_forward.3} parent=50 // pred_check_branch
          %266 = sbr.rel (%p264) target = $region55
        $region54: #{model_forward.3} parent=50 // pred_region
          _
        $region55: #{model_forward.3} parent=50 // pred_fallthru
          _
        %s267 = sand.u32 %s36, 1
        %s268 = sand.u32 %s36, 1
        %s269 = smul.addr %s268, 288
        %s270 = scalar_lea.vmem [#allocation2], %s269
        %p271 = pneg %p49
        %p272 = pneg %p46
        %p273 = pneg %p70
        %p274 = pneg %p67
        %p275 = scmp.lt.s32.totalorder %s18, 1
        %s276 = scalar_select %p275, %s18, 1
        %s277 = smul.addr %s276, 4
        %s278 = smul.addr %s277, 8
        %s279 = scalar_lea.vmem %s2, %s278
        %p280 = pneg %p96
        %p281 = pneg %p93
        %p282 = pneg %p124
        %p283 = pneg %p121
        %s284 = sand.u32 %s111, 1
        %s285 = sand.u32 %s111, 1
        %s286 = smul.addr %s285, 288
        %s287 = scalar_lea.vmem [#allocation3], %s286
        %s288 = smul.u32 9, %s19
        %p289 = scmp.lt.s32.totalorder %s18, 1
        %s290 = scalar_select %p289, %s18, 1
        %s291 = smul.addr %s290, 4
        %s292 = smul.addr %s291, 8
        %s293 = scalar_lea.vmem %s2, %s292
        %s294 = smul.u32 9, %s19
        %v295 = vld [vmem:[%s263] sm:$0xff]
        %v296 = vld [vmem:[%s263 + $0x8] sm:$0xff]
        %v297 = vld [vmem:[%s263 + $0x10] sm:$0xff]
        %v298 = vld [vmem:[%s263 + $0x18] sm:$0xff]
        %v299 = vld [vmem:[%s263 + $0x20] sm:$0xff]
        %v300 = vld [vmem:[%s263 + $0x28] sm:$0xff]
        %v301 = vld [vmem:[%s263 + $0x30] sm:$0xff]
        %v302 = vld [vmem:[%s263 + $0x38] sm:$0xff]
        %v303 = vld [vmem:[%s263 + $0x40] sm:$0xff]
        %v304 = vld [vmem:[%s263 + $0x48] sm:$0xff]
        %v305 = vld [vmem:[%s263 + $0x50] sm:$0xff]
        %v306 = vld [vmem:[%s263 + $0x58] sm:$0xff]
        %v307 = vld [vmem:[%s263 + $0x60] sm:$0xff]
        %v308 = vld [vmem:[%s263 + $0x68] sm:$0xff]
        %v309 = vld [vmem:[%s263 + $0x70] sm:$0xff]
        %v310 = vld [vmem:[%s263 + $0x78] sm:$0xff]
        %v311 = vld [vmem:[%s263 + $0x80] sm:$0xff]
        %v312 = vld [vmem:[%s263 + $0x88] sm:$0xff]
        %v313 = vld [vmem:[%s263 + $0x90] sm:$0xff]
        %v314 = vld [vmem:[%s263 + $0x98] sm:$0xff]
        %v315 = vld [vmem:[%s263 + $0xa0] sm:$0xff]
        %v316 = vld [vmem:[%s263 + $0xa8] sm:$0xff]
        %v317 = vld [vmem:[%s263 + $0xb0] sm:$0xff]
        %v318 = vld [vmem:[%s263 + $0xb8] sm:$0xff]
        %v319 = vld [vmem:[%s263 + $0xc0] sm:$0xff]
        %v320 = vld [vmem:[%s263 + $0xc8] sm:$0xff]
        %v321 = vld [vmem:[%s263 + $0xd0] sm:$0xff]
        %v322 = vld [vmem:[%s263 + $0xd8] sm:$0xff]
        %v323 = vld [vmem:[%s263 + $0xe0] sm:$0xff]
        %v324 = vld [vmem:[%s263 + $0xe8] sm:$0xff]
        %v325 = vld [vmem:[%s263 + $0xf0] sm:$0xff]
        %v326 = vld [vmem:[%s263 + $0xf8] sm:$0xff]
        %v327 = vld [vmem:[%s263 + $0x100] sm:$0xff]
        %v328 = vld [vmem:[%s263 + $0x108] sm:$0xff]
        %v329 = vld [vmem:[%s263 + $0x110] sm:$0xff]
        %v330 = vld [vmem:[%s263 + $0x118] sm:$0xff]
        %v331 = vld [vmem:[%s1] sm:$0xff]
        %v332 = vld [vmem:[%s1 + $0x8] sm:$0xff]
        %v333 = vld [vmem:[%s1 + $0x10] sm:$0xff]
        %v334 = vld [vmem:[%s1 + $0x18] sm:$0xff]
        %336 = vset.pattern.permute.xlu0 0
        %337 = vperm.xlu0 %336, %v331
        %v338 = vpop.permute.xlu0 %337
        %341 = vset.pattern.permute.xlu0 0
        %342 = vperm.xlu0 %341, %v332
        %v343 = vpop.permute.xlu0 %342
        %346 = vset.pattern.permute.xlu0 0
        %347 = vperm.xlu0 %346, %v333
        %v348 = vpop.permute.xlu0 %347
        %351 = vset.pattern.permute.xlu0 0
        %352 = vperm.xlu0 %351, %v334
        %v353 = vpop.permute.xlu0 %352
        %v355 = vmul.f32 %v295, %v338
        %v356 = vmul.f32 %v296, %v338
        %v357 = vmul.f32 %v297, %v338
        %v358 = vmul.f32 %v298, %v338
        %v359 = vmul.f32 %v299, %v338
        %v360 = vmul.f32 %v300, %v338
        %v361 = vmul.f32 %v301, %v338
        %v362 = vmul.f32 %v302, %v338
        %v363 = vmul.f32 %v303, %v338
        %v364 = vmul.f32 %v304, %v343
        %v365 = vmul.f32 %v305, %v343
        %v366 = vmul.f32 %v306, %v343
        %v367 = vmul.f32 %v307, %v343
        %v368 = vmul.f32 %v308, %v343
        %v369 = vmul.f32 %v309, %v343
        %v370 = vmul.f32 %v310, %v343
        %v371 = vmul.f32 %v311, %v343
        %v372 = vmul.f32 %v312, %v343
        %v373 = vmul.f32 %v313, %v348
        %v374 = vmul.f32 %v314, %v348
        %v375 = vmul.f32 %v315, %v348
        %v376 = vmul.f32 %v316, %v348
        %v377 = vmul.f32 %v317, %v348
        %v378 = vmul.f32 %v318, %v348
        %v379 = vmul.f32 %v319, %v348
        %v380 = vmul.f32 %v320, %v348
        %v381 = vmul.f32 %v321, %v348
        %v382 = vmul.f32 %v322, %v353
        %v383 = vmul.f32 %v323, %v353
        %v384 = vmul.f32 %v324, %v353
        %v385 = vmul.f32 %v325, %v353
        %v386 = vmul.f32 %v326, %v353
        %v387 = vmul.f32 %v327, %v353
        %v388 = vmul.f32 %v328, %v353
        %v389 = vmul.f32 %v329, %v353
        %v390 = vmul.f32 %v330, %v353
        %v391 = vld [vmem:[%s293] sm:$0xff]
        %v392 = vld [vmem:[%s293 + $0x8] sm:$0xff]
        %v393 = vld [vmem:[%s293 + $0x10] sm:$0xff]
        %v394 = vld [vmem:[%s293 + $0x18] sm:$0xff]
        %396 = vset.pattern.permute.xlu0 0
        %397 = vperm.xlu0 %396, %v391
        %v398 = vpop.permute.xlu0 %397
        %401 = vset.pattern.permute.xlu0 0
        %402 = vperm.xlu0 %401, %v392
        %v403 = vpop.permute.xlu0 %402
        %406 = vset.pattern.permute.xlu0 0
        %407 = vperm.xlu0 %406, %v393
        %v408 = vpop.permute.xlu0 %407
        %411 = vset.pattern.permute.xlu0 0
        %412 = vperm.xlu0 %411, %v394
        %v413 = vpop.permute.xlu0 %412
        %v415 = vsub.f32 %v355, %v398
        %v416 = vsub.f32 %v356, %v398
        %v417 = vsub.f32 %v357, %v398
        %v418 = vsub.f32 %v358, %v398
        %v419 = vsub.f32 %v359, %v398
        %v420 = vsub.f32 %v360, %v398
        %v421 = vsub.f32 %v361, %v398
        %v422 = vsub.f32 %v362, %v398
        %v423 = vsub.f32 %v363, %v398
        %v424 = vsub.f32 %v364, %v403
        %v425 = vsub.f32 %v365, %v403
        %v426 = vsub.f32 %v366, %v403
        %v427 = vsub.f32 %v367, %v403
        %v428 = vsub.f32 %v368, %v403
        %v429 = vsub.f32 %v369, %v403
        %v430 = vsub.f32 %v370, %v403
        %v431 = vsub.f32 %v371, %v403
        %v432 = vsub.f32 %v372, %v403
        %v433 = vsub.f32 %v373, %v408
        %v434 = vsub.f32 %v374, %v408
        %v435 = vsub.f32 %v375, %v408
        %v436 = vsub.f32 %v376, %v408
        %v437 = vsub.f32 %v377, %v408
        %v438 = vsub.f32 %v378, %v408
        %v439 = vsub.f32 %v379, %v408
        %v440 = vsub.f32 %v380, %v408
        %v441 = vsub.f32 %v381, %v408
        %v442 = vsub.f32 %v382, %v413
        %v443 = vsub.f32 %v383, %v413
        %v444 = vsub.f32 %v384, %v413
        %v445 = vsub.f32 %v385, %v413
        %v446 = vsub.f32 %v386, %v413
        %v447 = vsub.f32 %v387, %v413
        %v448 = vsub.f32 %v388, %v413
        %v449 = vsub.f32 %v389, %v413
        %v450 = vsub.f32 %v390, %v413
        %451 = vst [vmem:[%s287] sm:$0xff] %v415
        %452 = vst [vmem:[%s287 + $0x8] sm:$0xff] %v416
        %453 = vst [vmem:[%s287 + $0x10] sm:$0xff] %v417
        %454 = vst [vmem:[%s287 + $0x18] sm:$0xff] %v418
        %455 = vst [vmem:[%s287 + $0x20] sm:$0xff] %v419
        %456 = vst [vmem:[%s287 + $0x28] sm:$0xff] %v420
        %457 = vst [vmem:[%s287 + $0x30] sm:$0xff] %v421
        %458 = vst [vmem:[%s287 + $0x38] sm:$0xff] %v422
        %459 = vst [vmem:[%s287 + $0x40] sm:$0xff] %v423
        %460 = vst [vmem:[%s287 + $0x48] sm:$0xff] %v424
        %461 = vst [vmem:[%s287 + $0x50] sm:$0xff] %v425
        %462 = vst [vmem:[%s287 + $0x58] sm:$0xff] %v426
        %463 = vst [vmem:[%s287 + $0x60] sm:$0xff] %v427
        %464 = vst [vmem:[%s287 + $0x68] sm:$0xff] %v428
        %465 = vst [vmem:[%s287 + $0x70] sm:$0xff] %v429
        %466 = vst [vmem:[%s287 + $0x78] sm:$0xff] %v430
        %467 = vst [vmem:[%s287 + $0x80] sm:$0xff] %v431
        %468 = vst [vmem:[%s287 + $0x88] sm:$0xff] %v432
        %469 = vst [vmem:[%s287 + $0x90] sm:$0xff] %v433
        %470 = vst [vmem:[%s287 + $0x98] sm:$0xff] %v434
        %471 = vst [vmem:[%s287 + $0xa0] sm:$0xff] %v435
        %472 = vst [vmem:[%s287 + $0xa8] sm:$0xff] %v436
        %473 = vst [vmem:[%s287 + $0xb0] sm:$0xff] %v437
        %474 = vst [vmem:[%s287 + $0xb8] sm:$0xff] %v438
        %475 = vst [vmem:[%s287 + $0xc0] sm:$0xff] %v439
        %476 = vst [vmem:[%s287 + $0xc8] sm:$0xff] %v440
        %477 = vst [vmem:[%s287 + $0xd0] sm:$0xff] %v441
        %478 = vst [vmem:[%s287 + $0xd8] sm:$0xff] %v442
        %479 = vst [vmem:[%s287 + $0xe0] sm:$0xff] %v443
        %480 = vst [vmem:[%s287 + $0xe8] sm:$0xff] %v444
        %481 = vst [vmem:[%s287 + $0xf0] sm:$0xff] %v445
        %482 = vst [vmem:[%s287 + $0xf8] sm:$0xff] %v446
        %483 = vst [vmem:[%s287 + $0x100] sm:$0xff] %v447
        %484 = vst [vmem:[%s287 + $0x108] sm:$0xff] %v448
        %485 = vst [vmem:[%s287 + $0x110] sm:$0xff] %v449
        %486 = vst [vmem:[%s287 + $0x118] sm:$0xff] %v450
        %s487 = sand.u32 %s111, 1
        %s488 = sand.u32 %s111, 1
        %s489 = smul.addr %s488, 288
        %s490 = scalar_lea.vmem [#allocation3], %s489
        // Predicated region
        $region56: #{model_forward.3} parent=50 // pred_check
          %p491 = pneg %p121
        $region57: #{model_forward.3} parent=50 // pred_check_branch
          %493 = sbr.rel (%p491) target = $region59
        $region58: #{model_forward.3} parent=50 // pred_region
          %s494 = smul.u32 9, %s19
          %s495 = smul.addr %s18, 108
          %s496 = sadd.s32 %s494, %s495
          %s497 = smul.addr %s496, 8
          %s498 = scalar_lea.vmem %s3, %s497
          // Predicated region
          $region60: #{model_forward.3} parent=58 // pred_check
            _
          $region61: #{model_forward.3} parent=58 // pred_check_branch
            %500 = sbr.rel (0) target = $region63
          $region62: #{model_forward.3} parent=58 // pred_region
            // Predicated region
            $region64: #{model_forward.3} parent=62 // pred_check
              _
            $region65: #{model_forward.3} parent=62 // pred_check_branch
              %502 = sbr.rel (0) target = $region67
            $region66: #{model_forward.3} parent=62 // pred_region
              loop: start=0, step=1, limit=1
              $region68: #{model_forward.3} parent=66 // loop_pre_header
                _
              $region69: #{model_forward.3} parent=66 // loop_header
                %s504 = sphi 0, %s508
                %p505 = scmp.ge.s32.totalorder %s504, 1
                %s509 = sphi %s490, %s490
                %s510 = sphi %s498, %s498
              $region70: #{model_forward.3} parent=66 // loop_header_branch
                %507 = sbr.rel (%p505) target = $region74
              $region71: #{model_forward.3} parent=66 // loop_body
                %v511 = vld [vmem:[%s509] sm:$0xff]
                %512 = vst [vmem:[%s510] sm:$0xff] %v511
                %v513 = vld [vmem:[%s509 + $0x8] sm:$0xff]
                %514 = vst [vmem:[%s510 + $0x8] sm:$0xff] %v513
                %v515 = vld [vmem:[%s509 + $0x10] sm:$0xff]
                %516 = vst [vmem:[%s510 + $0x10] sm:$0xff] %v515
                %v517 = vld [vmem:[%s509 + $0x18] sm:$0xff]
                %518 = vst [vmem:[%s510 + $0x18] sm:$0xff] %v517
                %v519 = vld [vmem:[%s509 + $0x20] sm:$0xff]
                %520 = vst [vmem:[%s510 + $0x20] sm:$0xff] %v519
                %v521 = vld [vmem:[%s509 + $0x28] sm:$0xff]
                %522 = vst [vmem:[%s510 + $0x28] sm:$0xff] %v521
                %v523 = vld [vmem:[%s509 + $0x30] sm:$0xff]
                %524 = vst [vmem:[%s510 + $0x30] sm:$0xff] %v523
                %v525 = vld [vmem:[%s509 + $0x38] sm:$0xff]
                %526 = vst [vmem:[%s510 + $0x38] sm:$0xff] %v525
                %v527 = vld [vmem:[%s509 + $0x40] sm:$0xff]
                %528 = vst [vmem:[%s510 + $0x40] sm:$0xff] %v527
                %v529 = vld [vmem:[%s509 + $0x48] sm:$0xff]
                %530 = vst [vmem:[%s510 + $0xd8] sm:$0xff] %v529
                %v531 = vld [vmem:[%s509 + $0x50] sm:$0xff]
                %532 = vst [vmem:[%s510 + $0xe0] sm:$0xff] %v531
                %v533 = vld [vmem:[%s509 + $0x58] sm:$0xff]
                %534 = vst [vmem:[%s510 + $0xe8] sm:$0xff] %v533
                %v535 = vld [vmem:[%s509 + $0x60] sm:$0xff]
                %536 = vst [vmem:[%s510 + $0xf0] sm:$0xff] %v535
                %v537 = vld [vmem:[%s509 + $0x68] sm:$0xff]
                %538 = vst [vmem:[%s510 + $0xf8] sm:$0xff] %v537
                %v539 = vld [vmem:[%s509 + $0x70] sm:$0xff]
                %540 = vst [vmem:[%s510 + $0x100] sm:$0xff] %v539
                %v541 = vld [vmem:[%s509 + $0x78] sm:$0xff]
                %542 = vst [vmem:[%s510 + $0x108] sm:$0xff] %v541
                %v543 = vld [vmem:[%s509 + $0x80] sm:$0xff]
                %544 = vst [vmem:[%s510 + $0x110] sm:$0xff] %v543
                %v545 = vld [vmem:[%s509 + $0x88] sm:$0xff]
                %546 = vst [vmem:[%s510 + $0x118] sm:$0xff] %v545
                %v547 = vld [vmem:[%s509 + $0x90] sm:$0xff]
                %548 = vst [vmem:[%s510 + $0x1b0] sm:$0xff] %v547
                %v549 = vld [vmem:[%s509 + $0x98] sm:$0xff]
                %550 = vst [vmem:[%s510 + $0x1b8] sm:$0xff] %v549
                %v551 = vld [vmem:[%s509 + $0xa0] sm:$0xff]
                %552 = vst [vmem:[%s510 + $0x1c0] sm:$0xff] %v551
                %v553 = vld [vmem:[%s509 + $0xa8] sm:$0xff]
                %554 = vst [vmem:[%s510 + $0x1c8] sm:$0xff] %v553
                %v555 = vld [vmem:[%s509 + $0xb0] sm:$0xff]
                %556 = vst [vmem:[%s510 + $0x1d0] sm:$0xff] %v555
                %v557 = vld [vmem:[%s509 + $0xb8] sm:$0xff]
                %558 = vst [vmem:[%s510 + $0x1d8] sm:$0xff] %v557
                %v559 = vld [vmem:[%s509 + $0xc0] sm:$0xff]
                %560 = vst [vmem:[%s510 + $0x1e0] sm:$0xff] %v559
                %v561 = vld [vmem:[%s509 + $0xc8] sm:$0xff]
                %562 = vst [vmem:[%s510 + $0x1e8] sm:$0xff] %v561
                %v563 = vld [vmem:[%s509 + $0xd0] sm:$0xff]
                %564 = vst [vmem:[%s510 + $0x1f0] sm:$0xff] %v563
                %v565 = vld [vmem:[%s509 + $0xd8] sm:$0xff]
                %566 = vst [vmem:[%s510 + $0x288] sm:$0xff] %v565
                %v567 = vld [vmem:[%s509 + $0xe0] sm:$0xff]
                %568 = vst [vmem:[%s510 + $0x290] sm:$0xff] %v567
                %v569 = vld [vmem:[%s509 + $0xe8] sm:$0xff]
                %570 = vst [vmem:[%s510 + $0x298] sm:$0xff] %v569
                %v571 = vld [vmem:[%s509 + $0xf0] sm:$0xff]
                %572 = vst [vmem:[%s510 + $0x2a0] sm:$0xff] %v571
                %v573 = vld [vmem:[%s509 + $0xf8] sm:$0xff]
                %574 = vst [vmem:[%s510 + $0x2a8] sm:$0xff] %v573
                %v575 = vld [vmem:[%s509 + $0x100] sm:$0xff]
                %576 = vst [vmem:[%s510 + $0x2b0] sm:$0xff] %v575
                %v577 = vld [vmem:[%s509 + $0x108] sm:$0xff]
                %578 = vst [vmem:[%s510 + $0x2b8] sm:$0xff] %v577
                %v579 = vld [vmem:[%s509 + $0x110] sm:$0xff]
                %580 = vst [vmem:[%s510 + $0x2c0] sm:$0xff] %v579
                %v581 = vld [vmem:[%s509 + $0x118] sm:$0xff]
                %582 = vst [vmem:[%s510 + $0x2c8] sm:$0xff] %v581
              $region72: #{model_forward.3} parent=66 // loop_footer
                %s508 = sadd.s32 1, %s504
              $region73: #{model_forward.3} parent=66 // loop_footer_branch
                %503 = sbr.rel target = $region69
              $region74: #{model_forward.3} parent=66 // loop_exit
                _
            $region67: #{model_forward.3} parent=62 // pred_fallthru
              _
            // Predicated region
            $region75: #{model_forward.3} parent=62 // pred_check
              _
            $region76: #{model_forward.3} parent=62 // pred_check_branch
              %584 = sbr.rel target = $region78
            $region77: #{model_forward.3} parent=62 // pred_region
              _
            $region78: #{model_forward.3} parent=62 // pred_fallthru
              _
          $region63: #{model_forward.3} parent=58 // pred_fallthru
            _
          %585 = vnop
        $region59: #{model_forward.3} parent=50 // pred_fallthru
          _
      $region51: #{model_forward.3} parent=5 // pred_fallthru
        _
      %p586 = scmp.le.s32.totalorder 2, %s9
      // Predicated region
      $region79: #{model_forward.3} parent=5 // pred_check
        %p587 = pneg %p586
      $region80: #{model_forward.3} parent=5 // pred_check_branch
        %589 = sbr.rel (%p587) target = $region82
      $region81: #{model_forward.3} parent=5 // pred_region
        %s590 = ssub.s32 %s9, 2
        // Predicated region
        $region83: #{model_forward.3} parent=81 // pred_check
          %p591 = pneg %p127
        $region84: #{model_forward.3} parent=81 // pred_check_branch
          %593 = sbr.rel (%p591) target = $region86
        $region85: #{model_forward.3} parent=81 // pred_region
          %s594 = sand.u32 %s112, 1
          %s595 = sand.u32 %s112, 1
          %s596 = smul.addr %s595, 288
          %s597 = scalar_lea.vmem [#allocation3], %s596
        $region86: #{model_forward.3} parent=81 // pred_fallthru
          _
      $region82: #{model_forward.3} parent=5 // pred_fallthru
        _
    $region6: #{model_forward.3} parent=1 // loop_footer
      %s13 = sadd.s32 1, %s9
    $region7: #{model_forward.3} parent=1 // loop_footer_branch
      %8 = sbr.rel target = $region3
    $region8: #{model_forward.3} parent=1 // loop_exit
      _

// kernel: model_forward.2
$region0: #{model_forward.2}
  #allocation0 [shape = 'u32[]', space=smem, size = 0x4, offset = 0x4, fixed_abs, tag = 'smem constant byte address 0x4 - core index']
  #allocation1 [shape = 'u32[72,128]{1,0:T(1,128)}', space=vmem, size = 0x9000, scoped, tag = 'internal scratch']
  #allocation2 [shape = 'f32[32,2]{1,0:T(8,128)}', space=vmem, size = 0x4000, scoped, tag = 'scratch operand']
  %s0 = inlined_call_operand.vmem [shape: f32[32,432], index: 0, kind: input, shape index: {}]
  %s1 = inlined_call_operand.vmem [shape: f32[2,432,3456], index: 1, kind: input, shape index: {}]
  %s2 = inlined_call_operand.vmem [shape: f32[2,32,3456], index: 2, kind: output, shape index: {0}]
  %s3 = inlined_call_operand.vmem [shape: f32[2,32,2], index: 3, kind: output, shape index: {1}]
  %4 = xla_tuple %s2, %s3
  %s5 = sld [smem:[#allocation0]]
  $region99: #{model_forward.2} parent=0
    _
  %s7 = ssub.s32 1, %s5
  %s8 = scalar_select 0, %s7, %s5
  $region1: #{model_forward.2} parent=0
    #allocation3 [shape = 'u8[3981312]{0}', space=vmem, size = 0x3cc000, scoped, tag = 'input window, operand 1']
    #allocation4 [shape = 'u8[294912]{0}', space=vmem, size = 0x48000, scoped, tag = 'output window, operand 0']
    loop: start=0, step=1, limit=8
    $region2: #{model_forward.2} parent=1 // loop_pre_header
      _
    $region3: #{model_forward.2} parent=1 // loop_header
      %s10 = sphi 0, %s14
      %p11 = scmp.ge.s32.totalorder %s10, 8
      %s17 = sphi 0, %s29
      %s18 = sphi 0, %s25
      %s19 = sphi 0, %s17
      %s20 = sphi 0, %s18
      %s21 = sphi 0, %s19
      %s22 = sphi 0, %s20
      %s30 = sphi 0, %s30
      %s32 = sphi 0, %s30
      %s33 = sphi 0, %s32
      %s47 = sphi 0, %s33
      %s55 = sphi 0, %s57
      %s58 = sphi 0, %s55
      %s59 = sphi 0, %s58
      %s75 = sphi 0, %s59
      %s83 = sphi 0, %s85
      %s86 = sphi 0, %s83
      %s87 = sphi 0, %s86
      %s103 = sphi 0, %s87
      %s109 = sphi 0, %s111
      %s112 = sphi 0, %s109
      %s113 = sphi 0, %s112
      %s129 = sphi 0, %s113
    $region4: #{model_forward.2} parent=1 // loop_header_branch
      %13 = sbr.rel (%p11) target = $region8
    $region5: #{model_forward.2} parent=1 // loop_body
      %s15 = ssub.s32 %s10, 1
      %s16 = ssub.s32 %s10, 2
      %s23 = sadd.s32 1, %s18
      %p24 = scmp.ge.s32.totalorder %s23, 3
      %s25 = scalar_select %p24, 0, %s23
      %s26 = sadd.s32 1, %s17
      %s27 = scalar_select %p24, %s26, %s17
      %p28 = scmp.ge.s32.totalorder %s27, 2
      %s29 = scalar_select %p28, 0, %s27
      %s31 = sadd.s32 %s30, 1
      %p34 = scmp.eq.s32.totalorder %s10, 5
      %p35 = scmp.ne.s32.totalorder %s30, %s32
      %p36 = scmp.eq.s32.totalorder %s10, 0
      %p37 = por %p35, %p36
      %p38 = scmp.ne.s32.totalorder %s30, %s32
      %p39 = scmp.eq.s32.totalorder %s15, 5
      %p40 = por %p38, %p39
      %p41 = scmp.ne.s32.totalorder %s32, %s33
      %p42 = scmp.eq.s32.totalorder %s15, 0
      %p43 = por %p41, %p42
      %p44 = scmp.ne.s32.totalorder %s32, %s33
      %p45 = scmp.eq.s32.totalorder %s16, 5
      %p46 = por %p44, %p45
      %p48 = scmp.ne.s32.totalorder %s33, %s47
      %p49 = scmp.eq.s32.totalorder %s16, 0
      %p50 = por %p48, %p49
      %s51 = ssub.s32 %s17, %s29
      %s52 = ssub.s32 %s18, %s25
      %s53 = sor.u32 %s51, %s52
      %p54 = scmp.eq.s32.totalorder %s53, 0
      %s56 = sadd.s32 %s55, 1
      %s57 = scalar_select %p54, %s55, %s56
      %p60 = pneg %p54
      %p61 = scmp.eq.s32.totalorder %s10, 5
      %p62 = por %p60, %p61
      %p63 = scmp.ne.s32.totalorder %s55, %s58
      %p64 = scmp.eq.s32.totalorder %s10, 0
      %p65 = por %p63, %p64
      %p66 = scmp.ne.s32.totalorder %s55, %s58
      %p67 = scmp.eq.s32.totalorder %s15, 5
      %p68 = por %p66, %p67
      %p69 = scmp.ne.s32.totalorder %s58, %s59
      %p70 = scmp.eq.s32.totalorder %s15, 0
      %p71 = por %p69, %p70
      %p72 = scmp.ne.s32.totalorder %s58, %s59
      %p73 = scmp.eq.s32.totalorder %s16, 5
      %p74 = por %p72, %p73
      %p76 = scmp.ne.s32.totalorder %s59, %s75
      %p77 = scmp.eq.s32.totalorder %s16, 0
      %p78 = por %p76, %p77
      %s79 = ssub.s32 %s17, %s29
      %s80 = ssub.s32 %s18, %s25
      %s81 = sor.u32 %s79, %s80
      %p82 = scmp.eq.s32.totalorder %s81, 0
      %s84 = sadd.s32 %s83, 1
      %s85 = scalar_select %p82, %s83, %s84
      %p88 = pneg %p82
      %p89 = scmp.eq.s32.totalorder %s10, 5
      %p90 = por %p88, %p89
      %p91 = scmp.ne.s32.totalorder %s83, %s86
      %p92 = scmp.eq.s32.totalorder %s10, 0
      %p93 = por %p91, %p92
      %p94 = scmp.ne.s32.totalorder %s83, %s86
      %p95 = scmp.eq.s32.totalorder %s15, 5
      %p96 = por %p94, %p95
      %p97 = scmp.ne.s32.totalorder %s86, %s87
      %p98 = scmp.eq.s32.totalorder %s15, 0
      %p99 = por %p97, %p98
      %p100 = scmp.ne.s32.totalorder %s86, %s87
      %p101 = scmp.eq.s32.totalorder %s16, 5
      %p102 = por %p100, %p101
      %p104 = scmp.ne.s32.totalorder %s87, %s103
      %p105 = scmp.eq.s32.totalorder %s16, 0
      %p106 = por %p104, %p105
      %s107 = ssub.s32 %s17, %s29
      %p108 = scmp.eq.s32.totalorder %s107, 0
      %s110 = sadd.s32 %s109, 1
      %s111 = scalar_select %p108, %s109, %s110
      %p114 = pneg %p108
      %p115 = scmp.eq.s32.totalorder %s10, 5
      %p116 = por %p114, %p115
      %p117 = scmp.ne.s32.totalorder %s109, %s112
      %p118 = scmp.eq.s32.totalorder %s10, 0
      %p119 = por %p117, %p118
      %p120 = scmp.ne.s32.totalorder %s109, %s112
      %p121 = scmp.eq.s32.totalorder %s15, 5
      %p122 = por %p120, %p121
      %p123 = scmp.ne.s32.totalorder %s112, %s113
      %p124 = scmp.eq.s32.totalorder %s15, 0
      %p125 = por %p123, %p124
      %p126 = scmp.ne.s32.totalorder %s112, %s113
      %p127 = scmp.eq.s32.totalorder %s16, 5
      %p128 = por %p126, %p127
      %p130 = scmp.ne.s32.totalorder %s113, %s129
      %p131 = scmp.eq.s32.totalorder %s16, 0
      %p132 = por %p130, %p131
      %p133 = scmp.le.s32.totalorder 1, %s10
      %p134 = scmp.lt.s32.totalorder %s10, 7
      %p135 = pnand %p133, %p134
      %p136 = pneg %p135
      // Predicated region
      $region9: #{model_forward.2} parent=5 // pred_check
        _
      $region10: #{model_forward.2} parent=5 // pred_check_branch
        %138 = sbr.rel (%p135) target = $region12
      $region11: #{model_forward.2} parent=5 // pred_region
        %s139 = ssub.s32 %s10, 1
        // Predicated region
        $region13: #{model_forward.2} parent=11 // pred_check
          %p140 = pneg %p43
        $region14: #{model_forward.2} parent=11 // pred_check_branch
          %142 = sbr.rel (%p140) target = $region16
        $region15: #{model_forward.2} parent=11 // pred_region
          _
        $region16: #{model_forward.2} parent=11 // pred_fallthru
          _
      $region12: #{model_forward.2} parent=5 // pred_fallthru
        _
      %p143 = scmp.lt.s32.totalorder %s10, 6
      // Predicated region
      $region17: #{model_forward.2} parent=5 // pred_check
        %p144 = pneg %p143
      $region18: #{model_forward.2} parent=5 // pred_check_branch
        %146 = sbr.rel (%p144) target = $region20
      $region19: #{model_forward.2} parent=5 // pred_region
        // Predicated region
        $region21: #{model_forward.2} parent=19 // pred_check
          %p147 = pneg %p65
        $region22: #{model_forward.2} parent=19 // pred_check_branch
          %149 = sbr.rel (%p147) target = $region24
        $region23: #{model_forward.2} parent=19 // pred_region
          %s150 = sand.u32 %s55, 1
          %s151 = sand.u32 %s55, 1
          %s152 = smul.addr %s151, 3888
          %s153 = scalar_lea.vmem [#allocation3], %s152
          %s154 = smul.u32 9, %s18
          %s155 = smul.addr %s17, 1458
          %s156 = sadd.s32 %s154, %s155
          %s157 = smul.addr %s156, 8
          %s158 = scalar_lea.vmem %s1, %s157
          // Predicated region
          $region25: #{model_forward.2} parent=23 // pred_check
            _
          $region26: #{model_forward.2} parent=23 // pred_check_branch
            %160 = sbr.rel (0) target = $region28
          $region27: #{model_forward.2} parent=23 // pred_region
            // Predicated region
            $region29: #{model_forward.2} parent=27 // pred_check
              _
            $region30: #{model_forward.2} parent=27 // pred_check_branch
              %162 = sbr.rel (0) target = $region32
            $region31: #{model_forward.2} parent=27 // pred_region
              loop: start=0, step=1, limit=1
              $region33: #{model_forward.2} parent=31 // loop_pre_header
                _
              $region34: #{model_forward.2} parent=31 // loop_header
                %s164 = sphi 0, %s168
                %p165 = scmp.ge.s32.totalorder %s164, 1
                %s169 = sphi %s158, %s158
                %s170 = sphi %s153, %s153
              $region35: #{model_forward.2} parent=31 // loop_header_branch
                %167 = sbr.rel (%p165) target = $region39
              $region36: #{model_forward.2} parent=31 // loop_body
                %v171 = vld [vmem:[%s169] sm:$0xff]
                %172 = vst [vmem:[%s170] sm:$0xff] %v171
                %v173 = vld [vmem:[%s169 + $0x8] sm:$0xff]
                %174 = vst [vmem:[%s170 + $0x8] sm:$0xff] %v173
                %v175 = vld [vmem:[%s169 + $0x10] sm:$0xff]
                %176 = vst [vmem:[%s170 + $0x10] sm:$0xff] %v175
                %v177 = vld [vmem:[%s169 + $0x18] sm:$0xff]
                %178 = vst [vmem:[%s170 + $0x18] sm:$0xff] %v177
                %v179 = vld [vmem:[%s169 + $0x20] sm:$0xff]
                %180 = vst [vmem:[%s170 + $0x20] sm:$0xff] %v179
                %v181 = vld [vmem:[%s169 + $0x28] sm:$0xff]
                %182 = vst [vmem:[%s170 + $0x28] sm:$0xff] %v181
                %v183 = vld [vmem:[%s169 + $0x30] sm:$0xff]
                %184 = vst [vmem:[%s170 + $0x30] sm:$0xff] %v183
                %v185 = vld [vmem:[%s169 + $0x38] sm:$0xff]
                %186 = vst [vmem:[%s170 + $0x38] sm:$0xff] %v185
                %v187 = vld [vmem:[%s169 + $0x40] sm:$0xff]
                %188 = vst [vmem:[%s170 + $0x40] sm:$0xff] %v187
                %v189 = vld [vmem:[%s169 + $0xd8] sm:$0xff]
                %190 = vst [vmem:[%s170 + $0x48] sm:$0xff] %v189
                %v191 = vld [vmem:[%s169 + $0xe0] sm:$0xff]
                %192 = vst [vmem:[%s170 + $0x50] sm:$0xff] %v191
                %v193 = vld [vmem:[%s169 + $0xe8] sm:$0xff]
                %194 = vst [vmem:[%s170 + $0x58] sm:$0xff] %v193
                %v195 = vld [vmem:[%s169 + $0xf0] sm:$0xff]
                %196 = vst [vmem:[%s170 + $0x60] sm:$0xff] %v195
                %v197 = vld [vmem:[%s169 + $0xf8] sm:$0xff]
                %198 = vst [vmem:[%s170 + $0x68] sm:$0xff] %v197
                %v199 = vld [vmem:[%s169 + $0x100] sm:$0xff]
                %200 = vst [vmem:[%s170 + $0x70] sm:$0xff] %v199
                %v201 = vld [vmem:[%s169 + $0x108] sm:$0xff]
                %202 = vst [vmem:[%s170 + $0x78] sm:$0xff] %v201
                %v203 = vld [vmem:[%s169 + $0x110] sm:$0xff]
                %204 = vst [vmem:[%s170 + $0x80] sm:$0xff] %v203
                %v205 = vld [vmem:[%s169 + $0x118] sm:$0xff]
                %206 = vst [vmem:[%s170 + $0x88] sm:$0xff] %v205
                %v207 = vld [vmem:[%s169 + $0x1b0] sm:$0xff]
                %208 = vst [vmem:[%s170 + $0x90] sm:$0xff] %v207
                %v209 = vld [vmem:[%s169 + $0x1b8] sm:$0xff]
                %210 = vst [vmem:[%s170 + $0x98] sm:$0xff] %v209
                %v211 = vld [vmem:[%s169 + $0x1c0] sm:$0xff]
                %212 = vst [vmem:[%s170 + $0xa0] sm:$0xff] %v211
                %v213 = vld [vmem:[%s169 + $0x1c8] sm:$0xff]
                %214 = vst [vmem:[%s170 + $0xa8] sm:$0xff] %v213
                %v215 = vld [vmem:[%s169 + $0x1d0] sm:$0xff]
                %216 = vst [vmem:[%s170 + $0xb0] sm:$0xff] %v215
                %v217 = vld [vmem:[%s169 + $0x1d8] sm:$0xff]
                %218 = vst [vmem:[%s170 + $0xb8] sm:$0xff] %v217
                %v219 = vld [vmem:[%s169 + $0x1e0] sm:$0xff]
                %220 = vst [vmem:[%s170 + $0xc0] sm:$0xff] %v219
                %v221 = vld [vmem:[%s169 + $0x1e8] sm:$0xff]
                %222 = vst [vmem:[%s170 + $0xc8] sm:$0xff] %v221
                %v223 = vld [vmem:[%s169 + $0x1f0] sm:$0xff]
                %224 = vst [vmem:[%s170 + $0xd0] sm:$0xff] %v223
                %v225 = vld [vmem:[%s169 + $0x288] sm:$0xff]
                %226 = vst [vmem:[%s170 + $0xd8] sm:$0xff] %v225
                %v227 = vld [vmem:[%s169 + $0x290] sm:$0xff]
                %228 = vst [vmem:[%s170 + $0xe0] sm:$0xff] %v227
                %v229 = vld [vmem:[%s169 + $0x298] sm:$0xff]
                %230 = vst [vmem:[%s170 + $0xe8] sm:$0xff] %v229
                %v231 = vld [vmem:[%s169 + $0x2a0] sm:$0xff]
                %232 = vst [vmem:[%s170 + $0xf0] sm:$0xff] %v231
                %v233 = vld [vmem:[%s169 + $0x2a8] sm:$0xff]
                %234 = vst [vmem:[%s170 + $0xf8] sm:$0xff] %v233
                %v235 = vld [vmem:[%s169 + $0x2b0] sm:$0xff]
                %236 = vst [vmem:[%s170 + $0x100] sm:$0xff] %v235
                %v237 = vld [vmem:[%s169 + $0x2b8] sm:$0xff]
                %238 = vst [vmem:[%s170 + $0x108] sm:$0xff] %v237
                %v239 = vld [vmem:[%s169 + $0x2c0] sm:$0xff]
                %240 = vst [vmem:[%s170 + $0x110] sm:$0xff] %v239
                %v241 = vld [vmem:[%s169 + $0x2c8] sm:$0xff]
                %242 = vst [vmem:[%s170 + $0x118] sm:$0xff] %v241
                %v243 = vld [vmem:[%s169 + $0x360] sm:$0xff]
                %244 = vst [vmem:[%s170 + $0x120] sm:$0xff] %v243
                %v245 = vld [vmem:[%s169 + $0x368] sm:$0xff]
                %246 = vst [vmem:[%s170 + $0x128] sm:$0xff] %v245
                %v247 = vld [vmem:[%s169 + $0x370] sm:$0xff]
                %248 = vst [vmem:[%s170 + $0x130] sm:$0xff] %v247
                %v249 = vld [vmem:[%s169 + $0x378] sm:$0xff]
                %250 = vst [vmem:[%s170 + $0x138] sm:$0xff] %v249
                %v251 = vld [vmem:[%s169 + $0x380] sm:$0xff]
                %252 = vst [vmem:[%s170 + $0x140] sm:$0xff] %v251
                %v253 = vld [vmem:[%s169 + $0x388] sm:$0xff]
                %254 = vst [vmem:[%s170 + $0x148] sm:$0xff] %v253
                %v255 = vld [vmem:[%s169 + $0x390] sm:$0xff]
                %256 = vst [vmem:[%s170 + $0x150] sm:$0xff] %v255
                %v257 = vld [vmem:[%s169 + $0x398] sm:$0xff]
                %258 = vst [vmem:[%s170 + $0x158] sm:$0xff] %v257
                %v259 = vld [vmem:[%s169 + $0x3a0] sm:$0xff]
                %260 = vst [vmem:[%s170 + $0x160] sm:$0xff] %v259
                %v261 = vld [vmem:[%s169 + $0x438] sm:$0xff]
                %262 = vst [vmem:[%s170 + $0x168] sm:$0xff] %v261
                %v263 = vld [vmem:[%s169 + $0x440] sm:$0xff]
                %264 = vst [vmem:[%s170 + $0x170] sm:$0xff] %v263
                %v265 = vld [vmem:[%s169 + $0x448] sm:$0xff]
                %266 = vst [vmem:[%s170 + $0x178] sm:$0xff] %v265
                %v267 = vld [vmem:[%s169 + $0x450] sm:$0xff]
                %268 = vst [vmem:[%s170 + $0x180] sm:$0xff] %v267
                %v269 = vld [vmem:[%s169 + $0x458] sm:$0xff]
                %270 = vst [vmem:[%s170 + $0x188] sm:$0xff] %v269
                %v271 = vld [vmem:[%s169 + $0x460] sm:$0xff]
                %272 = vst [vmem:[%s170 + $0x190] sm:$0xff] %v271
                %v273 = vld [vmem:[%s169 + $0x468] sm:$0xff]
                %274 = vst [vmem:[%s170 + $0x198] sm:$0xff] %v273
                %v275 = vld [vmem:[%s169 + $0x470] sm:$0xff]
                %276 = vst [vmem:[%s170 + $0x1a0] sm:$0xff] %v275
                %v277 = vld [vmem:[%s169 + $0x478] sm:$0xff]
                %278 = vst [vmem:[%s170 + $0x1a8] sm:$0xff] %v277
                %v279 = vld [vmem:[%s169 + $0x510] sm:$0xff]
                %280 = vst [vmem:[%s170 + $0x1b0] sm:$0xff] %v279
                %v281 = vld [vmem:[%s169 + $0x518] sm:$0xff]
                %282 = vst [vmem:[%s170 + $0x1b8] sm:$0xff] %v281
                %v283 = vld [vmem:[%s169 + $0x520] sm:$0xff]
                %284 = vst [vmem:[%s170 + $0x1c0] sm:$0xff] %v283
                %v285 = vld [vmem:[%s169 + $0x528] sm:$0xff]
                %286 = vst [vmem:[%s170 + $0x1c8] sm:$0xff] %v285
                %v287 = vld [vmem:[%s169 + $0x530] sm:$0xff]
                %288 = vst [vmem:[%s170 + $0x1d0] sm:$0xff] %v287
                %v289 = vld [vmem:[%s169 + $0x538] sm:$0xff]
                %290 = vst [vmem:[%s170 + $0x1d8] sm:$0xff] %v289
                %v291 = vld [vmem:[%s169 + $0x540] sm:$0xff]
                %292 = vst [vmem:[%s170 + $0x1e0] sm:$0xff] %v291
                %v293 = vld [vmem:[%s169 + $0x548] sm:$0xff]
                %294 = vst [vmem:[%s170 + $0x1e8] sm:$0xff] %v293
                %v295 = vld [vmem:[%s169 + $0x550] sm:$0xff]
                %296 = vst [vmem:[%s170 + $0x1f0] sm:$0xff] %v295
                %v297 = vld [vmem:[%s169 + $0x5e8] sm:$0xff]
                %298 = vst [vmem:[%s170 + $0x1f8] sm:$0xff] %v297
                %v299 = vld [vmem:[%s169 + $0x5f0] sm:$0xff]
                %300 = vst [vmem:[%s170 + $0x200] sm:$0xff] %v299
                %v301 = vld [vmem:[%s169 + $0x5f8] sm:$0xff]
                %302 = vst [vmem:[%s170 + $0x208] sm:$0xff] %v301
                %v303 = vld [vmem:[%s169 + $0x600] sm:$0xff]
                %304 = vst [vmem:[%s170 + $0x210] sm:$0xff] %v303
                %v305 = vld [vmem:[%s169 + $0x608] sm:$0xff]
                %306 = vst [vmem:[%s170 + $0x218] sm:$0xff] %v305
                %v307 = vld [vmem:[%s169 + $0x610] sm:$0xff]
                %308 = vst [vmem:[%s170 + $0x220] sm:$0xff] %v307
                %v309 = vld [vmem:[%s169 + $0x618] sm:$0xff]
                %310 = vst [vmem:[%s170 + $0x228] sm:$0xff] %v309
                %v311 = vld [vmem:[%s169 + $0x620] sm:$0xff]
                %312 = vst [vmem:[%s170 + $0x230] sm:$0xff] %v311
                %v313 = vld [vmem:[%s169 + $0x628] sm:$0xff]
                %314 = vst [vmem:[%s170 + $0x238] sm:$0xff] %v313
                %v315 = vld [vmem:[%s169 + $0x6c0] sm:$0xff]
                %316 = vst [vmem:[%s170 + $0x240] sm:$0xff] %v315
                %v317 = vld [vmem:[%s169 + $0x6c8] sm:$0xff]
                %318 = vst [vmem:[%s170 + $0x248] sm:$0xff] %v317
                %v319 = vld [vmem:[%s169 + $0x6d0] sm:$0xff]
                %320 = vst [vmem:[%s170 + $0x250] sm:$0xff] %v319
                %v321 = vld [vmem:[%s169 + $0x6d8] sm:$0xff]
                %322 = vst [vmem:[%s170 + $0x258] sm:$0xff] %v321
                %v323 = vld [vmem:[%s169 + $0x6e0] sm:$0xff]
                %324 = vst [vmem:[%s170 + $0x260] sm:$0xff] %v323
                %v325 = vld [vmem:[%s169 + $0x6e8] sm:$0xff]
                %326 = vst [vmem:[%s170 + $0x268] sm:$0xff] %v325
                %v327 = vld [vmem:[%s169 + $0x6f0] sm:$0xff]
                %328 = vst [vmem:[%s170 + $0x270] sm:$0xff] %v327
                %v329 = vld [vmem:[%s169 + $0x6f8] sm:$0xff]
                %330 = vst [vmem:[%s170 + $0x278] sm:$0xff] %v329
                %v331 = vld [vmem:[%s169 + $0x700] sm:$0xff]
                %332 = vst [vmem:[%s170 + $0x280] sm:$0xff] %v331
                %v333 = vld [vmem:[%s169 + $0x798] sm:$0xff]
                %334 = vst [vmem:[%s170 + $0x288] sm:$0xff] %v333
                %v335 = vld [vmem:[%s169 + $0x7a0] sm:$0xff]
                %336 = vst [vmem:[%s170 + $0x290] sm:$0xff] %v335
                %v337 = vld [vmem:[%s169 + $0x7a8] sm:$0xff]
                %338 = vst [vmem:[%s170 + $0x298] sm:$0xff] %v337
                %v339 = vld [vmem:[%s169 + $0x7b0] sm:$0xff]
                %340 = vst [vmem:[%s170 + $0x2a0] sm:$0xff] %v339
                %v341 = vld [vmem:[%s169 + $0x7b8] sm:$0xff]
                %342 = vst [vmem:[%s170 + $0x2a8] sm:$0xff] %v341
                %v343 = vld [vmem:[%s169 + $0x7c0] sm:$0xff]
                %344 = vst [vmem:[%s170 + $0x2b0] sm:$0xff] %v343
                %v345 = vld [vmem:[%s169 + $0x7c8] sm:$0xff]
                %346 = vst [vmem:[%s170 + $0x2b8] sm:$0xff] %v345
                %v347 = vld [vmem:[%s169 + $0x7d0] sm:$0xff]
                %348 = vst [vmem:[%s170 + $0x2c0] sm:$0xff] %v347
                %v349 = vld [vmem:[%s169 + $0x7d8] sm:$0xff]
                %350 = vst [vmem:[%s170 + $0x2c8] sm:$0xff] %v349
                %v351 = vld [vmem:[%s169 + $0x870] sm:$0xff]
                %352 = vst [vmem:[%s170 + $0x2d0] sm:$0xff] %v351
                %v353 = vld [vmem:[%s169 + $0x878] sm:$0xff]
                %354 = vst [vmem:[%s170 + $0x2d8] sm:$0xff] %v353
                %v355 = vld [vmem:[%s169 + $0x880] sm:$0xff]
                %356 = vst [vmem:[%s170 + $0x2e0] sm:$0xff] %v355
                %v357 = vld [vmem:[%s169 + $0x888] sm:$0xff]
                %358 = vst [vmem:[%s170 + $0x2e8] sm:$0xff] %v357
                %v359 = vld [vmem:[%s169 + $0x890] sm:$0xff]
                %360 = vst [vmem:[%s170 + $0x2f0] sm:$0xff] %v359
                %v361 = vld [vmem:[%s169 + $0x898] sm:$0xff]
                %362 = vst [vmem:[%s170 + $0x2f8] sm:$0xff] %v361
                %v363 = vld [vmem:[%s169 + $0x8a0] sm:$0xff]
                %364 = vst [vmem:[%s170 + $0x300] sm:$0xff] %v363
                %v365 = vld [vmem:[%s169 + $0x8a8] sm:$0xff]
                %366 = vst [vmem:[%s170 + $0x308] sm:$0xff] %v365
                %v367 = vld [vmem:[%s169 + $0x8b0] sm:$0xff]
                %368 = vst [vmem:[%s170 + $0x310] sm:$0xff] %v367
                %v369 = vld [vmem:[%s169 + $0x948] sm:$0xff]
                %370 = vst [vmem:[%s170 + $0x318] sm:$0xff] %v369
                %v371 = vld [vmem:[%s169 + $0x950] sm:$0xff]
                %372 = vst [vmem:[%s170 + $0x320] sm:$0xff] %v371
                %v373 = vld [vmem:[%s169 + $0x958] sm:$0xff]
                %374 = vst [vmem:[%s170 + $0x328] sm:$0xff] %v373
                %v375 = vld [vmem:[%s169 + $0x960] sm:$0xff]
                %376 = vst [vmem:[%s170 + $0x330] sm:$0xff] %v375
                %v377 = vld [vmem:[%s169 + $0x968] sm:$0xff]
                %378 = vst [vmem:[%s170 + $0x338] sm:$0xff] %v377
                %v379 = vld [vmem:[%s169 + $0x970] sm:$0xff]
                %380 = vst [vmem:[%s170 + $0x340] sm:$0xff] %v379
                %v381 = vld [vmem:[%s169 + $0x978] sm:$0xff]
                %382 = vst [vmem:[%s170 + $0x348] sm:$0xff] %v381
                %v383 = vld [vmem:[%s169 + $0x980] sm:$0xff]
                %384 = vst [vmem:[%s170 + $0x350] sm:$0xff] %v383
                %v385 = vld [vmem:[%s169 + $0x988] sm:$0xff]
                %386 = vst [vmem:[%s170 + $0x358] sm:$0xff] %v385
                %v387 = vld [vmem:[%s169 + $0xa20] sm:$0xff]
                %388 = vst [vmem:[%s170 + $0x360] sm:$0xff] %v387
                %v389 = vld [vmem:[%s169 + $0xa28] sm:$0xff]
                %390 = vst [vmem:[%s170 + $0x368] sm:$0xff] %v389
                %v391 = vld [vmem:[%s169 + $0xa30] sm:$0xff]
                %392 = vst [vmem:[%s170 + $0x370] sm:$0xff] %v391
                %v393 = vld [vmem:[%s169 + $0xa38] sm:$0xff]
                %394 = vst [vmem:[%s170 + $0x378] sm:$0xff] %v393
                %v395 = vld [vmem:[%s169 + $0xa40] sm:$0xff]
                %396 = vst [vmem:[%s170 + $0x380] sm:$0xff] %v395
                %v397 = vld [vmem:[%s169 + $0xa48] sm:$0xff]
                %398 = vst [vmem:[%s170 + $0x388] sm:$0xff] %v397
                %v399 = vld [vmem:[%s169 + $0xa50] sm:$0xff]
                %400 = vst [vmem:[%s170 + $0x390] sm:$0xff] %v399
                %v401 = vld [vmem:[%s169 + $0xa58] sm:$0xff]
                %402 = vst [vmem:[%s170 + $0x398] sm:$0xff] %v401
                %v403 = vld [vmem:[%s169 + $0xa60] sm:$0xff]
                %404 = vst [vmem:[%s170 + $0x3a0] sm:$0xff] %v403
                %v405 = vld [vmem:[%s169 + $0xaf8] sm:$0xff]
                %406 = vst [vmem:[%s170 + $0x3a8] sm:$0xff] %v405
                %v407 = vld [vmem:[%s169 + $0xb00] sm:$0xff]
                %408 = vst [vmem:[%s170 + $0x3b0] sm:$0xff] %v407
                %v409 = vld [vmem:[%s169 + $0xb08] sm:$0xff]
                %410 = vst [vmem:[%s170 + $0x3b8] sm:$0xff] %v409
                %v411 = vld [vmem:[%s169 + $0xb10] sm:$0xff]
                %412 = vst [vmem:[%s170 + $0x3c0] sm:$0xff] %v411
                %v413 = vld [vmem:[%s169 + $0xb18] sm:$0xff]
                %414 = vst [vmem:[%s170 + $0x3c8] sm:$0xff] %v413
                %v415 = vld [vmem:[%s169 + $0xb20] sm:$0xff]
                %416 = vst [vmem:[%s170 + $0x3d0] sm:$0xff] %v415
                %v417 = vld [vmem:[%s169 + $0xb28] sm:$0xff]
                %418 = vst [vmem:[%s170 + $0x3d8] sm:$0xff] %v417
                %v419 = vld [vmem:[%s169 + $0xb30] sm:$0xff]
                %420 = vst [vmem:[%s170 + $0x3e0] sm:$0xff] %v419
                %v421 = vld [vmem:[%s169 + $0xb38] sm:$0xff]
                %422 = vst [vmem:[%s170 + $0x3e8] sm:$0xff] %v421
                %v423 = vld [vmem:[%s169 + $0xbd0] sm:$0xff]
                %424 = vst [vmem:[%s170 + $0x3f0] sm:$0xff] %v423
                %v425 = vld [vmem:[%s169 + $0xbd8] sm:$0xff]
                %426 = vst [vmem:[%s170 + $0x3f8] sm:$0xff] %v425
                %v427 = vld [vmem:[%s169 + $0xbe0] sm:$0xff]
                %428 = vst [vmem:[%s170 + $0x400] sm:$0xff] %v427
                %v429 = vld [vmem:[%s169 + $0xbe8] sm:$0xff]
                %430 = vst [vmem:[%s170 + $0x408] sm:$0xff] %v429
                %v431 = vld [vmem:[%s169 + $0xbf0] sm:$0xff]
                %432 = vst [vmem:[%s170 + $0x410] sm:$0xff] %v431
                %v433 = vld [vmem:[%s169 + $0xbf8] sm:$0xff]
                %434 = vst [vmem:[%s170 + $0x418] sm:$0xff] %v433
                %v435 = vld [vmem:[%s169 + $0xc00] sm:$0xff]
                %436 = vst [vmem:[%s170 + $0x420] sm:$0xff] %v435
                %v437 = vld [vmem:[%s169 + $0xc08] sm:$0xff]
                %438 = vst [vmem:[%s170 + $0x428] sm:$0xff] %v437
                %v439 = vld [vmem:[%s169 + $0xc10] sm:$0xff]
                %440 = vst [vmem:[%s170 + $0x430] sm:$0xff] %v439
                %v441 = vld [vmem:[%s169 + $0xca8] sm:$0xff]
                %442 = vst [vmem:[%s170 + $0x438] sm:$0xff] %v441
                %v443 = vld [vmem:[%s169 + $0xcb0] sm:$0xff]
                %444 = vst [vmem:[%s170 + $0x440] sm:$0xff] %v443
                %v445 = vld [vmem:[%s169 + $0xcb8] sm:$0xff]
                %446 = vst [vmem:[%s170 + $0x448] sm:$0xff] %v445
                %v447 = vld [vmem:[%s169 + $0xcc0] sm:$0xff]
                %448 = vst [vmem:[%s170 + $0x450] sm:$0xff] %v447
                %v449 = vld [vmem:[%s169 + $0xcc8] sm:$0xff]
                %450 = vst [vmem:[%s170 + $0x458] sm:$0xff] %v449
                %v451 = vld [vmem:[%s169 + $0xcd0] sm:$0xff]
                %452 = vst [vmem:[%s170 + $0x460] sm:$0xff] %v451
                %v453 = vld [vmem:[%s169 + $0xcd8] sm:$0xff]
                %454 = vst [vmem:[%s170 + $0x468] sm:$0xff] %v453
                %v455 = vld [vmem:[%s169 + $0xce0] sm:$0xff]
                %456 = vst [vmem:[%s170 + $0x470] sm:$0xff] %v455
                %v457 = vld [vmem:[%s169 + $0xce8] sm:$0xff]
                %458 = vst [vmem:[%s170 + $0x478] sm:$0xff] %v457
                %v459 = vld [vmem:[%s169 + $0xd80] sm:$0xff]
                %460 = vst [vmem:[%s170 + $0x480] sm:$0xff] %v459
                %v461 = vld [vmem:[%s169 + $0xd88] sm:$0xff]
                %462 = vst [vmem:[%s170 + $0x488] sm:$0xff] %v461
                %v463 = vld [vmem:[%s169 + $0xd90] sm:$0xff]
                %464 = vst [vmem:[%s170 + $0x490] sm:$0xff] %v463
                %v465 = vld [vmem:[%s169 + $0xd98] sm:$0xff]
                %466 = vst [vmem:[%s170 + $0x498] sm:$0xff] %v465
                %v467 = vld [vmem:[%s169 + $0xda0] sm:$0xff]
                %468 = vst [vmem:[%s170 + $0x4a0] sm:$0xff] %v467
                %v469 = vld [vmem:[%s169 + $0xda8] sm:$0xff]
                %470 = vst [vmem:[%s170 + $0x4a8] sm:$0xff] %v469
                %v471 = vld [vmem:[%s169 + $0xdb0] sm:$0xff]
                %472 = vst [vmem:[%s170 + $0x4b0] sm:$0xff] %v471
                %v473 = vld [vmem:[%s169 + $0xdb8] sm:$0xff]
                %474 = vst [vmem:[%s170 + $0x4b8] sm:$0xff] %v473
                %v475 = vld [vmem:[%s169 + $0xdc0] sm:$0xff]
                %476 = vst [vmem:[%s170 + $0x4c0] sm:$0xff] %v475
                %v477 = vld [vmem:[%s169 + $0xe58] sm:$0xff]
                %478 = vst [vmem:[%s170 + $0x4c8] sm:$0xff] %v477
                %v479 = vld [vmem:[%s169 + $0xe60] sm:$0xff]
                %480 = vst [vmem:[%s170 + $0x4d0] sm:$0xff] %v479
                %v481 = vld [vmem:[%s169 + $0xe68] sm:$0xff]
                %482 = vst [vmem:[%s170 + $0x4d8] sm:$0xff] %v481
                %v483 = vld [vmem:[%s169 + $0xe70] sm:$0xff]
                %484 = vst [vmem:[%s170 + $0x4e0] sm:$0xff] %v483
                %v485 = vld [vmem:[%s169 + $0xe78] sm:$0xff]
                %486 = vst [vmem:[%s170 + $0x4e8] sm:$0xff] %v485
                %v487 = vld [vmem:[%s169 + $0xe80] sm:$0xff]
                %488 = vst [vmem:[%s170 + $0x4f0] sm:$0xff] %v487
                %v489 = vld [vmem:[%s169 + $0xe88] sm:$0xff]
                %490 = vst [vmem:[%s170 + $0x4f8] sm:$0xff] %v489
                %v491 = vld [vmem:[%s169 + $0xe90] sm:$0xff]
                %492 = vst [vmem:[%s170 + $0x500] sm:$0xff] %v491
                %v493 = vld [vmem:[%s169 + $0xe98] sm:$0xff]
                %494 = vst [vmem:[%s170 + $0x508] sm:$0xff] %v493
                %v495 = vld [vmem:[%s169 + $0xf30] sm:$0xff]
                %496 = vst [vmem:[%s170 + $0x510] sm:$0xff] %v495
                %v497 = vld [vmem:[%s169 + $0xf38] sm:$0xff]
                %498 = vst [vmem:[%s170 + $0x518] sm:$0xff] %v497
                %v499 = vld [vmem:[%s169 + $0xf40] sm:$0xff]
                %500 = vst [vmem:[%s170 + $0x520] sm:$0xff] %v499
                %v501 = vld [vmem:[%s169 + $0xf48] sm:$0xff]
                %502 = vst [vmem:[%s170 + $0x528] sm:$0xff] %v501
                %v503 = vld [vmem:[%s169 + $0xf50] sm:$0xff]
                %504 = vst [vmem:[%s170 + $0x530] sm:$0xff] %v503
                %v505 = vld [vmem:[%s169 + $0xf58] sm:$0xff]
                %506 = vst [vmem:[%s170 + $0x538] sm:$0xff] %v505
                %v507 = vld [vmem:[%s169 + $0xf60] sm:$0xff]
                %508 = vst [vmem:[%s170 + $0x540] sm:$0xff] %v507
                %v509 = vld [vmem:[%s169 + $0xf68] sm:$0xff]
                %510 = vst [vmem:[%s170 + $0x548] sm:$0xff] %v509
                %v511 = vld [vmem:[%s169 + $0xf70] sm:$0xff]
                %512 = vst [vmem:[%s170 + $0x550] sm:$0xff] %v511
                %v513 = vld [vmem:[%s169 + $0x1008] sm:$0xff]
                %514 = vst [vmem:[%s170 + $0x558] sm:$0xff] %v513
                %v515 = vld [vmem:[%s169 + $0x1010] sm:$0xff]
                %516 = vst [vmem:[%s170 + $0x560] sm:$0xff] %v515
                %v517 = vld [vmem:[%s169 + $0x1018] sm:$0xff]
                %518 = vst [vmem:[%s170 + $0x568] sm:$0xff] %v517
                %v519 = vld [vmem:[%s169 + $0x1020] sm:$0xff]
                %520 = vst [vmem:[%s170 + $0x570] sm:$0xff] %v519
                %v521 = vld [vmem:[%s169 + $0x1028] sm:$0xff]
                %522 = vst [vmem:[%s170 + $0x578] sm:$0xff] %v521
                %v523 = vld [vmem:[%s169 + $0x1030] sm:$0xff]
                %524 = vst [vmem:[%s170 + $0x580] sm:$0xff] %v523
                %v525 = vld [vmem:[%s169 + $0x1038] sm:$0xff]
                %526 = vst [vmem:[%s170 + $0x588] sm:$0xff] %v525
                %v527 = vld [vmem:[%s169 + $0x1040] sm:$0xff]
                %528 = vst [vmem:[%s170 + $0x590] sm:$0xff] %v527
                %v529 = vld [vmem:[%s169 + $0x1048] sm:$0xff]
                %530 = vst [vmem:[%s170 + $0x598] sm:$0xff] %v529
                %v531 = vld [vmem:[%s169 + $0x10e0] sm:$0xff]
                %532 = vst [vmem:[%s170 + $0x5a0] sm:$0xff] %v531
                %v533 = vld [vmem:[%s169 + $0x10e8] sm:$0xff]
                %534 = vst [vmem:[%s170 + $0x5a8] sm:$0xff] %v533
                %v535 = vld [vmem:[%s169 + $0x10f0] sm:$0xff]
                %536 = vst [vmem:[%s170 + $0x5b0] sm:$0xff] %v535
                %v537 = vld [vmem:[%s169 + $0x10f8] sm:$0xff]
                %538 = vst [vmem:[%s170 + $0x5b8] sm:$0xff] %v537
                %v539 = vld [vmem:[%s169 + $0x1100] sm:$0xff]
                %540 = vst [vmem:[%s170 + $0x5c0] sm:$0xff] %v539
                %v541 = vld [vmem:[%s169 + $0x1108] sm:$0xff]
                %542 = vst [vmem:[%s170 + $0x5c8] sm:$0xff] %v541
                %v543 = vld [vmem:[%s169 + $0x1110] sm:$0xff]
                %544 = vst [vmem:[%s170 + $0x5d0] sm:$0xff] %v543
                %v545 = vld [vmem:[%s169 + $0x1118] sm:$0xff]
                %546 = vst [vmem:[%s170 + $0x5d8] sm:$0xff] %v545
                %v547 = vld [vmem:[%s169 + $0x1120] sm:$0xff]
                %548 = vst [vmem:[%s170 + $0x5e0] sm:$0xff] %v547
                %v549 = vld [vmem:[%s169 + $0x11b8] sm:$0xff]
                %550 = vst [vmem:[%s170 + $0x5e8] sm:$0xff] %v549
                %v551 = vld [vmem:[%s169 + $0x11c0] sm:$0xff]
                %552 = vst [vmem:[%s170 + $0x5f0] sm:$0xff] %v551
                %v553 = vld [vmem:[%s169 + $0x11c8] sm:$0xff]
                %554 = vst [vmem:[%s170 + $0x5f8] sm:$0xff] %v553
                %v555 = vld [vmem:[%s169 + $0x11d0] sm:$0xff]
                %556 = vst [vmem:[%s170 + $0x600] sm:$0xff] %v555
                %v557 = vld [vmem:[%s169 + $0x11d8] sm:$0xff]
                %558 = vst [vmem:[%s170 + $0x608] sm:$0xff] %v557
                %v559 = vld [vmem:[%s169 + $0x11e0] sm:$0xff]
                %560 = vst [vmem:[%s170 + $0x610] sm:$0xff] %v559
                %v561 = vld [vmem:[%s169 + $0x11e8] sm:$0xff]
                %562 = vst [vmem:[%s170 + $0x618] sm:$0xff] %v561
                %v563 = vld [vmem:[%s169 + $0x11f0] sm:$0xff]
                %564 = vst [vmem:[%s170 + $0x620] sm:$0xff] %v563
                %v565 = vld [vmem:[%s169 + $0x11f8] sm:$0xff]
                %566 = vst [vmem:[%s170 + $0x628] sm:$0xff] %v565
                %v567 = vld [vmem:[%s169 + $0x1290] sm:$0xff]
                %568 = vst [vmem:[%s170 + $0x630] sm:$0xff] %v567
                %v569 = vld [vmem:[%s169 + $0x1298] sm:$0xff]
                %570 = vst [vmem:[%s170 + $0x638] sm:$0xff] %v569
                %v571 = vld [vmem:[%s169 + $0x12a0] sm:$0xff]
                %572 = vst [vmem:[%s170 + $0x640] sm:$0xff] %v571
                %v573 = vld [vmem:[%s169 + $0x12a8] sm:$0xff]
                %574 = vst [vmem:[%s170 + $0x648] sm:$0xff] %v573
                %v575 = vld [vmem:[%s169 + $0x12b0] sm:$0xff]
                %576 = vst [vmem:[%s170 + $0x650] sm:$0xff] %v575
                %v577 = vld [vmem:[%s169 + $0x12b8] sm:$0xff]
                %578 = vst [vmem:[%s170 + $0x658] sm:$0xff] %v577
                %v579 = vld [vmem:[%s169 + $0x12c0] sm:$0xff]
                %580 = vst [vmem:[%s170 + $0x660] sm:$0xff] %v579
                %v581 = vld [vmem:[%s169 + $0x12c8] sm:$0xff]
                %582 = vst [vmem:[%s170 + $0x668] sm:$0xff] %v581
                %v583 = vld [vmem:[%s169 + $0x12d0] sm:$0xff]
                %584 = vst [vmem:[%s170 + $0x670] sm:$0xff] %v583
                %v585 = vld [vmem:[%s169 + $0x1368] sm:$0xff]
                %586 = vst [vmem:[%s170 + $0x678] sm:$0xff] %v585
                %v587 = vld [vmem:[%s169 + $0x1370] sm:$0xff]
                %588 = vst [vmem:[%s170 + $0x680] sm:$0xff] %v587
                %v589 = vld [vmem:[%s169 + $0x1378] sm:$0xff]
                %590 = vst [vmem:[%s170 + $0x688] sm:$0xff] %v589
                %v591 = vld [vmem:[%s169 + $0x1380] sm:$0xff]
                %592 = vst [vmem:[%s170 + $0x690] sm:$0xff] %v591
                %v593 = vld [vmem:[%s169 + $0x1388] sm:$0xff]
                %594 = vst [vmem:[%s170 + $0x698] sm:$0xff] %v593
                %v595 = vld [vmem:[%s169 + $0x1390] sm:$0xff]
                %596 = vst [vmem:[%s170 + $0x6a0] sm:$0xff] %v595
                %v597 = vld [vmem:[%s169 + $0x1398] sm:$0xff]
                %598 = vst [vmem:[%s170 + $0x6a8] sm:$0xff] %v597
                %v599 = vld [vmem:[%s169 + $0x13a0] sm:$0xff]
                %600 = vst [vmem:[%s170 + $0x6b0] sm:$0xff] %v599
                %v601 = vld [vmem:[%s169 + $0x13a8] sm:$0xff]
                %602 = vst [vmem:[%s170 + $0x6b8] sm:$0xff] %v601
                %v603 = vld [vmem:[%s169 + $0x1440] sm:$0xff]
                %604 = vst [vmem:[%s170 + $0x6c0] sm:$0xff] %v603
                %v605 = vld [vmem:[%s169 + $0x1448] sm:$0xff]
                %606 = vst [vmem:[%s170 + $0x6c8] sm:$0xff] %v605
                %v607 = vld [vmem:[%s169 + $0x1450] sm:$0xff]
                %608 = vst [vmem:[%s170 + $0x6d0] sm:$0xff] %v607
                %v609 = vld [vmem:[%s169 + $0x1458] sm:$0xff]
                %610 = vst [vmem:[%s170 + $0x6d8] sm:$0xff] %v609
                %v611 = vld [vmem:[%s169 + $0x1460] sm:$0xff]
                %612 = vst [vmem:[%s170 + $0x6e0] sm:$0xff] %v611
                %v613 = vld [vmem:[%s169 + $0x1468] sm:$0xff]
                %614 = vst [vmem:[%s170 + $0x6e8] sm:$0xff] %v613
                %v615 = vld [vmem:[%s169 + $0x1470] sm:$0xff]
                %616 = vst [vmem:[%s170 + $0x6f0] sm:$0xff] %v615
                %v617 = vld [vmem:[%s169 + $0x1478] sm:$0xff]
                %618 = vst [vmem:[%s170 + $0x6f8] sm:$0xff] %v617
                %v619 = vld [vmem:[%s169 + $0x1480] sm:$0xff]
                %620 = vst [vmem:[%s170 + $0x700] sm:$0xff] %v619
                %v621 = vld [vmem:[%s169 + $0x1518] sm:$0xff]
                %622 = vst [vmem:[%s170 + $0x708] sm:$0xff] %v621
                %v623 = vld [vmem:[%s169 + $0x1520] sm:$0xff]
                %624 = vst [vmem:[%s170 + $0x710] sm:$0xff] %v623
                %v625 = vld [vmem:[%s169 + $0x1528] sm:$0xff]
                %626 = vst [vmem:[%s170 + $0x718] sm:$0xff] %v625
                %v627 = vld [vmem:[%s169 + $0x1530] sm:$0xff]
                %628 = vst [vmem:[%s170 + $0x720] sm:$0xff] %v627
                %v629 = vld [vmem:[%s169 + $0x1538] sm:$0xff]
                %630 = vst [vmem:[%s170 + $0x728] sm:$0xff] %v629
                %v631 = vld [vmem:[%s169 + $0x1540] sm:$0xff]
                %632 = vst [vmem:[%s170 + $0x730] sm:$0xff] %v631
                %v633 = vld [vmem:[%s169 + $0x1548] sm:$0xff]
                %634 = vst [vmem:[%s170 + $0x738] sm:$0xff] %v633
                %v635 = vld [vmem:[%s169 + $0x1550] sm:$0xff]
                %636 = vst [vmem:[%s170 + $0x740] sm:$0xff] %v635
                %v637 = vld [vmem:[%s169 + $0x1558] sm:$0xff]
                %638 = vst [vmem:[%s170 + $0x748] sm:$0xff] %v637
                %v639 = vld [vmem:[%s169 + $0x15f0] sm:$0xff]
                %640 = vst [vmem:[%s170 + $0x750] sm:$0xff] %v639
                %v641 = vld [vmem:[%s169 + $0x15f8] sm:$0xff]
                %642 = vst [vmem:[%s170 + $0x758] sm:$0xff] %v641
                %v643 = vld [vmem:[%s169 + $0x1600] sm:$0xff]
                %644 = vst [vmem:[%s170 + $0x760] sm:$0xff] %v643
                %v645 = vld [vmem:[%s169 + $0x1608] sm:$0xff]
                %646 = vst [vmem:[%s170 + $0x768] sm:$0xff] %v645
                %v647 = vld [vmem:[%s169 + $0x1610] sm:$0xff]
                %648 = vst [vmem:[%s170 + $0x770] sm:$0xff] %v647
                %v649 = vld [vmem:[%s169 + $0x1618] sm:$0xff]
                %650 = vst [vmem:[%s170 + $0x778] sm:$0xff] %v649
                %v651 = vld [vmem:[%s169 + $0x1620] sm:$0xff]
                %652 = vst [vmem:[%s170 + $0x780] sm:$0xff] %v651
                %v653 = vld [vmem:[%s169 + $0x1628] sm:$0xff]
                %654 = vst [vmem:[%s170 + $0x788] sm:$0xff] %v653
                %v655 = vld [vmem:[%s169 + $0x1630] sm:$0xff]
                %656 = vst [vmem:[%s170 + $0x790] sm:$0xff] %v655
                %v657 = vld [vmem:[%s169 + $0x16c8] sm:$0xff]
                %658 = vst [vmem:[%s170 + $0x798] sm:$0xff] %v657
                %v659 = vld [vmem:[%s169 + $0x16d0] sm:$0xff]
                %660 = vst [vmem:[%s170 + $0x7a0] sm:$0xff] %v659
                %v661 = vld [vmem:[%s169 + $0x16d8] sm:$0xff]
                %662 = vst [vmem:[%s170 + $0x7a8] sm:$0xff] %v661
                %v663 = vld [vmem:[%s169 + $0x16e0] sm:$0xff]
                %664 = vst [vmem:[%s170 + $0x7b0] sm:$0xff] %v663
                %v665 = vld [vmem:[%s169 + $0x16e8] sm:$0xff]
                %666 = vst [vmem:[%s170 + $0x7b8] sm:$0xff] %v665
                %v667 = vld [vmem:[%s169 + $0x16f0] sm:$0xff]
                %668 = vst [vmem:[%s170 + $0x7c0] sm:$0xff] %v667
                %v669 = vld [vmem:[%s169 + $0x16f8] sm:$0xff]
                %670 = vst [vmem:[%s170 + $0x7c8] sm:$0xff] %v669
                %v671 = vld [vmem:[%s169 + $0x1700] sm:$0xff]
                %672 = vst [vmem:[%s170 + $0x7d0] sm:$0xff] %v671
                %v673 = vld [vmem:[%s169 + $0x1708] sm:$0xff]
                %674 = vst [vmem:[%s170 + $0x7d8] sm:$0xff] %v673
                %v675 = vld [vmem:[%s169 + $0x17a0] sm:$0xff]
                %676 = vst [vmem:[%s170 + $0x7e0] sm:$0xff] %v675
                %v677 = vld [vmem:[%s169 + $0x17a8] sm:$0xff]
                %678 = vst [vmem:[%s170 + $0x7e8] sm:$0xff] %v677
                %v679 = vld [vmem:[%s169 + $0x17b0] sm:$0xff]
                %680 = vst [vmem:[%s170 + $0x7f0] sm:$0xff] %v679
                %v681 = vld [vmem:[%s169 + $0x17b8] sm:$0xff]
                %682 = vst [vmem:[%s170 + $0x7f8] sm:$0xff] %v681
                %v683 = vld [vmem:[%s169 + $0x17c0] sm:$0xff]
                %684 = vst [vmem:[%s170 + $0x800] sm:$0xff] %v683
                %v685 = vld [vmem:[%s169 + $0x17c8] sm:$0xff]
                %686 = vst [vmem:[%s170 + $0x808] sm:$0xff] %v685
                %v687 = vld [vmem:[%s169 + $0x17d0] sm:$0xff]
                %688 = vst [vmem:[%s170 + $0x810] sm:$0xff] %v687
                %v689 = vld [vmem:[%s169 + $0x17d8] sm:$0xff]
                %690 = vst [vmem:[%s170 + $0x818] sm:$0xff] %v689
                %v691 = vld [vmem:[%s169 + $0x17e0] sm:$0xff]
                %692 = vst [vmem:[%s170 + $0x820] sm:$0xff] %v691
                %v693 = vld [vmem:[%s169 + $0x1878] sm:$0xff]
                %694 = vst [vmem:[%s170 + $0x828] sm:$0xff] %v693
                %v695 = vld [vmem:[%s169 + $0x1880] sm:$0xff]
                %696 = vst [vmem:[%s170 + $0x830] sm:$0xff] %v695
                %v697 = vld [vmem:[%s169 + $0x1888] sm:$0xff]
                %698 = vst [vmem:[%s170 + $0x838] sm:$0xff] %v697
                %v699 = vld [vmem:[%s169 + $0x1890] sm:$0xff]
                %700 = vst [vmem:[%s170 + $0x840] sm:$0xff] %v699
                %v701 = vld [vmem:[%s169 + $0x1898] sm:$0xff]
                %702 = vst [vmem:[%s170 + $0x848] sm:$0xff] %v701
                %v703 = vld [vmem:[%s169 + $0x18a0] sm:$0xff]
                %704 = vst [vmem:[%s170 + $0x850] sm:$0xff] %v703
                %v705 = vld [vmem:[%s169 + $0x18a8] sm:$0xff]
                %706 = vst [vmem:[%s170 + $0x858] sm:$0xff] %v705
                %v707 = vld [vmem:[%s169 + $0x18b0] sm:$0xff]
                %708 = vst [vmem:[%s170 + $0x860] sm:$0xff] %v707
                %v709 = vld [vmem:[%s169 + $0x18b8] sm:$0xff]
                %710 = vst [vmem:[%s170 + $0x868] sm:$0xff] %v709
                %v711 = vld [vmem:[%s169 + $0x1950] sm:$0xff]
                %712 = vst [vmem:[%s170 + $0x870] sm:$0xff] %v711
                %v713 = vld [vmem:[%s169 + $0x1958] sm:$0xff]
                %714 = vst [vmem:[%s170 + $0x878] sm:$0xff] %v713
                %v715 = vld [vmem:[%s169 + $0x1960] sm:$0xff]
                %716 = vst [vmem:[%s170 + $0x880] sm:$0xff] %v715
                %v717 = vld [vmem:[%s169 + $0x1968] sm:$0xff]
                %718 = vst [vmem:[%s170 + $0x888] sm:$0xff] %v717
                %v719 = vld [vmem:[%s169 + $0x1970] sm:$0xff]
                %720 = vst [vmem:[%s170 + $0x890] sm:$0xff] %v719
                %v721 = vld [vmem:[%s169 + $0x1978] sm:$0xff]
                %722 = vst [vmem:[%s170 + $0x898] sm:$0xff] %v721
                %v723 = vld [vmem:[%s169 + $0x1980] sm:$0xff]
                %724 = vst [vmem:[%s170 + $0x8a0] sm:$0xff] %v723
                %v725 = vld [vmem:[%s169 + $0x1988] sm:$0xff]
                %726 = vst [vmem:[%s170 + $0x8a8] sm:$0xff] %v725
                %v727 = vld [vmem:[%s169 + $0x1990] sm:$0xff]
                %728 = vst [vmem:[%s170 + $0x8b0] sm:$0xff] %v727
                %v729 = vld [vmem:[%s169 + $0x1a28] sm:$0xff]
                %730 = vst [vmem:[%s170 + $0x8b8] sm:$0xff] %v729
                %v731 = vld [vmem:[%s169 + $0x1a30] sm:$0xff]
                %732 = vst [vmem:[%s170 + $0x8c0] sm:$0xff] %v731
                %v733 = vld [vmem:[%s169 + $0x1a38] sm:$0xff]
                %734 = vst [vmem:[%s170 + $0x8c8] sm:$0xff] %v733
                %v735 = vld [vmem:[%s169 + $0x1a40] sm:$0xff]
                %736 = vst [vmem:[%s170 + $0x8d0] sm:$0xff] %v735
                %v737 = vld [vmem:[%s169 + $0x1a48] sm:$0xff]
                %738 = vst [vmem:[%s170 + $0x8d8] sm:$0xff] %v737
                %v739 = vld [vmem:[%s169 + $0x1a50] sm:$0xff]
                %740 = vst [vmem:[%s170 + $0x8e0] sm:$0xff] %v739
                %v741 = vld [vmem:[%s169 + $0x1a58] sm:$0xff]
                %742 = vst [vmem:[%s170 + $0x8e8] sm:$0xff] %v741
                %v743 = vld [vmem:[%s169 + $0x1a60] sm:$0xff]
                %744 = vst [vmem:[%s170 + $0x8f0] sm:$0xff] %v743
                %v745 = vld [vmem:[%s169 + $0x1a68] sm:$0xff]
                %746 = vst [vmem:[%s170 + $0x8f8] sm:$0xff] %v745
                %v747 = vld [vmem:[%s169 + $0x1b00] sm:$0xff]
                %748 = vst [vmem:[%s170 + $0x900] sm:$0xff] %v747
                %v749 = vld [vmem:[%s169 + $0x1b08] sm:$0xff]
                %750 = vst [vmem:[%s170 + $0x908] sm:$0xff] %v749
                %v751 = vld [vmem:[%s169 + $0x1b10] sm:$0xff]
                %752 = vst [vmem:[%s170 + $0x910] sm:$0xff] %v751
                %v753 = vld [vmem:[%s169 + $0x1b18] sm:$0xff]
                %754 = vst [vmem:[%s170 + $0x918] sm:$0xff] %v753
                %v755 = vld [vmem:[%s169 + $0x1b20] sm:$0xff]
                %756 = vst [vmem:[%s170 + $0x920] sm:$0xff] %v755
                %v757 = vld [vmem:[%s169 + $0x1b28] sm:$0xff]
                %758 = vst [vmem:[%s170 + $0x928] sm:$0xff] %v757
                %v759 = vld [vmem:[%s169 + $0x1b30] sm:$0xff]
                %760 = vst [vmem:[%s170 + $0x930] sm:$0xff] %v759
                %v761 = vld [vmem:[%s169 + $0x1b38] sm:$0xff]
                %762 = vst [vmem:[%s170 + $0x938] sm:$0xff] %v761
                %v763 = vld [vmem:[%s169 + $0x1b40] sm:$0xff]
                %764 = vst [vmem:[%s170 + $0x940] sm:$0xff] %v763
                %v765 = vld [vmem:[%s169 + $0x1bd8] sm:$0xff]
                %766 = vst [vmem:[%s170 + $0x948] sm:$0xff] %v765
                %v767 = vld [vmem:[%s169 + $0x1be0] sm:$0xff]
                %768 = vst [vmem:[%s170 + $0x950] sm:$0xff] %v767
                %v769 = vld [vmem:[%s169 + $0x1be8] sm:$0xff]
                %770 = vst [vmem:[%s170 + $0x958] sm:$0xff] %v769
                %v771 = vld [vmem:[%s169 + $0x1bf0] sm:$0xff]
                %772 = vst [vmem:[%s170 + $0x960] sm:$0xff] %v771
                %v773 = vld [vmem:[%s169 + $0x1bf8] sm:$0xff]
                %774 = vst [vmem:[%s170 + $0x968] sm:$0xff] %v773
                %v775 = vld [vmem:[%s169 + $0x1c00] sm:$0xff]
                %776 = vst [vmem:[%s170 + $0x970] sm:$0xff] %v775
                %v777 = vld [vmem:[%s169 + $0x1c08] sm:$0xff]
                %778 = vst [vmem:[%s170 + $0x978] sm:$0xff] %v777
                %v779 = vld [vmem:[%s169 + $0x1c10] sm:$0xff]
                %780 = vst [vmem:[%s170 + $0x980] sm:$0xff] %v779
                %v781 = vld [vmem:[%s169 + $0x1c18] sm:$0xff]
                %782 = vst [vmem:[%s170 + $0x988] sm:$0xff] %v781
                %v783 = vld [vmem:[%s169 + $0x1cb0] sm:$0xff]
                %784 = vst [vmem:[%s170 + $0x990] sm:$0xff] %v783
                %v785 = vld [vmem:[%s169 + $0x1cb8] sm:$0xff]
                %786 = vst [vmem:[%s170 + $0x998] sm:$0xff] %v785
                %v787 = vld [vmem:[%s169 + $0x1cc0] sm:$0xff]
                %788 = vst [vmem:[%s170 + $0x9a0] sm:$0xff] %v787
                %v789 = vld [vmem:[%s169 + $0x1cc8] sm:$0xff]
                %790 = vst [vmem:[%s170 + $0x9a8] sm:$0xff] %v789
                %v791 = vld [vmem:[%s169 + $0x1cd0] sm:$0xff]
                %792 = vst [vmem:[%s170 + $0x9b0] sm:$0xff] %v791
                %v793 = vld [vmem:[%s169 + $0x1cd8] sm:$0xff]
                %794 = vst [vmem:[%s170 + $0x9b8] sm:$0xff] %v793
                %v795 = vld [vmem:[%s169 + $0x1ce0] sm:$0xff]
                %796 = vst [vmem:[%s170 + $0x9c0] sm:$0xff] %v795
                %v797 = vld [vmem:[%s169 + $0x1ce8] sm:$0xff]
                %798 = vst [vmem:[%s170 + $0x9c8] sm:$0xff] %v797
                %v799 = vld [vmem:[%s169 + $0x1cf0] sm:$0xff]
                %800 = vst [vmem:[%s170 + $0x9d0] sm:$0xff] %v799
                %v801 = vld [vmem:[%s169 + $0x1d88] sm:$0xff]
                %802 = vst [vmem:[%s170 + $0x9d8] sm:$0xff] %v801
                %v803 = vld [vmem:[%s169 + $0x1d90] sm:$0xff]
                %804 = vst [vmem:[%s170 + $0x9e0] sm:$0xff] %v803
                %v805 = vld [vmem:[%s169 + $0x1d98] sm:$0xff]
                %806 = vst [vmem:[%s170 + $0x9e8] sm:$0xff] %v805
                %v807 = vld [vmem:[%s169 + $0x1da0] sm:$0xff]
                %808 = vst [vmem:[%s170 + $0x9f0] sm:$0xff] %v807
                %v809 = vld [vmem:[%s169 + $0x1da8] sm:$0xff]
                %810 = vst [vmem:[%s170 + $0x9f8] sm:$0xff] %v809
                %v811 = vld [vmem:[%s169 + $0x1db0] sm:$0xff]
                %812 = vst [vmem:[%s170 + $0xa00] sm:$0xff] %v811
                %v813 = vld [vmem:[%s169 + $0x1db8] sm:$0xff]
                %814 = vst [vmem:[%s170 + $0xa08] sm:$0xff] %v813
                %v815 = vld [vmem:[%s169 + $0x1dc0] sm:$0xff]
                %816 = vst [vmem:[%s170 + $0xa10] sm:$0xff] %v815
                %v817 = vld [vmem:[%s169 + $0x1dc8] sm:$0xff]
                %818 = vst [vmem:[%s170 + $0xa18] sm:$0xff] %v817
                %v819 = vld [vmem:[%s169 + $0x1e60] sm:$0xff]
                %820 = vst [vmem:[%s170 + $0xa20] sm:$0xff] %v819
                %v821 = vld [vmem:[%s169 + $0x1e68] sm:$0xff]
                %822 = vst [vmem:[%s170 + $0xa28] sm:$0xff] %v821
                %v823 = vld [vmem:[%s169 + $0x1e70] sm:$0xff]
                %824 = vst [vmem:[%s170 + $0xa30] sm:$0xff] %v823
                %v825 = vld [vmem:[%s169 + $0x1e78] sm:$0xff]
                %826 = vst [vmem:[%s170 + $0xa38] sm:$0xff] %v825
                %v827 = vld [vmem:[%s169 + $0x1e80] sm:$0xff]
                %828 = vst [vmem:[%s170 + $0xa40] sm:$0xff] %v827
                %v829 = vld [vmem:[%s169 + $0x1e88] sm:$0xff]
                %830 = vst [vmem:[%s170 + $0xa48] sm:$0xff] %v829
                %v831 = vld [vmem:[%s169 + $0x1e90] sm:$0xff]
                %832 = vst [vmem:[%s170 + $0xa50] sm:$0xff] %v831
                %v833 = vld [vmem:[%s169 + $0x1e98] sm:$0xff]
                %834 = vst [vmem:[%s170 + $0xa58] sm:$0xff] %v833
                %v835 = vld [vmem:[%s169 + $0x1ea0] sm:$0xff]
                %836 = vst [vmem:[%s170 + $0xa60] sm:$0xff] %v835
                %v837 = vld [vmem:[%s169 + $0x1f38] sm:$0xff]
                %838 = vst [vmem:[%s170 + $0xa68] sm:$0xff] %v837
                %v839 = vld [vmem:[%s169 + $0x1f40] sm:$0xff]
                %840 = vst [vmem:[%s170 + $0xa70] sm:$0xff] %v839
                %v841 = vld [vmem:[%s169 + $0x1f48] sm:$0xff]
                %842 = vst [vmem:[%s170 + $0xa78] sm:$0xff] %v841
                %v843 = vld [vmem:[%s169 + $0x1f50] sm:$0xff]
                %844 = vst [vmem:[%s170 + $0xa80] sm:$0xff] %v843
                %v845 = vld [vmem:[%s169 + $0x1f58] sm:$0xff]
                %846 = vst [vmem:[%s170 + $0xa88] sm:$0xff] %v845
                %v847 = vld [vmem:[%s169 + $0x1f60] sm:$0xff]
                %848 = vst [vmem:[%s170 + $0xa90] sm:$0xff] %v847
                %v849 = vld [vmem:[%s169 + $0x1f68] sm:$0xff]
                %850 = vst [vmem:[%s170 + $0xa98] sm:$0xff] %v849
                %v851 = vld [vmem:[%s169 + $0x1f70] sm:$0xff]
                %852 = vst [vmem:[%s170 + $0xaa0] sm:$0xff] %v851
                %v853 = vld [vmem:[%s169 + $0x1f78] sm:$0xff]
                %854 = vst [vmem:[%s170 + $0xaa8] sm:$0xff] %v853
                %v855 = vld [vmem:[%s169 + $0x2010] sm:$0xff]
                %856 = vst [vmem:[%s170 + $0xab0] sm:$0xff] %v855
                %v857 = vld [vmem:[%s169 + $0x2018] sm:$0xff]
                %858 = vst [vmem:[%s170 + $0xab8] sm:$0xff] %v857
                %v859 = vld [vmem:[%s169 + $0x2020] sm:$0xff]
                %860 = vst [vmem:[%s170 + $0xac0] sm:$0xff] %v859
                %v861 = vld [vmem:[%s169 + $0x2028] sm:$0xff]
                %862 = vst [vmem:[%s170 + $0xac8] sm:$0xff] %v861
                %v863 = vld [vmem:[%s169 + $0x2030] sm:$0xff]
                %864 = vst [vmem:[%s170 + $0xad0] sm:$0xff] %v863
                %v865 = vld [vmem:[%s169 + $0x2038] sm:$0xff]
                %866 = vst [vmem:[%s170 + $0xad8] sm:$0xff] %v865
                %v867 = vld [vmem:[%s169 + $0x2040] sm:$0xff]
                %868 = vst [vmem:[%s170 + $0xae0] sm:$0xff] %v867
                %v869 = vld [vmem:[%s169 + $0x2048] sm:$0xff]
                %870 = vst [vmem:[%s170 + $0xae8] sm:$0xff] %v869
                %v871 = vld [vmem:[%s169 + $0x2050] sm:$0xff]
                %872 = vst [vmem:[%s170 + $0xaf0] sm:$0xff] %v871
                %v873 = vld [vmem:[%s169 + $0x20e8] sm:$0xff]
                %874 = vst [vmem:[%s170 + $0xaf8] sm:$0xff] %v873
                %v875 = vld [vmem:[%s169 + $0x20f0] sm:$0xff]
                %876 = vst [vmem:[%s170 + $0xb00] sm:$0xff] %v875
                %v877 = vld [vmem:[%s169 + $0x20f8] sm:$0xff]
                %878 = vst [vmem:[%s170 + $0xb08] sm:$0xff] %v877
                %v879 = vld [vmem:[%s169 + $0x2100] sm:$0xff]
                %880 = vst [vmem:[%s170 + $0xb10] sm:$0xff] %v879
                %v881 = vld [vmem:[%s169 + $0x2108] sm:$0xff]
                %882 = vst [vmem:[%s170 + $0xb18] sm:$0xff] %v881
                %v883 = vld [vmem:[%s169 + $0x2110] sm:$0xff]
                %884 = vst [vmem:[%s170 + $0xb20] sm:$0xff] %v883
                %v885 = vld [vmem:[%s169 + $0x2118] sm:$0xff]
                %886 = vst [vmem:[%s170 + $0xb28] sm:$0xff] %v885
                %v887 = vld [vmem:[%s169 + $0x2120] sm:$0xff]
                %888 = vst [vmem:[%s170 + $0xb30] sm:$0xff] %v887
                %v889 = vld [vmem:[%s169 + $0x2128] sm:$0xff]
                %890 = vst [vmem:[%s170 + $0xb38] sm:$0xff] %v889
                %v891 = vld [vmem:[%s169 + $0x21c0] sm:$0xff]
                %892 = vst [vmem:[%s170 + $0xb40] sm:$0xff] %v891
                %v893 = vld [vmem:[%s169 + $0x21c8] sm:$0xff]
                %894 = vst [vmem:[%s170 + $0xb48] sm:$0xff] %v893
                %v895 = vld [vmem:[%s169 + $0x21d0] sm:$0xff]
                %896 = vst [vmem:[%s170 + $0xb50] sm:$0xff] %v895
                %v897 = vld [vmem:[%s169 + $0x21d8] sm:$0xff]
                %898 = vst [vmem:[%s170 + $0xb58] sm:$0xff] %v897
                %v899 = vld [vmem:[%s169 + $0x21e0] sm:$0xff]
                %900 = vst [vmem:[%s170 + $0xb60] sm:$0xff] %v899
                %v901 = vld [vmem:[%s169 + $0x21e8] sm:$0xff]
                %902 = vst [vmem:[%s170 + $0xb68] sm:$0xff] %v901
                %v903 = vld [vmem:[%s169 + $0x21f0] sm:$0xff]
                %904 = vst [vmem:[%s170 + $0xb70] sm:$0xff] %v903
                %v905 = vld [vmem:[%s169 + $0x21f8] sm:$0xff]
                %906 = vst [vmem:[%s170 + $0xb78] sm:$0xff] %v905
                %v907 = vld [vmem:[%s169 + $0x2200] sm:$0xff]
                %908 = vst [vmem:[%s170 + $0xb80] sm:$0xff] %v907
                %v909 = vld [vmem:[%s169 + $0x2298] sm:$0xff]
                %910 = vst [vmem:[%s170 + $0xb88] sm:$0xff] %v909
                %v911 = vld [vmem:[%s169 + $0x22a0] sm:$0xff]
                %912 = vst [vmem:[%s170 + $0xb90] sm:$0xff] %v911
                %v913 = vld [vmem:[%s169 + $0x22a8] sm:$0xff]
                %914 = vst [vmem:[%s170 + $0xb98] sm:$0xff] %v913
                %v915 = vld [vmem:[%s169 + $0x22b0] sm:$0xff]
                %916 = vst [vmem:[%s170 + $0xba0] sm:$0xff] %v915
                %v917 = vld [vmem:[%s169 + $0x22b8] sm:$0xff]
                %918 = vst [vmem:[%s170 + $0xba8] sm:$0xff] %v917
                %v919 = vld [vmem:[%s169 + $0x22c0] sm:$0xff]
                %920 = vst [vmem:[%s170 + $0xbb0] sm:$0xff] %v919
                %v921 = vld [vmem:[%s169 + $0x22c8] sm:$0xff]
                %922 = vst [vmem:[%s170 + $0xbb8] sm:$0xff] %v921
                %v923 = vld [vmem:[%s169 + $0x22d0] sm:$0xff]
                %924 = vst [vmem:[%s170 + $0xbc0] sm:$0xff] %v923
                %v925 = vld [vmem:[%s169 + $0x22d8] sm:$0xff]
                %926 = vst [vmem:[%s170 + $0xbc8] sm:$0xff] %v925
                %v927 = vld [vmem:[%s169 + $0x2370] sm:$0xff]
                %928 = vst [vmem:[%s170 + $0xbd0] sm:$0xff] %v927
                %v929 = vld [vmem:[%s169 + $0x2378] sm:$0xff]
                %930 = vst [vmem:[%s170 + $0xbd8] sm:$0xff] %v929
                %v931 = vld [vmem:[%s169 + $0x2380] sm:$0xff]
                %932 = vst [vmem:[%s170 + $0xbe0] sm:$0xff] %v931
                %v933 = vld [vmem:[%s169 + $0x2388] sm:$0xff]
                %934 = vst [vmem:[%s170 + $0xbe8] sm:$0xff] %v933
                %v935 = vld [vmem:[%s169 + $0x2390] sm:$0xff]
                %936 = vst [vmem:[%s170 + $0xbf0] sm:$0xff] %v935
                %v937 = vld [vmem:[%s169 + $0x2398] sm:$0xff]
                %938 = vst [vmem:[%s170 + $0xbf8] sm:$0xff] %v937
                %v939 = vld [vmem:[%s169 + $0x23a0] sm:$0xff]
                %940 = vst [vmem:[%s170 + $0xc00] sm:$0xff] %v939
                %v941 = vld [vmem:[%s169 + $0x23a8] sm:$0xff]
                %942 = vst [vmem:[%s170 + $0xc08] sm:$0xff] %v941
                %v943 = vld [vmem:[%s169 + $0x23b0] sm:$0xff]
                %944 = vst [vmem:[%s170 + $0xc10] sm:$0xff] %v943
                %v945 = vld [vmem:[%s169 + $0x2448] sm:$0xff]
                %946 = vst [vmem:[%s170 + $0xc18] sm:$0xff] %v945
                %v947 = vld [vmem:[%s169 + $0x2450] sm:$0xff]
                %948 = vst [vmem:[%s170 + $0xc20] sm:$0xff] %v947
                %v949 = vld [vmem:[%s169 + $0x2458] sm:$0xff]
                %950 = vst [vmem:[%s170 + $0xc28] sm:$0xff] %v949
                %v951 = vld [vmem:[%s169 + $0x2460] sm:$0xff]
                %952 = vst [vmem:[%s170 + $0xc30] sm:$0xff] %v951
                %v953 = vld [vmem:[%s169 + $0x2468] sm:$0xff]
                %954 = vst [vmem:[%s170 + $0xc38] sm:$0xff] %v953
                %v955 = vld [vmem:[%s169 + $0x2470] sm:$0xff]
                %956 = vst [vmem:[%s170 + $0xc40] sm:$0xff] %v955
                %v957 = vld [vmem:[%s169 + $0x2478] sm:$0xff]
                %958 = vst [vmem:[%s170 + $0xc48] sm:$0xff] %v957
                %v959 = vld [vmem:[%s169 + $0x2480] sm:$0xff]
                %960 = vst [vmem:[%s170 + $0xc50] sm:$0xff] %v959
                %v961 = vld [vmem:[%s169 + $0x2488] sm:$0xff]
                %962 = vst [vmem:[%s170 + $0xc58] sm:$0xff] %v961
                %v963 = vld [vmem:[%s169 + $0x2520] sm:$0xff]
                %964 = vst [vmem:[%s170 + $0xc60] sm:$0xff] %v963
                %v965 = vld [vmem:[%s169 + $0x2528] sm:$0xff]
                %966 = vst [vmem:[%s170 + $0xc68] sm:$0xff] %v965
                %v967 = vld [vmem:[%s169 + $0x2530] sm:$0xff]
                %968 = vst [vmem:[%s170 + $0xc70] sm:$0xff] %v967
                %v969 = vld [vmem:[%s169 + $0x2538] sm:$0xff]
                %970 = vst [vmem:[%s170 + $0xc78] sm:$0xff] %v969
                %v971 = vld [vmem:[%s169 + $0x2540] sm:$0xff]
                %972 = vst [vmem:[%s170 + $0xc80] sm:$0xff] %v971
                %v973 = vld [vmem:[%s169 + $0x2548] sm:$0xff]
                %974 = vst [vmem:[%s170 + $0xc88] sm:$0xff] %v973
                %v975 = vld [vmem:[%s169 + $0x2550] sm:$0xff]
                %976 = vst [vmem:[%s170 + $0xc90] sm:$0xff] %v975
                %v977 = vld [vmem:[%s169 + $0x2558] sm:$0xff]
                %978 = vst [vmem:[%s170 + $0xc98] sm:$0xff] %v977
                %v979 = vld [vmem:[%s169 + $0x2560] sm:$0xff]
                %980 = vst [vmem:[%s170 + $0xca0] sm:$0xff] %v979
                %v981 = vld [vmem:[%s169 + $0x25f8] sm:$0xff]
                %982 = vst [vmem:[%s170 + $0xca8] sm:$0xff] %v981
                %v983 = vld [vmem:[%s169 + $0x2600] sm:$0xff]
                %984 = vst [vmem:[%s170 + $0xcb0] sm:$0xff] %v983
                %v985 = vld [vmem:[%s169 + $0x2608] sm:$0xff]
                %986 = vst [vmem:[%s170 + $0xcb8] sm:$0xff] %v985
                %v987 = vld [vmem:[%s169 + $0x2610] sm:$0xff]
                %988 = vst [vmem:[%s170 + $0xcc0] sm:$0xff] %v987
                %v989 = vld [vmem:[%s169 + $0x2618] sm:$0xff]
                %990 = vst [vmem:[%s170 + $0xcc8] sm:$0xff] %v989
                %v991 = vld [vmem:[%s169 + $0x2620] sm:$0xff]
                %992 = vst [vmem:[%s170 + $0xcd0] sm:$0xff] %v991
                %v993 = vld [vmem:[%s169 + $0x2628] sm:$0xff]
                %994 = vst [vmem:[%s170 + $0xcd8] sm:$0xff] %v993
                %v995 = vld [vmem:[%s169 + $0x2630] sm:$0xff]
                %996 = vst [vmem:[%s170 + $0xce0] sm:$0xff] %v995
                %v997 = vld [vmem:[%s169 + $0x2638] sm:$0xff]
                %998 = vst [vmem:[%s170 + $0xce8] sm:$0xff] %v997
                %v999 = vld [vmem:[%s169 + $0x26d0] sm:$0xff]
                %1000 = vst [vmem:[%s170 + $0xcf0] sm:$0xff] %v999
                %v1001 = vld [vmem:[%s169 + $0x26d8] sm:$0xff]
                %1002 = vst [vmem:[%s170 + $0xcf8] sm:$0xff] %v1001
                %v1003 = vld [vmem:[%s169 + $0x26e0] sm:$0xff]
                %1004 = vst [vmem:[%s170 + $0xd00] sm:$0xff] %v1003
                %v1005 = vld [vmem:[%s169 + $0x26e8] sm:$0xff]
                %1006 = vst [vmem:[%s170 + $0xd08] sm:$0xff] %v1005
                %v1007 = vld [vmem:[%s169 + $0x26f0] sm:$0xff]
                %1008 = vst [vmem:[%s170 + $0xd10] sm:$0xff] %v1007
                %v1009 = vld [vmem:[%s169 + $0x26f8] sm:$0xff]
                %1010 = vst [vmem:[%s170 + $0xd18] sm:$0xff] %v1009
                %v1011 = vld [vmem:[%s169 + $0x2700] sm:$0xff]
                %1012 = vst [vmem:[%s170 + $0xd20] sm:$0xff] %v1011
                %v1013 = vld [vmem:[%s169 + $0x2708] sm:$0xff]
                %1014 = vst [vmem:[%s170 + $0xd28] sm:$0xff] %v1013
                %v1015 = vld [vmem:[%s169 + $0x2710] sm:$0xff]
                %1016 = vst [vmem:[%s170 + $0xd30] sm:$0xff] %v1015
                %v1017 = vld [vmem:[%s169 + $0x27a8] sm:$0xff]
                %1018 = vst [vmem:[%s170 + $0xd38] sm:$0xff] %v1017
                %v1019 = vld [vmem:[%s169 + $0x27b0] sm:$0xff]
                %1020 = vst [vmem:[%s170 + $0xd40] sm:$0xff] %v1019
                %v1021 = vld [vmem:[%s169 + $0x27b8] sm:$0xff]
                %1022 = vst [vmem:[%s170 + $0xd48] sm:$0xff] %v1021
                %v1023 = vld [vmem:[%s169 + $0x27c0] sm:$0xff]
                %1024 = vst [vmem:[%s170 + $0xd50] sm:$0xff] %v1023
                %v1025 = vld [vmem:[%s169 + $0x27c8] sm:$0xff]
                %1026 = vst [vmem:[%s170 + $0xd58] sm:$0xff] %v1025
                %v1027 = vld [vmem:[%s169 + $0x27d0] sm:$0xff]
                %1028 = vst [vmem:[%s170 + $0xd60] sm:$0xff] %v1027
                %v1029 = vld [vmem:[%s169 + $0x27d8] sm:$0xff]
                %1030 = vst [vmem:[%s170 + $0xd68] sm:$0xff] %v1029
                %v1031 = vld [vmem:[%s169 + $0x27e0] sm:$0xff]
                %1032 = vst [vmem:[%s170 + $0xd70] sm:$0xff] %v1031
                %v1033 = vld [vmem:[%s169 + $0x27e8] sm:$0xff]
                %1034 = vst [vmem:[%s170 + $0xd78] sm:$0xff] %v1033
                %v1035 = vld [vmem:[%s169 + $0x2880] sm:$0xff]
                %1036 = vst [vmem:[%s170 + $0xd80] sm:$0xff] %v1035
                %v1037 = vld [vmem:[%s169 + $0x2888] sm:$0xff]
                %1038 = vst [vmem:[%s170 + $0xd88] sm:$0xff] %v1037
                %v1039 = vld [vmem:[%s169 + $0x2890] sm:$0xff]
                %1040 = vst [vmem:[%s170 + $0xd90] sm:$0xff] %v1039
                %v1041 = vld [vmem:[%s169 + $0x2898] sm:$0xff]
                %1042 = vst [vmem:[%s170 + $0xd98] sm:$0xff] %v1041
                %v1043 = vld [vmem:[%s169 + $0x28a0] sm:$0xff]
                %1044 = vst [vmem:[%s170 + $0xda0] sm:$0xff] %v1043
                %v1045 = vld [vmem:[%s169 + $0x28a8] sm:$0xff]
                %1046 = vst [vmem:[%s170 + $0xda8] sm:$0xff] %v1045
                %v1047 = vld [vmem:[%s169 + $0x28b0] sm:$0xff]
                %1048 = vst [vmem:[%s170 + $0xdb0] sm:$0xff] %v1047
                %v1049 = vld [vmem:[%s169 + $0x28b8] sm:$0xff]
                %1050 = vst [vmem:[%s170 + $0xdb8] sm:$0xff] %v1049
                %v1051 = vld [vmem:[%s169 + $0x28c0] sm:$0xff]
                %1052 = vst [vmem:[%s170 + $0xdc0] sm:$0xff] %v1051
                %v1053 = vld [vmem:[%s169 + $0x2958] sm:$0xff]
                %1054 = vst [vmem:[%s170 + $0xdc8] sm:$0xff] %v1053
                %v1055 = vld [vmem:[%s169 + $0x2960] sm:$0xff]
                %1056 = vst [vmem:[%s170 + $0xdd0] sm:$0xff] %v1055
                %v1057 = vld [vmem:[%s169 + $0x2968] sm:$0xff]
                %1058 = vst [vmem:[%s170 + $0xdd8] sm:$0xff] %v1057
                %v1059 = vld [vmem:[%s169 + $0x2970] sm:$0xff]
                %1060 = vst [vmem:[%s170 + $0xde0] sm:$0xff] %v1059
                %v1061 = vld [vmem:[%s169 + $0x2978] sm:$0xff]
                %1062 = vst [vmem:[%s170 + $0xde8] sm:$0xff] %v1061
                %v1063 = vld [vmem:[%s169 + $0x2980] sm:$0xff]
                %1064 = vst [vmem:[%s170 + $0xdf0] sm:$0xff] %v1063
                %v1065 = vld [vmem:[%s169 + $0x2988] sm:$0xff]
                %1066 = vst [vmem:[%s170 + $0xdf8] sm:$0xff] %v1065
                %v1067 = vld [vmem:[%s169 + $0x2990] sm:$0xff]
                %1068 = vst [vmem:[%s170 + $0xe00] sm:$0xff] %v1067
                %v1069 = vld [vmem:[%s169 + $0x2998] sm:$0xff]
                %1070 = vst [vmem:[%s170 + $0xe08] sm:$0xff] %v1069
                %v1071 = vld [vmem:[%s169 + $0x2a30] sm:$0xff]
                %1072 = vst [vmem:[%s170 + $0xe10] sm:$0xff] %v1071
                %v1073 = vld [vmem:[%s169 + $0x2a38] sm:$0xff]
                %1074 = vst [vmem:[%s170 + $0xe18] sm:$0xff] %v1073
                %v1075 = vld [vmem:[%s169 + $0x2a40] sm:$0xff]
                %1076 = vst [vmem:[%s170 + $0xe20] sm:$0xff] %v1075
                %v1077 = vld [vmem:[%s169 + $0x2a48] sm:$0xff]
                %1078 = vst [vmem:[%s170 + $0xe28] sm:$0xff] %v1077
                %v1079 = vld [vmem:[%s169 + $0x2a50] sm:$0xff]
                %1080 = vst [vmem:[%s170 + $0xe30] sm:$0xff] %v1079
                %v1081 = vld [vmem:[%s169 + $0x2a58] sm:$0xff]
                %1082 = vst [vmem:[%s170 + $0xe38] sm:$0xff] %v1081
                %v1083 = vld [vmem:[%s169 + $0x2a60] sm:$0xff]
                %1084 = vst [vmem:[%s170 + $0xe40] sm:$0xff] %v1083
                %v1085 = vld [vmem:[%s169 + $0x2a68] sm:$0xff]
                %1086 = vst [vmem:[%s170 + $0xe48] sm:$0xff] %v1085
                %v1087 = vld [vmem:[%s169 + $0x2a70] sm:$0xff]
                %1088 = vst [vmem:[%s170 + $0xe50] sm:$0xff] %v1087
                %v1089 = vld [vmem:[%s169 + $0x2b08] sm:$0xff]
                %1090 = vst [vmem:[%s170 + $0xe58] sm:$0xff] %v1089
                %v1091 = vld [vmem:[%s169 + $0x2b10] sm:$0xff]
                %1092 = vst [vmem:[%s170 + $0xe60] sm:$0xff] %v1091
                %v1093 = vld [vmem:[%s169 + $0x2b18] sm:$0xff]
                %1094 = vst [vmem:[%s170 + $0xe68] sm:$0xff] %v1093
                %v1095 = vld [vmem:[%s169 + $0x2b20] sm:$0xff]
                %1096 = vst [vmem:[%s170 + $0xe70] sm:$0xff] %v1095
                %v1097 = vld [vmem:[%s169 + $0x2b28] sm:$0xff]
                %1098 = vst [vmem:[%s170 + $0xe78] sm:$0xff] %v1097
                %v1099 = vld [vmem:[%s169 + $0x2b30] sm:$0xff]
                %1100 = vst [vmem:[%s170 + $0xe80] sm:$0xff] %v1099
                %v1101 = vld [vmem:[%s169 + $0x2b38] sm:$0xff]
                %1102 = vst [vmem:[%s170 + $0xe88] sm:$0xff] %v1101
                %v1103 = vld [vmem:[%s169 + $0x2b40] sm:$0xff]
                %1104 = vst [vmem:[%s170 + $0xe90] sm:$0xff] %v1103
                %v1105 = vld [vmem:[%s169 + $0x2b48] sm:$0xff]
                %1106 = vst [vmem:[%s170 + $0xe98] sm:$0xff] %v1105
                %v1107 = vld [vmem:[%s169 + $0x2be0] sm:$0xff]
                %1108 = vst [vmem:[%s170 + $0xea0] sm:$0xff] %v1107
                %v1109 = vld [vmem:[%s169 + $0x2be8] sm:$0xff]
                %1110 = vst [vmem:[%s170 + $0xea8] sm:$0xff] %v1109
                %v1111 = vld [vmem:[%s169 + $0x2bf0] sm:$0xff]
                %1112 = vst [vmem:[%s170 + $0xeb0] sm:$0xff] %v1111
                %v1113 = vld [vmem:[%s169 + $0x2bf8] sm:$0xff]
                %1114 = vst [vmem:[%s170 + $0xeb8] sm:$0xff] %v1113
                %v1115 = vld [vmem:[%s169 + $0x2c00] sm:$0xff]
                %1116 = vst [vmem:[%s170 + $0xec0] sm:$0xff] %v1115
                %v1117 = vld [vmem:[%s169 + $0x2c08] sm:$0xff]
                %1118 = vst [vmem:[%s170 + $0xec8] sm:$0xff] %v1117
                %v1119 = vld [vmem:[%s169 + $0x2c10] sm:$0xff]
                %1120 = vst [vmem:[%s170 + $0xed0] sm:$0xff] %v1119
                %v1121 = vld [vmem:[%s169 + $0x2c18] sm:$0xff]
                %1122 = vst [vmem:[%s170 + $0xed8] sm:$0xff] %v1121
                %v1123 = vld [vmem:[%s169 + $0x2c20] sm:$0xff]
                %1124 = vst [vmem:[%s170 + $0xee0] sm:$0xff] %v1123
                %v1125 = vld [vmem:[%s169 + $0x2cb8] sm:$0xff]
                %1126 = vst [vmem:[%s170 + $0xee8] sm:$0xff] %v1125
                %v1127 = vld [vmem:[%s169 + $0x2cc0] sm:$0xff]
                %1128 = vst [vmem:[%s170 + $0xef0] sm:$0xff] %v1127
                %v1129 = vld [vmem:[%s169 + $0x2cc8] sm:$0xff]
                %1130 = vst [vmem:[%s170 + $0xef8] sm:$0xff] %v1129
                %v1131 = vld [vmem:[%s169 + $0x2cd0] sm:$0xff]
                %1132 = vst [vmem:[%s170 + $0xf00] sm:$0xff] %v1131
                %v1133 = vld [vmem:[%s169 + $0x2cd8] sm:$0xff]
                %1134 = vst [vmem:[%s170 + $0xf08] sm:$0xff] %v1133
                %v1135 = vld [vmem:[%s169 + $0x2ce0] sm:$0xff]
                %1136 = vst [vmem:[%s170 + $0xf10] sm:$0xff] %v1135
                %v1137 = vld [vmem:[%s169 + $0x2ce8] sm:$0xff]
                %1138 = vst [vmem:[%s170 + $0xf18] sm:$0xff] %v1137
                %v1139 = vld [vmem:[%s169 + $0x2cf0] sm:$0xff]
                %1140 = vst [vmem:[%s170 + $0xf20] sm:$0xff] %v1139
                %v1141 = vld [vmem:[%s169 + $0x2cf8] sm:$0xff]
                %1142 = vst [vmem:[%s170 + $0xf28] sm:$0xff] %v1141
              $region37: #{model_forward.2} parent=31 // loop_footer
                %s168 = sadd.s32 1, %s164
              $region38: #{model_forward.2} parent=31 // loop_footer_branch
                %163 = sbr.rel target = $region34
              $region39: #{model_forward.2} parent=31 // loop_exit
                _
            $region32: #{model_forward.2} parent=27 // pred_fallthru
              _
            // Predicated region
            $region40: #{model_forward.2} parent=27 // pred_check
              _
            $region41: #{model_forward.2} parent=27 // pred_check_branch
              %1144 = sbr.rel target = $region43
            $region42: #{model_forward.2} parent=27 // pred_region
              _
            $region43: #{model_forward.2} parent=27 // pred_fallthru
              _
          $region28: #{model_forward.2} parent=23 // pred_fallthru
            _
          %1145 = vnop
        $region24: #{model_forward.2} parent=19 // pred_fallthru
          _
      $region20: #{model_forward.2} parent=5 // pred_fallthru
        _
      %p1146 = scmp.le.s32.totalorder 1, %s10
      %p1147 = scmp.lt.s32.totalorder %s10, 7
      %p1148 = pnand %p1146, %p1147
      %p1149 = pneg %p1148
      // Predicated region
      $region44: #{model_forward.2} parent=5 // pred_check
        _
      $region45: #{model_forward.2} parent=5 // pred_check_branch
        %1151 = sbr.rel (%p1148) target = $region47
      $region46: #{model_forward.2} parent=5 // pred_region
        %s1152 = ssub.s32 %s10, 1
        %s1153 = sand.u32 %s58, 1
        %s1154 = sand.u32 %s58, 1
        %s1155 = smul.addr %s1154, 3888
        %s1156 = scalar_lea.vmem [#allocation3], %s1155
        // Predicated region
        $region48: #{model_forward.2} parent=46 // pred_check
          %p1157 = pneg %p71
        $region49: #{model_forward.2} parent=46 // pred_check_branch
          %1159 = sbr.rel (%p1157) target = $region51
        $region50: #{model_forward.2} parent=46 // pred_region
          _
        $region51: #{model_forward.2} parent=46 // pred_fallthru
          _
        %p1160 = pneg %p43
        %p1161 = pneg %p40
        %s1162 = sand.u32 %s58, 1
        %s1163 = sand.u32 %s58, 1
        %s1164 = smul.addr %s1163, 3888
        %s1165 = scalar_lea.vmem [#allocation3], %s1164
        %p1166 = pneg %p71
        %p1167 = pneg %p68
        %p1168 = pneg %p99
        %p1169 = pneg %p96
        %s1170 = sand.u32 %s86, 1
        %s1171 = sand.u32 %s86, 1
        %s1172 = smul.addr %s1171, 288
        %s1173 = scalar_lea.vmem [#allocation4], %s1172
        %p1174 = pneg %p125
        %p1175 = pneg %p122
        %p1176 = scmp.lt.s32.totalorder %s19, 1
        %s1177 = scalar_select %p1176, %s19, 1
        %s1178 = smul.addr %s1177, 4
        %s1179 = smul.addr %s1178, 8
        %s1180 = scalar_lea.vmem %s3, %s1179
        %s1181 = smul.u32 9, %s20
        %s1182 = smul.u32 9, %s20
        %p1183 = scmp.lt.s32.totalorder %s19, 1
        %s1184 = scalar_select %p1183, %s19, 1
        %s1185 = smul.addr %s1184, 4
        %s1186 = smul.addr %s1185, 8
        %s1187 = scalar_lea.vmem %s3, %s1186
        %v1188 = vld [vmem:[%s0] sm:$0xff]
        %v1189 = vld [vmem:[%s0 + $0x8] sm:$0xff]
        %v1190 = vld [vmem:[%s0 + $0x10] sm:$0xff]
        %v1191 = vld [vmem:[%s0 + $0x18] sm:$0xff]
        %v1192 = vld [vmem:[%s0 + $0x20] sm:$0xff]
        %v1193 = vld [vmem:[%s0 + $0x28] sm:$0xff]
        %v1194 = vld [vmem:[%s0 + $0x30] sm:$0xff]
        %v1195 = vld [vmem:[%s0 + $0x38] sm:$0xff]
        %v1196 = vld [vmem:[%s0 + $0x40] sm:$0xff]
        %v1197 = vld [vmem:[%s0 + $0x48] sm:$0xff]
        %v1198 = vld [vmem:[%s0 + $0x50] sm:$0xff]
        %v1199 = vld [vmem:[%s0 + $0x58] sm:$0xff]
        %v1200 = vld [vmem:[%s0 + $0x60] sm:$0xff]
        %v1201 = vld [vmem:[%s0 + $0x68] sm:$0xff]
        %v1202 = vld [vmem:[%s0 + $0x70] sm:$0xff]
        %v1203 = vld [vmem:[%s0 + $0x78] sm:$0xff]
        %v1204 = vld [vmem:[%s1156] sm:$0xff]
        %v1205 = vld [vmem:[%s1156 + $0x8] sm:$0xff]
        %v1206 = vld [vmem:[%s1156 + $0x10] sm:$0xff]
        %v1207 = vld [vmem:[%s1156 + $0x18] sm:$0xff]
        %v1208 = vld [vmem:[%s1156 + $0x20] sm:$0xff]
        %v1209 = vld [vmem:[%s1156 + $0x28] sm:$0xff]
        %v1210 = vld [vmem:[%s1156 + $0x30] sm:$0xff]
        %v1211 = vld [vmem:[%s1156 + $0x38] sm:$0xff]
        %v1212 = vld [vmem:[%s1156 + $0x40] sm:$0xff]
        %v1213 = vld [vmem:[%s1156 + $0x48] sm:$0xff]
        %v1214 = vld [vmem:[%s1156 + $0x50] sm:$0xff]
        %v1215 = vld [vmem:[%s1156 + $0x58] sm:$0xff]
        %v1216 = vld [vmem:[%s1156 + $0x60] sm:$0xff]
        %v1217 = vld [vmem:[%s1156 + $0x68] sm:$0xff]
        %v1218 = vld [vmem:[%s1156 + $0x70] sm:$0xff]
        %v1219 = vld [vmem:[%s1156 + $0x78] sm:$0xff]
        %v1220 = vld [vmem:[%s1156 + $0x80] sm:$0xff]
        %v1221 = vld [vmem:[%s1156 + $0x88] sm:$0xff]
        %v1222 = vld [vmem:[%s1156 + $0x90] sm:$0xff]
        %v1223 = vld [vmem:[%s1156 + $0x98] sm:$0xff]
        %v1224 = vld [vmem:[%s1156 + $0xa0] sm:$0xff]
        %v1225 = vld [vmem:[%s1156 + $0xa8] sm:$0xff]
        %v1226 = vld [vmem:[%s1156 + $0xb0] sm:$0xff]
        %v1227 = vld [vmem:[%s1156 + $0xb8] sm:$0xff]
        %v1228 = vld [vmem:[%s1156 + $0xc0] sm:$0xff]
        %v1229 = vld [vmem:[%s1156 + $0xc8] sm:$0xff]
        %v1230 = vld [vmem:[%s1156 + $0xd0] sm:$0xff]
        %v1231 = vld [vmem:[%s1156 + $0xd8] sm:$0xff]
        %v1232 = vld [vmem:[%s1156 + $0xe0] sm:$0xff]
        %v1233 = vld [vmem:[%s1156 + $0xe8] sm:$0xff]
        %v1234 = vld [vmem:[%s1156 + $0xf0] sm:$0xff]
        %v1235 = vld [vmem:[%s1156 + $0xf8] sm:$0xff]
        %v1236 = vld [vmem:[%s1156 + $0x100] sm:$0xff]
        %v1237 = vld [vmem:[%s1156 + $0x108] sm:$0xff]
        %v1238 = vld [vmem:[%s1156 + $0x110] sm:$0xff]
        %v1239 = vld [vmem:[%s1156 + $0x118] sm:$0xff]
        %v1240 = vld [vmem:[%s1156 + $0x120] sm:$0xff]
        %v1241 = vld [vmem:[%s1156 + $0x128] sm:$0xff]
        %v1242 = vld [vmem:[%s1156 + $0x130] sm:$0xff]
        %v1243 = vld [vmem:[%s1156 + $0x138] sm:$0xff]
        %v1244 = vld [vmem:[%s1156 + $0x140] sm:$0xff]
        %v1245 = vld [vmem:[%s1156 + $0x148] sm:$0xff]
        %v1246 = vld [vmem:[%s1156 + $0x150] sm:$0xff]
        %v1247 = vld [vmem:[%s1156 + $0x158] sm:$0xff]
        %v1248 = vld [vmem:[%s1156 + $0x160] sm:$0xff]
        %v1249 = vld [vmem:[%s1156 + $0x168] sm:$0xff]
        %v1250 = vld [vmem:[%s1156 + $0x170] sm:$0xff]
        %v1251 = vld [vmem:[%s1156 + $0x178] sm:$0xff]
        %v1252 = vld [vmem:[%s1156 + $0x180] sm:$0xff]
        %v1253 = vld [vmem:[%s1156 + $0x188] sm:$0xff]
        %v1254 = vld [vmem:[%s1156 + $0x190] sm:$0xff]
        %v1255 = vld [vmem:[%s1156 + $0x198] sm:$0xff]
        %v1256 = vld [vmem:[%s1156 + $0x1a0] sm:$0xff]
        %v1257 = vld [vmem:[%s1156 + $0x1a8] sm:$0xff]
        %v1258 = vld [vmem:[%s1156 + $0x1b0] sm:$0xff]
        %v1259 = vld [vmem:[%s1156 + $0x1b8] sm:$0xff]
        %v1260 = vld [vmem:[%s1156 + $0x1c0] sm:$0xff]
        %v1261 = vld [vmem:[%s1156 + $0x1c8] sm:$0xff]
        %v1262 = vld [vmem:[%s1156 + $0x1d0] sm:$0xff]
        %v1263 = vld [vmem:[%s1156 + $0x1d8] sm:$0xff]
        %v1264 = vld [vmem:[%s1156 + $0x1e0] sm:$0xff]
        %v1265 = vld [vmem:[%s1156 + $0x1e8] sm:$0xff]
        %v1266 = vld [vmem:[%s1156 + $0x1f0] sm:$0xff]
        %v1267 = vld [vmem:[%s1156 + $0x1f8] sm:$0xff]
        %v1268 = vld [vmem:[%s1156 + $0x200] sm:$0xff]
        %v1269 = vld [vmem:[%s1156 + $0x208] sm:$0xff]
        %v1270 = vld [vmem:[%s1156 + $0x210] sm:$0xff]
        %v1271 = vld [vmem:[%s1156 + $0x218] sm:$0xff]
        %v1272 = vld [vmem:[%s1156 + $0x220] sm:$0xff]
        %v1273 = vld [vmem:[%s1156 + $0x228] sm:$0xff]
        %v1274 = vld [vmem:[%s1156 + $0x230] sm:$0xff]
        %v1275 = vld [vmem:[%s1156 + $0x238] sm:$0xff]
        %v1276 = vld [vmem:[%s1156 + $0x240] sm:$0xff]
        %v1277 = vld [vmem:[%s1156 + $0x248] sm:$0xff]
        %v1278 = vld [vmem:[%s1156 + $0x250] sm:$0xff]
        %v1279 = vld [vmem:[%s1156 + $0x258] sm:$0xff]
        %v1280 = vld [vmem:[%s1156 + $0x260] sm:$0xff]
        %v1281 = vld [vmem:[%s1156 + $0x268] sm:$0xff]
        %v1282 = vld [vmem:[%s1156 + $0x270] sm:$0xff]
        %v1283 = vld [vmem:[%s1156 + $0x278] sm:$0xff]
        %v1284 = vld [vmem:[%s1156 + $0x280] sm:$0xff]
        %v1285 = vld [vmem:[%s1156 + $0x288] sm:$0xff]
        %v1286 = vld [vmem:[%s1156 + $0x290] sm:$0xff]
        %v1287 = vld [vmem:[%s1156 + $0x298] sm:$0xff]
        %v1288 = vld [vmem:[%s1156 + $0x2a0] sm:$0xff]
        %v1289 = vld [vmem:[%s1156 + $0x2a8] sm:$0xff]
        %v1290 = vld [vmem:[%s1156 + $0x2b0] sm:$0xff]
        %v1291 = vld [vmem:[%s1156 + $0x2b8] sm:$0xff]
        %v1292 = vld [vmem:[%s1156 + $0x2c0] sm:$0xff]
        %v1293 = vld [vmem:[%s1156 + $0x2c8] sm:$0xff]
        %v1294 = vld [vmem:[%s1156 + $0x2d0] sm:$0xff]
        %v1295 = vld [vmem:[%s1156 + $0x2d8] sm:$0xff]
        %v1296 = vld [vmem:[%s1156 + $0x2e0] sm:$0xff]
        %v1297 = vld [vmem:[%s1156 + $0x2e8] sm:$0xff]
        %v1298 = vld [vmem:[%s1156 + $0x2f0] sm:$0xff]
        %v1299 = vld [vmem:[%s1156 + $0x2f8] sm:$0xff]
        %v1300 = vld [vmem:[%s1156 + $0x300] sm:$0xff]
        %v1301 = vld [vmem:[%s1156 + $0x308] sm:$0xff]
        %v1302 = vld [vmem:[%s1156 + $0x310] sm:$0xff]
        %v1303 = vld [vmem:[%s1156 + $0x318] sm:$0xff]
        %v1304 = vld [vmem:[%s1156 + $0x320] sm:$0xff]
        %v1305 = vld [vmem:[%s1156 + $0x328] sm:$0xff]
        %v1306 = vld [vmem:[%s1156 + $0x330] sm:$0xff]
        %v1307 = vld [vmem:[%s1156 + $0x338] sm:$0xff]
        %v1308 = vld [vmem:[%s1156 + $0x340] sm:$0xff]
        %v1309 = vld [vmem:[%s1156 + $0x348] sm:$0xff]
        %v1310 = vld [vmem:[%s1156 + $0x350] sm:$0xff]
        %v1311 = vld [vmem:[%s1156 + $0x358] sm:$0xff]
        %v1312 = vld [vmem:[%s1156 + $0x360] sm:$0xff]
        %v1313 = vld [vmem:[%s1156 + $0x368] sm:$0xff]
        %v1314 = vld [vmem:[%s1156 + $0x370] sm:$0xff]
        %v1315 = vld [vmem:[%s1156 + $0x378] sm:$0xff]
        %v1316 = vld [vmem:[%s1156 + $0x380] sm:$0xff]
        %v1317 = vld [vmem:[%s1156 + $0x388] sm:$0xff]
        %v1318 = vld [vmem:[%s1156 + $0x390] sm:$0xff]
        %v1319 = vld [vmem:[%s1156 + $0x398] sm:$0xff]
        %v1320 = vld [vmem:[%s1156 + $0x3a0] sm:$0xff]
        %v1321 = vld [vmem:[%s1156 + $0x3a8] sm:$0xff]
        %v1322 = vld [vmem:[%s1156 + $0x3b0] sm:$0xff]
        %v1323 = vld [vmem:[%s1156 + $0x3b8] sm:$0xff]
        %v1324 = vld [vmem:[%s1156 + $0x3c0] sm:$0xff]
        %v1325 = vld [vmem:[%s1156 + $0x3c8] sm:$0xff]
        %v1326 = vld [vmem:[%s1156 + $0x3d0] sm:$0xff]
        %v1327 = vld [vmem:[%s1156 + $0x3d8] sm:$0xff]
        %v1328 = vld [vmem:[%s1156 + $0x3e0] sm:$0xff]
        %v1329 = vld [vmem:[%s1156 + $0x3e8] sm:$0xff]
        %v1330 = vld [vmem:[%s1156 + $0x3f0] sm:$0xff]
        %v1331 = vld [vmem:[%s1156 + $0x3f8] sm:$0xff]
        %v1332 = vld [vmem:[%s1156 + $0x400] sm:$0xff]
        %v1333 = vld [vmem:[%s1156 + $0x408] sm:$0xff]
        %v1334 = vld [vmem:[%s1156 + $0x410] sm:$0xff]
        %v1335 = vld [vmem:[%s1156 + $0x418] sm:$0xff]
        %v1336 = vld [vmem:[%s1156 + $0x420] sm:$0xff]
        %v1337 = vld [vmem:[%s1156 + $0x428] sm:$0xff]
        %v1338 = vld [vmem:[%s1156 + $0x430] sm:$0xff]
        %v1339 = vld [vmem:[%s1156 + $0x438] sm:$0xff]
        %v1340 = vld [vmem:[%s1156 + $0x440] sm:$0xff]
        %v1341 = vld [vmem:[%s1156 + $0x448] sm:$0xff]
        %v1342 = vld [vmem:[%s1156 + $0x450] sm:$0xff]
        %v1343 = vld [vmem:[%s1156 + $0x458] sm:$0xff]
        %v1344 = vld [vmem:[%s1156 + $0x460] sm:$0xff]
        %v1345 = vld [vmem:[%s1156 + $0x468] sm:$0xff]
        %v1346 = vld [vmem:[%s1156 + $0x470] sm:$0xff]
        %v1347 = vld [vmem:[%s1156 + $0x478] sm:$0xff]
        %v1348 = vld [vmem:[%s1156 + $0x480] sm:$0xff]
        %v1349 = vld [vmem:[%s1156 + $0x488] sm:$0xff]
        %v1350 = vld [vmem:[%s1156 + $0x490] sm:$0xff]
        %v1351 = vld [vmem:[%s1156 + $0x498] sm:$0xff]
        %v1352 = vld [vmem:[%s1156 + $0x4a0] sm:$0xff]
        %v1353 = vld [vmem:[%s1156 + $0x4a8] sm:$0xff]
        %v1354 = vld [vmem:[%s1156 + $0x4b0] sm:$0xff]
        %v1355 = vld [vmem:[%s1156 + $0x4b8] sm:$0xff]
        %v1356 = vld [vmem:[%s1156 + $0x4c0] sm:$0xff]
        %v1357 = vld [vmem:[%s1156 + $0x4c8] sm:$0xff]
        %v1358 = vld [vmem:[%s1156 + $0x4d0] sm:$0xff]
        %v1359 = vld [vmem:[%s1156 + $0x4d8] sm:$0xff]
        %v1360 = vld [vmem:[%s1156 + $0x4e0] sm:$0xff]
        %v1361 = vld [vmem:[%s1156 + $0x4e8] sm:$0xff]
        %v1362 = vld [vmem:[%s1156 + $0x4f0] sm:$0xff]
        %v1363 = vld [vmem:[%s1156 + $0x4f8] sm:$0xff]
        %v1364 = vld [vmem:[%s1156 + $0x500] sm:$0xff]
        %v1365 = vld [vmem:[%s1156 + $0x508] sm:$0xff]
        %v1366 = vld [vmem:[%s1156 + $0x510] sm:$0xff]
        %v1367 = vld [vmem:[%s1156 + $0x518] sm:$0xff]
        %v1368 = vld [vmem:[%s1156 + $0x520] sm:$0xff]
        %v1369 = vld [vmem:[%s1156 + $0x528] sm:$0xff]
        %v1370 = vld [vmem:[%s1156 + $0x530] sm:$0xff]
        %v1371 = vld [vmem:[%s1156 + $0x538] sm:$0xff]
        %v1372 = vld [vmem:[%s1156 + $0x540] sm:$0xff]
        %v1373 = vld [vmem:[%s1156 + $0x548] sm:$0xff]
        %v1374 = vld [vmem:[%s1156 + $0x550] sm:$0xff]
        %v1375 = vld [vmem:[%s1156 + $0x558] sm:$0xff]
        %v1376 = vld [vmem:[%s1156 + $0x560] sm:$0xff]
        %v1377 = vld [vmem:[%s1156 + $0x568] sm:$0xff]
        %v1378 = vld [vmem:[%s1156 + $0x570] sm:$0xff]
        %v1379 = vld [vmem:[%s1156 + $0x578] sm:$0xff]
        %v1380 = vld [vmem:[%s1156 + $0x580] sm:$0xff]
        %v1381 = vld [vmem:[%s1156 + $0x588] sm:$0xff]
        %v1382 = vld [vmem:[%s1156 + $0x590] sm:$0xff]
        %v1383 = vld [vmem:[%s1156 + $0x598] sm:$0xff]
        %v1384 = vld [vmem:[%s1156 + $0x5a0] sm:$0xff]
        %v1385 = vld [vmem:[%s1156 + $0x5a8] sm:$0xff]
        %v1386 = vld [vmem:[%s1156 + $0x5b0] sm:$0xff]
        %v1387 = vld [vmem:[%s1156 + $0x5b8] sm:$0xff]
        %v1388 = vld [vmem:[%s1156 + $0x5c0] sm:$0xff]
        %v1389 = vld [vmem:[%s1156 + $0x5c8] sm:$0xff]
        %v1390 = vld [vmem:[%s1156 + $0x5d0] sm:$0xff]
        %v1391 = vld [vmem:[%s1156 + $0x5d8] sm:$0xff]
        %v1392 = vld [vmem:[%s1156 + $0x5e0] sm:$0xff]
        %v1393 = vld [vmem:[%s1156 + $0x5e8] sm:$0xff]
        %v1394 = vld [vmem:[%s1156 + $0x5f0] sm:$0xff]
        %v1395 = vld [vmem:[%s1156 + $0x5f8] sm:$0xff]
        %v1396 = vld [vmem:[%s1156 + $0x600] sm:$0xff]
        %v1397 = vld [vmem:[%s1156 + $0x608] sm:$0xff]
        %v1398 = vld [vmem:[%s1156 + $0x610] sm:$0xff]
        %v1399 = vld [vmem:[%s1156 + $0x618] sm:$0xff]
        %v1400 = vld [vmem:[%s1156 + $0x620] sm:$0xff]
        %v1401 = vld [vmem:[%s1156 + $0x628] sm:$0xff]
        %v1402 = vld [vmem:[%s1156 + $0x630] sm:$0xff]
        %v1403 = vld [vmem:[%s1156 + $0x638] sm:$0xff]
        %v1404 = vld [vmem:[%s1156 + $0x640] sm:$0xff]
        %v1405 = vld [vmem:[%s1156 + $0x648] sm:$0xff]
        %v1406 = vld [vmem:[%s1156 + $0x650] sm:$0xff]
        %v1407 = vld [vmem:[%s1156 + $0x658] sm:$0xff]
        %v1408 = vld [vmem:[%s1156 + $0x660] sm:$0xff]
        %v1409 = vld [vmem:[%s1156 + $0x668] sm:$0xff]
        %v1410 = vld [vmem:[%s1156 + $0x670] sm:$0xff]
        %v1411 = vld [vmem:[%s1156 + $0x678] sm:$0xff]
        %v1412 = vld [vmem:[%s1156 + $0x680] sm:$0xff]
        %v1413 = vld [vmem:[%s1156 + $0x688] sm:$0xff]
        %v1414 = vld [vmem:[%s1156 + $0x690] sm:$0xff]
        %v1415 = vld [vmem:[%s1156 + $0x698] sm:$0xff]
        %v1416 = vld [vmem:[%s1156 + $0x6a0] sm:$0xff]
        %v1417 = vld [vmem:[%s1156 + $0x6a8] sm:$0xff]
        %v1418 = vld [vmem:[%s1156 + $0x6b0] sm:$0xff]
        %v1419 = vld [vmem:[%s1156 + $0x6b8] sm:$0xff]
        %v1420 = vld [vmem:[%s1156 + $0x6c0] sm:$0xff]
        %v1421 = vld [vmem:[%s1156 + $0x6c8] sm:$0xff]
        %v1422 = vld [vmem:[%s1156 + $0x6d0] sm:$0xff]
        %v1423 = vld [vmem:[%s1156 + $0x6d8] sm:$0xff]
        %v1424 = vld [vmem:[%s1156 + $0x6e0] sm:$0xff]
        %v1425 = vld [vmem:[%s1156 + $0x6e8] sm:$0xff]
        %v1426 = vld [vmem:[%s1156 + $0x6f0] sm:$0xff]
        %v1427 = vld [vmem:[%s1156 + $0x6f8] sm:$0xff]
        %v1428 = vld [vmem:[%s1156 + $0x700] sm:$0xff]
        %v1429 = vld [vmem:[%s1156 + $0x708] sm:$0xff]
        %v1430 = vld [vmem:[%s1156 + $0x710] sm:$0xff]
        %v1431 = vld [vmem:[%s1156 + $0x718] sm:$0xff]
        %v1432 = vld [vmem:[%s1156 + $0x720] sm:$0xff]
        %v1433 = vld [vmem:[%s1156 + $0x728] sm:$0xff]
        %v1434 = vld [vmem:[%s1156 + $0x730] sm:$0xff]
        %v1435 = vld [vmem:[%s1156 + $0x738] sm:$0xff]
        %v1436 = vld [vmem:[%s1156 + $0x740] sm:$0xff]
        %v1437 = vld [vmem:[%s1156 + $0x748] sm:$0xff]
        %v1438 = vld [vmem:[%s1156 + $0x750] sm:$0xff]
        %v1439 = vld [vmem:[%s1156 + $0x758] sm:$0xff]
        %v1440 = vld [vmem:[%s1156 + $0x760] sm:$0xff]
        %v1441 = vld [vmem:[%s1156 + $0x768] sm:$0xff]
        %v1442 = vld [vmem:[%s1156 + $0x770] sm:$0xff]
        %v1443 = vld [vmem:[%s1156 + $0x778] sm:$0xff]
        %v1444 = vld [vmem:[%s1156 + $0x780] sm:$0xff]
        %v1445 = vld [vmem:[%s1156 + $0x788] sm:$0xff]
        %v1446 = vld [vmem:[%s1156 + $0x790] sm:$0xff]
        %v1447 = vld [vmem:[%s1156 + $0x798] sm:$0xff]
        %v1448 = vld [vmem:[%s1156 + $0x7a0] sm:$0xff]
        %v1449 = vld [vmem:[%s1156 + $0x7a8] sm:$0xff]
        %v1450 = vld [vmem:[%s1156 + $0x7b0] sm:$0xff]
        %v1451 = vld [vmem:[%s1156 + $0x7b8] sm:$0xff]
        %v1452 = vld [vmem:[%s1156 + $0x7c0] sm:$0xff]
        %v1453 = vld [vmem:[%s1156 + $0x7c8] sm:$0xff]
        %v1454 = vld [vmem:[%s1156 + $0x7d0] sm:$0xff]
        %v1455 = vld [vmem:[%s1156 + $0x7d8] sm:$0xff]
        %v1456 = vld [vmem:[%s1156 + $0x7e0] sm:$0xff]
        %v1457 = vld [vmem:[%s1156 + $0x7e8] sm:$0xff]
        %v1458 = vld [vmem:[%s1156 + $0x7f0] sm:$0xff]
        %v1459 = vld [vmem:[%s1156 + $0x7f8] sm:$0xff]
        %v1460 = vld [vmem:[%s1156 + $0x800] sm:$0xff]
        %v1461 = vld [vmem:[%s1156 + $0x808] sm:$0xff]
        %v1462 = vld [vmem:[%s1156 + $0x810] sm:$0xff]
        %v1463 = vld [vmem:[%s1156 + $0x818] sm:$0xff]
        %v1464 = vld [vmem:[%s1156 + $0x820] sm:$0xff]
        %v1465 = vld [vmem:[%s1156 + $0x828] sm:$0xff]
        %v1466 = vld [vmem:[%s1156 + $0x830] sm:$0xff]
        %v1467 = vld [vmem:[%s1156 + $0x838] sm:$0xff]
        %v1468 = vld [vmem:[%s1156 + $0x840] sm:$0xff]
        %v1469 = vld [vmem:[%s1156 + $0x848] sm:$0xff]
        %v1470 = vld [vmem:[%s1156 + $0x850] sm:$0xff]
        %v1471 = vld [vmem:[%s1156 + $0x858] sm:$0xff]
        %v1472 = vld [vmem:[%s1156 + $0x860] sm:$0xff]
        %v1473 = vld [vmem:[%s1156 + $0x868] sm:$0xff]
        %v1474 = vld [vmem:[%s1156 + $0x870] sm:$0xff]
        %v1475 = vld [vmem:[%s1156 + $0x878] sm:$0xff]
        %v1476 = vld [vmem:[%s1156 + $0x880] sm:$0xff]
        %v1477 = vld [vmem:[%s1156 + $0x888] sm:$0xff]
        %v1478 = vld [vmem:[%s1156 + $0x890] sm:$0xff]
        %v1479 = vld [vmem:[%s1156 + $0x898] sm:$0xff]
        %v1480 = vld [vmem:[%s1156 + $0x8a0] sm:$0xff]
        %v1481 = vld [vmem:[%s1156 + $0x8a8] sm:$0xff]
        %v1482 = vld [vmem:[%s1156 + $0x8b0] sm:$0xff]
        %v1483 = vld [vmem:[%s1156 + $0x8b8] sm:$0xff]
        %v1484 = vld [vmem:[%s1156 + $0x8c0] sm:$0xff]
        %v1485 = vld [vmem:[%s1156 + $0x8c8] sm:$0xff]
        %v1486 = vld [vmem:[%s1156 + $0x8d0] sm:$0xff]
        %v1487 = vld [vmem:[%s1156 + $0x8d8] sm:$0xff]
        %v1488 = vld [vmem:[%s1156 + $0x8e0] sm:$0xff]
        %v1489 = vld [vmem:[%s1156 + $0x8e8] sm:$0xff]
        %v1490 = vld [vmem:[%s1156 + $0x8f0] sm:$0xff]
        %v1491 = vld [vmem:[%s1156 + $0x8f8] sm:$0xff]
        %v1492 = vld [vmem:[%s1156 + $0x900] sm:$0xff]
        %v1493 = vld [vmem:[%s1156 + $0x908] sm:$0xff]
        %v1494 = vld [vmem:[%s1156 + $0x910] sm:$0xff]
        %v1495 = vld [vmem:[%s1156 + $0x918] sm:$0xff]
        %v1496 = vld [vmem:[%s1156 + $0x920] sm:$0xff]
        %v1497 = vld [vmem:[%s1156 + $0x928] sm:$0xff]
        %v1498 = vld [vmem:[%s1156 + $0x930] sm:$0xff]
        %v1499 = vld [vmem:[%s1156 + $0x938] sm:$0xff]
        %v1500 = vld [vmem:[%s1156 + $0x940] sm:$0xff]
        %v1501 = vld [vmem:[%s1156 + $0x948] sm:$0xff]
        %v1502 = vld [vmem:[%s1156 + $0x950] sm:$0xff]
        %v1503 = vld [vmem:[%s1156 + $0x958] sm:$0xff]
        %v1504 = vld [vmem:[%s1156 + $0x960] sm:$0xff]
        %v1505 = vld [vmem:[%s1156 + $0x968] sm:$0xff]
        %v1506 = vld [vmem:[%s1156 + $0x970] sm:$0xff]
        %v1507 = vld [vmem:[%s1156 + $0x978] sm:$0xff]
        %v1508 = vld [vmem:[%s1156 + $0x980] sm:$0xff]
        %v1509 = vld [vmem:[%s1156 + $0x988] sm:$0xff]
        %v1510 = vld [vmem:[%s1156 + $0x990] sm:$0xff]
        %v1511 = vld [vmem:[%s1156 + $0x998] sm:$0xff]
        %v1512 = vld [vmem:[%s1156 + $0x9a0] sm:$0xff]
        %v1513 = vld [vmem:[%s1156 + $0x9a8] sm:$0xff]
        %v1514 = vld [vmem:[%s1156 + $0x9b0] sm:$0xff]
        %v1515 = vld [vmem:[%s1156 + $0x9b8] sm:$0xff]
        %v1516 = vld [vmem:[%s1156 + $0x9c0] sm:$0xff]
        %v1517 = vld [vmem:[%s1156 + $0x9c8] sm:$0xff]
        %v1518 = vld [vmem:[%s1156 + $0x9d0] sm:$0xff]
        %v1519 = vld [vmem:[%s1156 + $0x9d8] sm:$0xff]
        %v1520 = vld [vmem:[%s1156 + $0x9e0] sm:$0xff]
        %v1521 = vld [vmem:[%s1156 + $0x9e8] sm:$0xff]
        %v1522 = vld [vmem:[%s1156 + $0x9f0] sm:$0xff]
        %v1523 = vld [vmem:[%s1156 + $0x9f8] sm:$0xff]
        %v1524 = vld [vmem:[%s1156 + $0xa00] sm:$0xff]
        %v1525 = vld [vmem:[%s1156 + $0xa08] sm:$0xff]
        %v1526 = vld [vmem:[%s1156 + $0xa10] sm:$0xff]
        %v1527 = vld [vmem:[%s1156 + $0xa18] sm:$0xff]
        %v1528 = vld [vmem:[%s1156 + $0xa20] sm:$0xff]
        %v1529 = vld [vmem:[%s1156 + $0xa28] sm:$0xff]
        %v1530 = vld [vmem:[%s1156 + $0xa30] sm:$0xff]
        %v1531 = vld [vmem:[%s1156 + $0xa38] sm:$0xff]
        %v1532 = vld [vmem:[%s1156 + $0xa40] sm:$0xff]
        %v1533 = vld [vmem:[%s1156 + $0xa48] sm:$0xff]
        %v1534 = vld [vmem:[%s1156 + $0xa50] sm:$0xff]
        %v1535 = vld [vmem:[%s1156 + $0xa58] sm:$0xff]
        %v1536 = vld [vmem:[%s1156 + $0xa60] sm:$0xff]
        %v1537 = vld [vmem:[%s1156 + $0xa68] sm:$0xff]
        %v1538 = vld [vmem:[%s1156 + $0xa70] sm:$0xff]
        %v1539 = vld [vmem:[%s1156 + $0xa78] sm:$0xff]
        %v1540 = vld [vmem:[%s1156 + $0xa80] sm:$0xff]
        %v1541 = vld [vmem:[%s1156 + $0xa88] sm:$0xff]
        %v1542 = vld [vmem:[%s1156 + $0xa90] sm:$0xff]
        %v1543 = vld [vmem:[%s1156 + $0xa98] sm:$0xff]
        %v1544 = vld [vmem:[%s1156 + $0xaa0] sm:$0xff]
        %v1545 = vld [vmem:[%s1156 + $0xaa8] sm:$0xff]
        %v1546 = vld [vmem:[%s1156 + $0xab0] sm:$0xff]
        %v1547 = vld [vmem:[%s1156 + $0xab8] sm:$0xff]
        %v1548 = vld [vmem:[%s1156 + $0xac0] sm:$0xff]
        %v1549 = vld [vmem:[%s1156 + $0xac8] sm:$0xff]
        %v1550 = vld [vmem:[%s1156 + $0xad0] sm:$0xff]
        %v1551 = vld [vmem:[%s1156 + $0xad8] sm:$0xff]
        %v1552 = vld [vmem:[%s1156 + $0xae0] sm:$0xff]
        %v1553 = vld [vmem:[%s1156 + $0xae8] sm:$0xff]
        %v1554 = vld [vmem:[%s1156 + $0xaf0] sm:$0xff]
        %v1555 = vld [vmem:[%s1156 + $0xaf8] sm:$0xff]
        %v1556 = vld [vmem:[%s1156 + $0xb00] sm:$0xff]
        %v1557 = vld [vmem:[%s1156 + $0xb08] sm:$0xff]
        %v1558 = vld [vmem:[%s1156 + $0xb10] sm:$0xff]
        %v1559 = vld [vmem:[%s1156 + $0xb18] sm:$0xff]
        %v1560 = vld [vmem:[%s1156 + $0xb20] sm:$0xff]
        %v1561 = vld [vmem:[%s1156 + $0xb28] sm:$0xff]
        %v1562 = vld [vmem:[%s1156 + $0xb30] sm:$0xff]
        %v1563 = vld [vmem:[%s1156 + $0xb38] sm:$0xff]
        %v1564 = vld [vmem:[%s1156 + $0xb40] sm:$0xff]
        %v1565 = vld [vmem:[%s1156 + $0xb48] sm:$0xff]
        %v1566 = vld [vmem:[%s1156 + $0xb50] sm:$0xff]
        %v1567 = vld [vmem:[%s1156 + $0xb58] sm:$0xff]
        %v1568 = vld [vmem:[%s1156 + $0xb60] sm:$0xff]
        %v1569 = vld [vmem:[%s1156 + $0xb68] sm:$0xff]
        %v1570 = vld [vmem:[%s1156 + $0xb70] sm:$0xff]
        %v1571 = vld [vmem:[%s1156 + $0xb78] sm:$0xff]
        %v1572 = vld [vmem:[%s1156 + $0xb80] sm:$0xff]
        %v1573 = vld [vmem:[%s1156 + $0xb88] sm:$0xff]
        %v1574 = vld [vmem:[%s1156 + $0xb90] sm:$0xff]
        %v1575 = vld [vmem:[%s1156 + $0xb98] sm:$0xff]
        %v1576 = vld [vmem:[%s1156 + $0xba0] sm:$0xff]
        %v1577 = vld [vmem:[%s1156 + $0xba8] sm:$0xff]
        %v1578 = vld [vmem:[%s1156 + $0xbb0] sm:$0xff]
        %v1579 = vld [vmem:[%s1156 + $0xbb8] sm:$0xff]
        %v1580 = vld [vmem:[%s1156 + $0xbc0] sm:$0xff]
        %v1581 = vld [vmem:[%s1156 + $0xbc8] sm:$0xff]
        %v1582 = vld [vmem:[%s1156 + $0xbd0] sm:$0xff]
        %v1583 = vld [vmem:[%s1156 + $0xbd8] sm:$0xff]
        %v1584 = vld [vmem:[%s1156 + $0xbe0] sm:$0xff]
        %v1585 = vld [vmem:[%s1156 + $0xbe8] sm:$0xff]
        %v1586 = vld [vmem:[%s1156 + $0xbf0] sm:$0xff]
        %v1587 = vld [vmem:[%s1156 + $0xbf8] sm:$0xff]
        %v1588 = vld [vmem:[%s1156 + $0xc00] sm:$0xff]
        %v1589 = vld [vmem:[%s1156 + $0xc08] sm:$0xff]
        %v1590 = vld [vmem:[%s1156 + $0xc10] sm:$0xff]
        %v1591 = vld [vmem:[%s1156 + $0xc18] sm:$0xff]
        %v1592 = vld [vmem:[%s1156 + $0xc20] sm:$0xff]
        %v1593 = vld [vmem:[%s1156 + $0xc28] sm:$0xff]
        %v1594 = vld [vmem:[%s1156 + $0xc30] sm:$0xff]
        %v1595 = vld [vmem:[%s1156 + $0xc38] sm:$0xff]
        %v1596 = vld [vmem:[%s1156 + $0xc40] sm:$0xff]
        %v1597 = vld [vmem:[%s1156 + $0xc48] sm:$0xff]
        %v1598 = vld [vmem:[%s1156 + $0xc50] sm:$0xff]
        %v1599 = vld [vmem:[%s1156 + $0xc58] sm:$0xff]
        %v1600 = vld [vmem:[%s1156 + $0xc60] sm:$0xff]
        %v1601 = vld [vmem:[%s1156 + $0xc68] sm:$0xff]
        %v1602 = vld [vmem:[%s1156 + $0xc70] sm:$0xff]
        %v1603 = vld [vmem:[%s1156 + $0xc78] sm:$0xff]
        %v1604 = vld [vmem:[%s1156 + $0xc80] sm:$0xff]
        %v1605 = vld [vmem:[%s1156 + $0xc88] sm:$0xff]
        %v1606 = vld [vmem:[%s1156 + $0xc90] sm:$0xff]
        %v1607 = vld [vmem:[%s1156 + $0xc98] sm:$0xff]
        %v1608 = vld [vmem:[%s1156 + $0xca0] sm:$0xff]
        %v1609 = vld [vmem:[%s1156 + $0xca8] sm:$0xff]
        %v1610 = vld [vmem:[%s1156 + $0xcb0] sm:$0xff]
        %v1611 = vld [vmem:[%s1156 + $0xcb8] sm:$0xff]
        %v1612 = vld [vmem:[%s1156 + $0xcc0] sm:$0xff]
        %v1613 = vld [vmem:[%s1156 + $0xcc8] sm:$0xff]
        %v1614 = vld [vmem:[%s1156 + $0xcd0] sm:$0xff]
        %v1615 = vld [vmem:[%s1156 + $0xcd8] sm:$0xff]
        %v1616 = vld [vmem:[%s1156 + $0xce0] sm:$0xff]
        %v1617 = vld [vmem:[%s1156 + $0xce8] sm:$0xff]
        %v1618 = vld [vmem:[%s1156 + $0xcf0] sm:$0xff]
        %v1619 = vld [vmem:[%s1156 + $0xcf8] sm:$0xff]
        %v1620 = vld [vmem:[%s1156 + $0xd00] sm:$0xff]
        %v1621 = vld [vmem:[%s1156 + $0xd08] sm:$0xff]
        %v1622 = vld [vmem:[%s1156 + $0xd10] sm:$0xff]
        %v1623 = vld [vmem:[%s1156 + $0xd18] sm:$0xff]
        %v1624 = vld [vmem:[%s1156 + $0xd20] sm:$0xff]
        %v1625 = vld [vmem:[%s1156 + $0xd28] sm:$0xff]
        %v1626 = vld [vmem:[%s1156 + $0xd30] sm:$0xff]
        %v1627 = vld [vmem:[%s1156 + $0xd38] sm:$0xff]
        %v1628 = vld [vmem:[%s1156 + $0xd40] sm:$0xff]
        %v1629 = vld [vmem:[%s1156 + $0xd48] sm:$0xff]
        %v1630 = vld [vmem:[%s1156 + $0xd50] sm:$0xff]
        %v1631 = vld [vmem:[%s1156 + $0xd58] sm:$0xff]
        %v1632 = vld [vmem:[%s1156 + $0xd60] sm:$0xff]
        %v1633 = vld [vmem:[%s1156 + $0xd68] sm:$0xff]
        %v1634 = vld [vmem:[%s1156 + $0xd70] sm:$0xff]
        %v1635 = vld [vmem:[%s1156 + $0xd78] sm:$0xff]
        %v1636 = vld [vmem:[%s1156 + $0xd80] sm:$0xff]
        %v1637 = vld [vmem:[%s1156 + $0xd88] sm:$0xff]
        %v1638 = vld [vmem:[%s1156 + $0xd90] sm:$0xff]
        %v1639 = vld [vmem:[%s1156 + $0xd98] sm:$0xff]
        %v1640 = vld [vmem:[%s1156 + $0xda0] sm:$0xff]
        %v1641 = vld [vmem:[%s1156 + $0xda8] sm:$0xff]
        %v1642 = vld [vmem:[%s1156 + $0xdb0] sm:$0xff]
        %v1643 = vld [vmem:[%s1156 + $0xdb8] sm:$0xff]
        %v1644 = vld [vmem:[%s1156 + $0xdc0] sm:$0xff]
        %v1645 = vld [vmem:[%s1156 + $0xdc8] sm:$0xff]
        %v1646 = vld [vmem:[%s1156 + $0xdd0] sm:$0xff]
        %v1647 = vld [vmem:[%s1156 + $0xdd8] sm:$0xff]
        %v1648 = vld [vmem:[%s1156 + $0xde0] sm:$0xff]
        %v1649 = vld [vmem:[%s1156 + $0xde8] sm:$0xff]
        %v1650 = vld [vmem:[%s1156 + $0xdf0] sm:$0xff]
        %v1651 = vld [vmem:[%s1156 + $0xdf8] sm:$0xff]
        %v1652 = vld [vmem:[%s1156 + $0xe00] sm:$0xff]
        %v1653 = vld [vmem:[%s1156 + $0xe08] sm:$0xff]
        %v1654 = vld [vmem:[%s1156 + $0xe10] sm:$0xff]
        %v1655 = vld [vmem:[%s1156 + $0xe18] sm:$0xff]
        %v1656 = vld [vmem:[%s1156 + $0xe20] sm:$0xff]
        %v1657 = vld [vmem:[%s1156 + $0xe28] sm:$0xff]
        %v1658 = vld [vmem:[%s1156 + $0xe30] sm:$0xff]
        %v1659 = vld [vmem:[%s1156 + $0xe38] sm:$0xff]
        %v1660 = vld [vmem:[%s1156 + $0xe40] sm:$0xff]
        %v1661 = vld [vmem:[%s1156 + $0xe48] sm:$0xff]
        %v1662 = vld [vmem:[%s1156 + $0xe50] sm:$0xff]
        %v1663 = vld [vmem:[%s1156 + $0xe58] sm:$0xff]
        %v1664 = vld [vmem:[%s1156 + $0xe60] sm:$0xff]
        %v1665 = vld [vmem:[%s1156 + $0xe68] sm:$0xff]
        %v1666 = vld [vmem:[%s1156 + $0xe70] sm:$0xff]
        %v1667 = vld [vmem:[%s1156 + $0xe78] sm:$0xff]
        %v1668 = vld [vmem:[%s1156 + $0xe80] sm:$0xff]
        %v1669 = vld [vmem:[%s1156 + $0xe88] sm:$0xff]
        %v1670 = vld [vmem:[%s1156 + $0xe90] sm:$0xff]
        %v1671 = vld [vmem:[%s1156 + $0xe98] sm:$0xff]
        %v1672 = vld [vmem:[%s1156 + $0xea0] sm:$0xff]
        %v1673 = vld [vmem:[%s1156 + $0xea8] sm:$0xff]
        %v1674 = vld [vmem:[%s1156 + $0xeb0] sm:$0xff]
        %v1675 = vld [vmem:[%s1156 + $0xeb8] sm:$0xff]
        %v1676 = vld [vmem:[%s1156 + $0xec0] sm:$0xff]
        %v1677 = vld [vmem:[%s1156 + $0xec8] sm:$0xff]
        %v1678 = vld [vmem:[%s1156 + $0xed0] sm:$0xff]
        %v1679 = vld [vmem:[%s1156 + $0xed8] sm:$0xff]
        %v1680 = vld [vmem:[%s1156 + $0xee0] sm:$0xff]
        %v1681 = vld [vmem:[%s1156 + $0xee8] sm:$0xff]
        %v1682 = vld [vmem:[%s1156 + $0xef0] sm:$0xff]
        %v1683 = vld [vmem:[%s1156 + $0xef8] sm:$0xff]
        %v1684 = vld [vmem:[%s1156 + $0xf00] sm:$0xff]
        %v1685 = vld [vmem:[%s1156 + $0xf08] sm:$0xff]
        %v1686 = vld [vmem:[%s1156 + $0xf10] sm:$0xff]
        %v1687 = vld [vmem:[%s1156 + $0xf18] sm:$0xff]
        %v1688 = vld [vmem:[%s1156 + $0xf20] sm:$0xff]
        %v1689 = vld [vmem:[%s1156 + $0xf28] sm:$0xff]
        %vm1690 = vcmask 392192
        %v1692 = vsel %vm1690, %v1191, 0
        %v1695 = vsel %vm1690, %v1195, 0
        %v1698 = vsel %vm1690, %v1199, 0
        %v1701 = vsel %vm1690, %v1203, 0
        %1703 = vmatpush.msra.mxu0 %v1339
        %1704 = vmatpush.msra.mxu0 %v1330
        %1705 = vmatpush.msra.mxu0 %v1321
        %1706 = vmatpush.msra.mxu0 %v1312
        %1707 = vmatpush.msra.mxu0 %v1303
        %1708 = vmatpush.msra.mxu0 %v1294
        %1709 = vmatpush.msra.mxu0 %v1285
        %1710 = vmatpush.msra.mxu0 %v1276
        %1711 = vmatpush.msra.mxu0 %v1267
        %1712 = vmatpush.msra.mxu0 %v1258
        %1713 = vmatpush.msra.mxu0 %v1249
        %1714 = vmatpush.msra.mxu0 %v1240
        %1715 = vmatpush.msra.mxu0 %v1231
        %1716 = vmatpush.msra.mxu0 %v1222
        %1717 = vmatpush.msra.mxu0 %v1213
        %1718 = vmatpush.msra.mxu0 %v1204
        %1719 = vmatmul.f32.gmra.mxu0 %v1188
        %v1720 = vpop.f32.mrf.mxu0
        %v1721 = vadd.f32 0.0, %v1720
        %1722 = vmatmul.f32.gmra.mxu0 %v1192
        %v1723 = vpop.f32.mrf.mxu0
        %v1724 = vadd.f32 0.0, %v1723
        %1725 = vmatmul.f32.gmra.mxu0 %v1196
        %v1726 = vpop.f32.mrf.mxu0
        %v1727 = vadd.f32 0.0, %v1726
        %1728 = vmatmul.f32.gmra.mxu0 %v1200
        %v1729 = vpop.f32.mrf.mxu0
        %v1730 = vadd.f32 0.0, %v1729
        %1731 = vdwg.mxu0
        %1732 = vmatpush.msra.mxu0 %v1483
        %1733 = vmatpush.msra.mxu0 %v1474
        %1734 = vmatpush.msra.mxu0 %v1465
        %1735 = vmatpush.msra.mxu0 %v1456
        %1736 = vmatpush.msra.mxu0 %v1447
        %1737 = vmatpush.msra.mxu0 %v1438
        %1738 = vmatpush.msra.mxu0 %v1429
        %1739 = vmatpush.msra.mxu0 %v1420
        %1740 = vmatpush.msra.mxu0 %v1411
        %1741 = vmatpush.msra.mxu0 %v1402
        %1742 = vmatpush.msra.mxu0 %v1393
        %1743 = vmatpush.msra.mxu0 %v1384
        %1744 = vmatpush.msra.mxu0 %v1375
        %1745 = vmatpush.msra.mxu0 %v1366
        %1746 = vmatpush.msra.mxu0 %v1357
        %1747 = vmatpush.msra.mxu0 %v1348
        %1748 = vmatmul.f32.gmra.mxu0 %v1189
        %v1749 = vpop.f32.mrf.mxu0
        %v1750 = vadd.f32 %v1721, %v1749
        %1751 = vmatmul.f32.gmra.mxu0 %v1193
        %v1752 = vpop.f32.mrf.mxu0
        %v1753 = vadd.f32 %v1724, %v1752
        %1754 = vmatmul.f32.gmra.mxu0 %v1197
        %v1755 = vpop.f32.mrf.mxu0
        %v1756 = vadd.f32 %v1727, %v1755
        %1757 = vmatmul.f32.gmra.mxu0 %v1201
        %v1758 = vpop.f32.mrf.mxu0
        %v1759 = vadd.f32 %v1730, %v1758
        %1760 = vdwg.mxu0
        %1761 = vmatpush.msra.mxu0 %v1627
        %1762 = vmatpush.msra.mxu0 %v1618
        %1763 = vmatpush.msra.mxu0 %v1609
        %1764 = vmatpush.msra.mxu0 %v1600
        %1765 = vmatpush.msra.mxu0 %v1591
        %1766 = vmatpush.msra.mxu0 %v1582
        %1767 = vmatpush.msra.mxu0 %v1573
        %1768 = vmatpush.msra.mxu0 %v1564
        %1769 = vmatpush.msra.mxu0 %v1555
        %1770 = vmatpush.msra.mxu0 %v1546
        %1771 = vmatpush.msra.mxu0 %v1537
        %1772 = vmatpush.msra.mxu0 %v1528
        %1773 = vmatpush.msra.mxu0 %v1519
        %1774 = vmatpush.msra.mxu0 %v1510
        %1775 = vmatpush.msra.mxu0 %v1501
        %1776 = vmatpush.msra.mxu0 %v1492
        %1777 = vmatmul.f32.gmra.mxu0 %v1190
        %v1778 = vpop.f32.mrf.mxu0
        %v1779 = vadd.f32 %v1750, %v1778
        %1780 = vmatmul.f32.gmra.mxu0 %v1194
        %v1781 = vpop.f32.mrf.mxu0
        %v1782 = vadd.f32 %v1753, %v1781
        %1783 = vmatmul.f32.gmra.mxu0 %v1198
        %v1784 = vpop.f32.mrf.mxu0
        %v1785 = vadd.f32 %v1756, %v1784
        %1786 = vmatmul.f32.gmra.mxu0 %v1202
        %v1787 = vpop.f32.mrf.mxu0
        %v1788 = vadd.f32 %v1759, %v1787
        %1789 = vdwg.mxu0
        %1790 = vmatpush.msra.mxu0 0.0
        %1791 = vmatpush.msra.mxu0 0.0
        %1792 = vmatpush.msra.mxu0 0.0
        %1793 = vmatpush.msra.mxu0 0.0
        %1794 = vmatpush.msra.mxu0 0.0
        %1795 = vmatpush.msra.mxu0 0.0
        %1796 = vmatpush.msra.mxu0 0.0
        %1797 = vmatpush.msra.mxu0 0.0
        %1798 = vmatpush.msra.mxu0 0.0
        %1799 = vmatpush.msra.mxu0 0.0
        %1800 = vmatpush.msra.mxu0 %v1681
        %1801 = vmatpush.msra.mxu0 %v1672
        %1802 = vmatpush.msra.mxu0 %v1663
        %1803 = vmatpush.msra.mxu0 %v1654
        %1804 = vmatpush.msra.mxu0 %v1645
        %1805 = vmatpush.msra.mxu0 %v1636
        %1806 = vmatmul.f32.gmra.mxu0 %v1692
        %v1807 = vpop.f32.mrf.mxu0
        %v1808 = vadd.f32 %v1779, %v1807
        %1809 = vmatmul.f32.gmra.mxu0 %v1695
        %v1810 = vpop.f32.mrf.mxu0
        %v1811 = vadd.f32 %v1782, %v1810
        %1812 = vmatmul.f32.gmra.mxu0 %v1698
        %v1813 = vpop.f32.mrf.mxu0
        %v1814 = vadd.f32 %v1785, %v1813
        %1815 = vmatmul.f32.gmra.mxu0 %v1701
        %v1816 = vpop.f32.mrf.mxu0
        %v1817 = vadd.f32 %v1788, %v1816
        %1818 = vdwg.mxu0
        %1819 = vmatpush.msra.mxu0 %v1340
        %1820 = vmatpush.msra.mxu0 %v1331
        %1821 = vmatpush.msra.mxu0 %v1322
        %1822 = vmatpush.msra.mxu0 %v1313
        %1823 = vmatpush.msra.mxu0 %v1304
        %1824 = vmatpush.msra.mxu0 %v1295
        %1825 = vmatpush.msra.mxu0 %v1286
        %1826 = vmatpush.msra.mxu0 %v1277
        %1827 = vmatpush.msra.mxu0 %v1268
        %1828 = vmatpush.msra.mxu0 %v1259
        %1829 = vmatpush.msra.mxu0 %v1250
        %1830 = vmatpush.msra.mxu0 %v1241
        %1831 = vmatpush.msra.mxu0 %v1232
        %1832 = vmatpush.msra.mxu0 %v1223
        %1833 = vmatpush.msra.mxu0 %v1214
        %1834 = vmatpush.msra.mxu0 %v1205
        %1835 = vmatmul.f32.gmra.mxu0 %v1188
        %v1836 = vpop.f32.mrf.mxu0
        %v1837 = vadd.f32 0.0, %v1836
        %1838 = vmatmul.f32.gmra.mxu0 %v1192
        %v1839 = vpop.f32.mrf.mxu0
        %v1840 = vadd.f32 0.0, %v1839
        %1841 = vmatmul.f32.gmra.mxu0 %v1196
        %v1842 = vpop.f32.mrf.mxu0
        %v1843 = vadd.f32 0.0, %v1842
        %1844 = vmatmul.f32.gmra.mxu0 %v1200
        %v1845 = vpop.f32.mrf.mxu0
        %v1846 = vadd.f32 0.0, %v1845
        %1847 = vdwg.mxu0
        %1848 = vmatpush.msra.mxu0 %v1484
        %1849 = vmatpush.msra.mxu0 %v1475
        %1850 = vmatpush.msra.mxu0 %v1466
        %1851 = vmatpush.msra.mxu0 %v1457
        %1852 = vmatpush.msra.mxu0 %v1448
        %1853 = vmatpush.msra.mxu0 %v1439
        %1854 = vmatpush.msra.mxu0 %v1430
        %1855 = vmatpush.msra.mxu0 %v1421
        %1856 = vmatpush.msra.mxu0 %v1412
        %1857 = vmatpush.msra.mxu0 %v1403
        %1858 = vmatpush.msra.mxu0 %v1394
        %1859 = vmatpush.msra.mxu0 %v1385
        %1860 = vmatpush.msra.mxu0 %v1376
        %1861 = vmatpush.msra.mxu0 %v1367
        %1862 = vmatpush.msra.mxu0 %v1358
        %1863 = vmatpush.msra.mxu0 %v1349
        %1864 = vmatmul.f32.gmra.mxu0 %v1189
        %v1865 = vpop.f32.mrf.mxu0
        %v1866 = vadd.f32 %v1837, %v1865
        %1867 = vmatmul.f32.gmra.mxu0 %v1193
        %v1868 = vpop.f32.mrf.mxu0
        %v1869 = vadd.f32 %v1840, %v1868
        %1870 = vmatmul.f32.gmra.mxu0 %v1197
        %v1871 = vpop.f32.mrf.mxu0
        %v1872 = vadd.f32 %v1843, %v1871
        %1873 = vmatmul.f32.gmra.mxu0 %v1201
        %v1874 = vpop.f32.mrf.mxu0
        %v1875 = vadd.f32 %v1846, %v1874
        %1876 = vdwg.mxu0
        %1877 = vmatpush.msra.mxu0 %v1628
        %1878 = vmatpush.msra.mxu0 %v1619
        %1879 = vmatpush.msra.mxu0 %v1610
        %1880 = vmatpush.msra.mxu0 %v1601
        %1881 = vmatpush.msra.mxu0 %v1592
        %1882 = vmatpush.msra.mxu0 %v1583
        %1883 = vmatpush.msra.mxu0 %v1574
        %1884 = vmatpush.msra.mxu0 %v1565
        %1885 = vmatpush.msra.mxu0 %v1556
        %1886 = vmatpush.msra.mxu0 %v1547
        %1887 = vmatpush.msra.mxu0 %v1538
        %1888 = vmatpush.msra.mxu0 %v1529
        %1889 = vmatpush.msra.mxu0 %v1520
        %1890 = vmatpush.msra.mxu0 %v1511
        %1891 = vmatpush.msra.mxu0 %v1502
        %1892 = vmatpush.msra.mxu0 %v1493
        %1893 = vmatmul.f32.gmra.mxu0 %v1190
        %v1894 = vpop.f32.mrf.mxu0
        %v1895 = vadd.f32 %v1866, %v1894
        %1896 = vmatmul.f32.gmra.mxu0 %v1194
        %v1897 = vpop.f32.mrf.mxu0
        %v1898 = vadd.f32 %v1869, %v1897
        %1899 = vmatmul.f32.gmra.mxu0 %v1198
        %v1900 = vpop.f32.mrf.mxu0
        %v1901 = vadd.f32 %v1872, %v1900
        %1902 = vmatmul.f32.gmra.mxu0 %v1202
        %v1903 = vpop.f32.mrf.mxu0
        %v1904 = vadd.f32 %v1875, %v1903
        %1905 = vdwg.mxu0
        %1906 = vmatpush.msra.mxu0 0.0
        %1907 = vmatpush.msra.mxu0 0.0
        %1908 = vmatpush.msra.mxu0 0.0
        %1909 = vmatpush.msra.mxu0 0.0
        %1910 = vmatpush.msra.mxu0 0.0
        %1911 = vmatpush.msra.mxu0 0.0
        %1912 = vmatpush.msra.mxu0 0.0
        %1913 = vmatpush.msra.mxu0 0.0
        %1914 = vmatpush.msra.mxu0 0.0
        %1915 = vmatpush.msra.mxu0 0.0
        %1916 = vmatpush.msra.mxu0 %v1682
        %1917 = vmatpush.msra.mxu0 %v1673
        %1918 = vmatpush.msra.mxu0 %v1664
        %1919 = vmatpush.msra.mxu0 %v1655
        %1920 = vmatpush.msra.mxu0 %v1646
        %1921 = vmatpush.msra.mxu0 %v1637
        %1922 = vmatmul.f32.gmra.mxu0 %v1692
        %v1923 = vpop.f32.mrf.mxu0
        %v1924 = vadd.f32 %v1895, %v1923
        %1925 = vmatmul.f32.gmra.mxu0 %v1695
        %v1926 = vpop.f32.mrf.mxu0
        %v1927 = vadd.f32 %v1898, %v1926
        %1928 = vmatmul.f32.gmra.mxu0 %v1698
        %v1929 = vpop.f32.mrf.mxu0
        %v1930 = vadd.f32 %v1901, %v1929
        %1931 = vmatmul.f32.gmra.mxu0 %v1701
        %v1932 = vpop.f32.mrf.mxu0
        %v1933 = vadd.f32 %v1904, %v1932
        %1934 = vdwg.mxu0
        %1935 = vmatpush.msra.mxu0 %v1341
        %1936 = vmatpush.msra.mxu0 %v1332
        %1937 = vmatpush.msra.mxu0 %v1323
        %1938 = vmatpush.msra.mxu0 %v1314
        %1939 = vmatpush.msra.mxu0 %v1305
        %1940 = vmatpush.msra.mxu0 %v1296
        %1941 = vmatpush.msra.mxu0 %v1287
        %1942 = vmatpush.msra.mxu0 %v1278
        %1943 = vmatpush.msra.mxu0 %v1269
        %1944 = vmatpush.msra.mxu0 %v1260
        %1945 = vmatpush.msra.mxu0 %v1251
        %1946 = vmatpush.msra.mxu0 %v1242
        %1947 = vmatpush.msra.mxu0 %v1233
        %1948 = vmatpush.msra.mxu0 %v1224
        %1949 = vmatpush.msra.mxu0 %v1215
        %1950 = vmatpush.msra.mxu0 %v1206
        %1951 = vmatmul.f32.gmra.mxu0 %v1188
        %v1952 = vpop.f32.mrf.mxu0
        %v1953 = vadd.f32 0.0, %v1952
        %1954 = vmatmul.f32.gmra.mxu0 %v1192
        %v1955 = vpop.f32.mrf.mxu0
        %v1956 = vadd.f32 0.0, %v1955
        %1957 = vmatmul.f32.gmra.mxu0 %v1196
        %v1958 = vpop.f32.mrf.mxu0
        %v1959 = vadd.f32 0.0, %v1958
        %1960 = vmatmul.f32.gmra.mxu0 %v1200
        %v1961 = vpop.f32.mrf.mxu0
        %v1962 = vadd.f32 0.0, %v1961
        %1963 = vdwg.mxu0
        %1964 = vmatpush.msra.mxu0 %v1485
        %1965 = vmatpush.msra.mxu0 %v1476
        %1966 = vmatpush.msra.mxu0 %v1467
        %1967 = vmatpush.msra.mxu0 %v1458
        %1968 = vmatpush.msra.mxu0 %v1449
        %1969 = vmatpush.msra.mxu0 %v1440
        %1970 = vmatpush.msra.mxu0 %v1431
        %1971 = vmatpush.msra.mxu0 %v1422
        %1972 = vmatpush.msra.mxu0 %v1413
        %1973 = vmatpush.msra.mxu0 %v1404
        %1974 = vmatpush.msra.mxu0 %v1395
        %1975 = vmatpush.msra.mxu0 %v1386
        %1976 = vmatpush.msra.mxu0 %v1377
        %1977 = vmatpush.msra.mxu0 %v1368
        %1978 = vmatpush.msra.mxu0 %v1359
        %1979 = vmatpush.msra.mxu0 %v1350
        %1980 = vmatmul.f32.gmra.mxu0 %v1189
        %v1981 = vpop.f32.mrf.mxu0
        %v1982 = vadd.f32 %v1953, %v1981
        %1983 = vmatmul.f32.gmra.mxu0 %v1193
        %v1984 = vpop.f32.mrf.mxu0
        %v1985 = vadd.f32 %v1956, %v1984
        %1986 = vmatmul.f32.gmra.mxu0 %v1197
        %v1987 = vpop.f32.mrf.mxu0
        %v1988 = vadd.f32 %v1959, %v1987
        %1989 = vmatmul.f32.gmra.mxu0 %v1201
        %v1990 = vpop.f32.mrf.mxu0
        %v1991 = vadd.f32 %v1962, %v1990
        %1992 = vdwg.mxu0
        %1993 = vmatpush.msra.mxu0 %v1629
        %1994 = vmatpush.msra.mxu0 %v1620
        %1995 = vmatpush.msra.mxu0 %v1611
        %1996 = vmatpush.msra.mxu0 %v1602
        %1997 = vmatpush.msra.mxu0 %v1593
        %1998 = vmatpush.msra.mxu0 %v1584
        %1999 = vmatpush.msra.mxu0 %v1575
        %2000 = vmatpush.msra.mxu0 %v1566
        %2001 = vmatpush.msra.mxu0 %v1557
        %2002 = vmatpush.msra.mxu0 %v1548
        %2003 = vmatpush.msra.mxu0 %v1539
        %2004 = vmatpush.msra.mxu0 %v1530
        %2005 = vmatpush.msra.mxu0 %v1521
        %2006 = vmatpush.msra.mxu0 %v1512
        %2007 = vmatpush.msra.mxu0 %v1503
        %2008 = vmatpush.msra.mxu0 %v1494
        %2009 = vmatmul.f32.gmra.mxu0 %v1190
        %v2010 = vpop.f32.mrf.mxu0
        %v2011 = vadd.f32 %v1982, %v2010
        %2012 = vmatmul.f32.gmra.mxu0 %v1194
        %v2013 = vpop.f32.mrf.mxu0
        %v2014 = vadd.f32 %v1985, %v2013
        %2015 = vmatmul.f32.gmra.mxu0 %v1198
        %v2016 = vpop.f32.mrf.mxu0
        %v2017 = vadd.f32 %v1988, %v2016
        %2018 = vmatmul.f32.gmra.mxu0 %v1202
        %v2019 = vpop.f32.mrf.mxu0
        %v2020 = vadd.f32 %v1991, %v2019
        %2021 = vdwg.mxu0
        %2022 = vmatpush.msra.mxu0 0.0
        %2023 = vmatpush.msra.mxu0 0.0
        %2024 = vmatpush.msra.mxu0 0.0
        %2025 = vmatpush.msra.mxu0 0.0
        %2026 = vmatpush.msra.mxu0 0.0
        %2027 = vmatpush.msra.mxu0 0.0
        %2028 = vmatpush.msra.mxu0 0.0
        %2029 = vmatpush.msra.mxu0 0.0
        %2030 = vmatpush.msra.mxu0 0.0
        %2031 = vmatpush.msra.mxu0 0.0
        %2032 = vmatpush.msra.mxu0 %v1683
        %2033 = vmatpush.msra.mxu0 %v1674
        %2034 = vmatpush.msra.mxu0 %v1665
        %2035 = vmatpush.msra.mxu0 %v1656
        %2036 = vmatpush.msra.mxu0 %v1647
        %2037 = vmatpush.msra.mxu0 %v1638
        %2038 = vmatmul.f32.gmra.mxu0 %v1692
        %v2039 = vpop.f32.mrf.mxu0
        %v2040 = vadd.f32 %v2011, %v2039
        %2041 = vmatmul.f32.gmra.mxu0 %v1695
        %v2042 = vpop.f32.mrf.mxu0
        %v2043 = vadd.f32 %v2014, %v2042
        %2044 = vmatmul.f32.gmra.mxu0 %v1698
        %v2045 = vpop.f32.mrf.mxu0
        %v2046 = vadd.f32 %v2017, %v2045
        %2047 = vmatmul.f32.gmra.mxu0 %v1701
        %v2048 = vpop.f32.mrf.mxu0
        %v2049 = vadd.f32 %v2020, %v2048
        %2050 = vdwg.mxu0
        %2051 = vmatpush.msra.mxu0 %v1342
        %2052 = vmatpush.msra.mxu0 %v1333
        %2053 = vmatpush.msra.mxu0 %v1324
        %2054 = vmatpush.msra.mxu0 %v1315
        %2055 = vmatpush.msra.mxu0 %v1306
        %2056 = vmatpush.msra.mxu0 %v1297
        %2057 = vmatpush.msra.mxu0 %v1288
        %2058 = vmatpush.msra.mxu0 %v1279
        %2059 = vmatpush.msra.mxu0 %v1270
        %2060 = vmatpush.msra.mxu0 %v1261
        %2061 = vmatpush.msra.mxu0 %v1252
        %2062 = vmatpush.msra.mxu0 %v1243
        %2063 = vmatpush.msra.mxu0 %v1234
        %2064 = vmatpush.msra.mxu0 %v1225
        %2065 = vmatpush.msra.mxu0 %v1216
        %2066 = vmatpush.msra.mxu0 %v1207
        %2067 = vmatmul.f32.gmra.mxu0 %v1188
        %v2068 = vpop.f32.mrf.mxu0
        %v2069 = vadd.f32 0.0, %v2068
        %2070 = vmatmul.f32.gmra.mxu0 %v1192
        %v2071 = vpop.f32.mrf.mxu0
        %v2072 = vadd.f32 0.0, %v2071
        %2073 = vmatmul.f32.gmra.mxu0 %v1196
        %v2074 = vpop.f32.mrf.mxu0
        %v2075 = vadd.f32 0.0, %v2074
        %2076 = vmatmul.f32.gmra.mxu0 %v1200
        %v2077 = vpop.f32.mrf.mxu0
        %v2078 = vadd.f32 0.0, %v2077
        %2079 = vdwg.mxu0
        %2080 = vmatpush.msra.mxu0 %v1486
        %2081 = vmatpush.msra.mxu0 %v1477
        %2082 = vmatpush.msra.mxu0 %v1468
        %2083 = vmatpush.msra.mxu0 %v1459
        %2084 = vmatpush.msra.mxu0 %v1450
        %2085 = vmatpush.msra.mxu0 %v1441
        %2086 = vmatpush.msra.mxu0 %v1432
        %2087 = vmatpush.msra.mxu0 %v1423
        %2088 = vmatpush.msra.mxu0 %v1414
        %2089 = vmatpush.msra.mxu0 %v1405
        %2090 = vmatpush.msra.mxu0 %v1396
        %2091 = vmatpush.msra.mxu0 %v1387
        %2092 = vmatpush.msra.mxu0 %v1378
        %2093 = vmatpush.msra.mxu0 %v1369
        %2094 = vmatpush.msra.mxu0 %v1360
        %2095 = vmatpush.msra.mxu0 %v1351
        %2096 = vmatmul.f32.gmra.mxu0 %v1189
        %v2097 = vpop.f32.mrf.mxu0
        %v2098 = vadd.f32 %v2069, %v2097
        %2099 = vmatmul.f32.gmra.mxu0 %v1193
        %v2100 = vpop.f32.mrf.mxu0
        %v2101 = vadd.f32 %v2072, %v2100
        %2102 = vmatmul.f32.gmra.mxu0 %v1197
        %v2103 = vpop.f32.mrf.mxu0
        %v2104 = vadd.f32 %v2075, %v2103
        %2105 = vmatmul.f32.gmra.mxu0 %v1201
        %v2106 = vpop.f32.mrf.mxu0
        %v2107 = vadd.f32 %v2078, %v2106
        %2108 = vdwg.mxu0
        %2109 = vmatpush.msra.mxu0 %v1630
        %2110 = vmatpush.msra.mxu0 %v1621
        %2111 = vmatpush.msra.mxu0 %v1612
        %2112 = vmatpush.msra.mxu0 %v1603
        %2113 = vmatpush.msra.mxu0 %v1594
        %2114 = vmatpush.msra.mxu0 %v1585
        %2115 = vmatpush.msra.mxu0 %v1576
        %2116 = vmatpush.msra.mxu0 %v1567
        %2117 = vmatpush.msra.mxu0 %v1558
        %2118 = vmatpush.msra.mxu0 %v1549
        %2119 = vmatpush.msra.mxu0 %v1540
        %2120 = vmatpush.msra.mxu0 %v1531
        %2121 = vmatpush.msra.mxu0 %v1522
        %2122 = vmatpush.msra.mxu0 %v1513
        %2123 = vmatpush.msra.mxu0 %v1504
        %2124 = vmatpush.msra.mxu0 %v1495
        %2125 = vmatmul.f32.gmra.mxu0 %v1190
        %v2126 = vpop.f32.mrf.mxu0
        %v2127 = vadd.f32 %v2098, %v2126
        %2128 = vmatmul.f32.gmra.mxu0 %v1194
        %v2129 = vpop.f32.mrf.mxu0
        %v2130 = vadd.f32 %v2101, %v2129
        %2131 = vmatmul.f32.gmra.mxu0 %v1198
        %v2132 = vpop.f32.mrf.mxu0
        %v2133 = vadd.f32 %v2104, %v2132
        %2134 = vmatmul.f32.gmra.mxu0 %v1202
        %v2135 = vpop.f32.mrf.mxu0
        %v2136 = vadd.f32 %v2107, %v2135
        %2137 = vdwg.mxu0
        %2138 = vmatpush.msra.mxu0 0.0
        %2139 = vmatpush.msra.mxu0 0.0
        %2140 = vmatpush.msra.mxu0 0.0
        %2141 = vmatpush.msra.mxu0 0.0
        %2142 = vmatpush.msra.mxu0 0.0
        %2143 = vmatpush.msra.mxu0 0.0
        %2144 = vmatpush.msra.mxu0 0.0
        %2145 = vmatpush.msra.mxu0 0.0
        %2146 = vmatpush.msra.mxu0 0.0
        %2147 = vmatpush.msra.mxu0 0.0
        %2148 = vmatpush.msra.mxu0 %v1684
        %2149 = vmatpush.msra.mxu0 %v1675
        %2150 = vmatpush.msra.mxu0 %v1666
        %2151 = vmatpush.msra.mxu0 %v1657
        %2152 = vmatpush.msra.mxu0 %v1648
        %2153 = vmatpush.msra.mxu0 %v1639
        %2154 = vmatmul.f32.gmra.mxu0 %v1692
        %v2155 = vpop.f32.mrf.mxu0
        %v2156 = vadd.f32 %v2127, %v2155
        %2157 = vmatmul.f32.gmra.mxu0 %v1695
        %v2158 = vpop.f32.mrf.mxu0
        %v2159 = vadd.f32 %v2130, %v2158
        %2160 = vmatmul.f32.gmra.mxu0 %v1698
        %v2161 = vpop.f32.mrf.mxu0
        %v2162 = vadd.f32 %v2133, %v2161
        %2163 = vmatmul.f32.gmra.mxu0 %v1701
        %v2164 = vpop.f32.mrf.mxu0
        %v2165 = vadd.f32 %v2136, %v2164
        %2166 = vdwg.mxu0
        %2167 = vmatpush.msra.mxu0 %v1343
        %2168 = vmatpush.msra.mxu0 %v1334
        %2169 = vmatpush.msra.mxu0 %v1325
        %2170 = vmatpush.msra.mxu0 %v1316
        %2171 = vmatpush.msra.mxu0 %v1307
        %2172 = vmatpush.msra.mxu0 %v1298
        %2173 = vmatpush.msra.mxu0 %v1289
        %2174 = vmatpush.msra.mxu0 %v1280
        %2175 = vmatpush.msra.mxu0 %v1271
        %2176 = vmatpush.msra.mxu0 %v1262
        %2177 = vmatpush.msra.mxu0 %v1253
        %2178 = vmatpush.msra.mxu0 %v1244
        %2179 = vmatpush.msra.mxu0 %v1235
        %2180 = vmatpush.msra.mxu0 %v1226
        %2181 = vmatpush.msra.mxu0 %v1217
        %2182 = vmatpush.msra.mxu0 %v1208
        %2183 = vmatmul.f32.gmra.mxu0 %v1188
        %v2184 = vpop.f32.mrf.mxu0
        %v2185 = vadd.f32 0.0, %v2184
        %2186 = vmatmul.f32.gmra.mxu0 %v1192
        %v2187 = vpop.f32.mrf.mxu0
        %v2188 = vadd.f32 0.0, %v2187
        %2189 = vmatmul.f32.gmra.mxu0 %v1196
        %v2190 = vpop.f32.mrf.mxu0
        %v2191 = vadd.f32 0.0, %v2190
        %2192 = vmatmul.f32.gmra.mxu0 %v1200
        %v2193 = vpop.f32.mrf.mxu0
        %v2194 = vadd.f32 0.0, %v2193
        %2195 = vdwg.mxu0
        %2196 = vmatpush.msra.mxu0 %v1487
        %2197 = vmatpush.msra.mxu0 %v1478
        %2198 = vmatpush.msra.mxu0 %v1469
        %2199 = vmatpush.msra.mxu0 %v1460
        %2200 = vmatpush.msra.mxu0 %v1451
        %2201 = vmatpush.msra.mxu0 %v1442
        %2202 = vmatpush.msra.mxu0 %v1433
        %2203 = vmatpush.msra.mxu0 %v1424
        %2204 = vmatpush.msra.mxu0 %v1415
        %2205 = vmatpush.msra.mxu0 %v1406
        %2206 = vmatpush.msra.mxu0 %v1397
        %2207 = vmatpush.msra.mxu0 %v1388
        %2208 = vmatpush.msra.mxu0 %v1379
        %2209 = vmatpush.msra.mxu0 %v1370
        %2210 = vmatpush.msra.mxu0 %v1361
        %2211 = vmatpush.msra.mxu0 %v1352
        %2212 = vmatmul.f32.gmra.mxu0 %v1189
        %v2213 = vpop.f32.mrf.mxu0
        %v2214 = vadd.f32 %v2185, %v2213
        %2215 = vmatmul.f32.gmra.mxu0 %v1193
        %v2216 = vpop.f32.mrf.mxu0
        %v2217 = vadd.f32 %v2188, %v2216
        %2218 = vmatmul.f32.gmra.mxu0 %v1197
        %v2219 = vpop.f32.mrf.mxu0
        %v2220 = vadd.f32 %v2191, %v2219
        %2221 = vmatmul.f32.gmra.mxu0 %v1201
        %v2222 = vpop.f32.mrf.mxu0
        %v2223 = vadd.f32 %v2194, %v2222
        %2224 = vdwg.mxu0
        %2225 = vmatpush.msra.mxu0 %v1631
        %2226 = vmatpush.msra.mxu0 %v1622
        %2227 = vmatpush.msra.mxu0 %v1613
        %2228 = vmatpush.msra.mxu0 %v1604
        %2229 = vmatpush.msra.mxu0 %v1595
        %2230 = vmatpush.msra.mxu0 %v1586
        %2231 = vmatpush.msra.mxu0 %v1577
        %2232 = vmatpush.msra.mxu0 %v1568
        %2233 = vmatpush.msra.mxu0 %v1559
        %2234 = vmatpush.msra.mxu0 %v1550
        %2235 = vmatpush.msra.mxu0 %v1541
        %2236 = vmatpush.msra.mxu0 %v1532
        %2237 = vmatpush.msra.mxu0 %v1523
        %2238 = vmatpush.msra.mxu0 %v1514
        %2239 = vmatpush.msra.mxu0 %v1505
        %2240 = vmatpush.msra.mxu0 %v1496
        %2241 = vmatmul.f32.gmra.mxu0 %v1190
        %v2242 = vpop.f32.mrf.mxu0
        %v2243 = vadd.f32 %v2214, %v2242
        %2244 = vmatmul.f32.gmra.mxu0 %v1194
        %v2245 = vpop.f32.mrf.mxu0
        %v2246 = vadd.f32 %v2217, %v2245
        %2247 = vmatmul.f32.gmra.mxu0 %v1198
        %v2248 = vpop.f32.mrf.mxu0
        %v2249 = vadd.f32 %v2220, %v2248
        %2250 = vmatmul.f32.gmra.mxu0 %v1202
        %v2251 = vpop.f32.mrf.mxu0
        %v2252 = vadd.f32 %v2223, %v2251
        %2253 = vdwg.mxu0
        %2254 = vmatpush.msra.mxu0 0.0
        %2255 = vmatpush.msra.mxu0 0.0
        %2256 = vmatpush.msra.mxu0 0.0
        %2257 = vmatpush.msra.mxu0 0.0
        %2258 = vmatpush.msra.mxu0 0.0
        %2259 = vmatpush.msra.mxu0 0.0
        %2260 = vmatpush.msra.mxu0 0.0
        %2261 = vmatpush.msra.mxu0 0.0
        %2262 = vmatpush.msra.mxu0 0.0
        %2263 = vmatpush.msra.mxu0 0.0
        %2264 = vmatpush.msra.mxu0 %v1685
        %2265 = vmatpush.msra.mxu0 %v1676
        %2266 = vmatpush.msra.mxu0 %v1667
        %2267 = vmatpush.msra.mxu0 %v1658
        %2268 = vmatpush.msra.mxu0 %v1649
        %2269 = vmatpush.msra.mxu0 %v1640
        %2270 = vmatmul.f32.gmra.mxu0 %v1692
        %v2271 = vpop.f32.mrf.mxu0
        %v2272 = vadd.f32 %v2243, %v2271
        %2273 = vmatmul.f32.gmra.mxu0 %v1695
        %v2274 = vpop.f32.mrf.mxu0
        %v2275 = vadd.f32 %v2246, %v2274
        %2276 = vmatmul.f32.gmra.mxu0 %v1698
        %v2277 = vpop.f32.mrf.mxu0
        %v2278 = vadd.f32 %v2249, %v2277
        %2279 = vmatmul.f32.gmra.mxu0 %v1701
        %v2280 = vpop.f32.mrf.mxu0
        %v2281 = vadd.f32 %v2252, %v2280
        %2282 = vdwg.mxu0
        %2283 = vmatpush.msra.mxu0 %v1344
        %2284 = vmatpush.msra.mxu0 %v1335
        %2285 = vmatpush.msra.mxu0 %v1326
        %2286 = vmatpush.msra.mxu0 %v1317
        %2287 = vmatpush.msra.mxu0 %v1308
        %2288 = vmatpush.msra.mxu0 %v1299
        %2289 = vmatpush.msra.mxu0 %v1290
        %2290 = vmatpush.msra.mxu0 %v1281
        %2291 = vmatpush.msra.mxu0 %v1272
        %2292 = vmatpush.msra.mxu0 %v1263
        %2293 = vmatpush.msra.mxu0 %v1254
        %2294 = vmatpush.msra.mxu0 %v1245
        %2295 = vmatpush.msra.mxu0 %v1236
        %2296 = vmatpush.msra.mxu0 %v1227
        %2297 = vmatpush.msra.mxu0 %v1218
        %2298 = vmatpush.msra.mxu0 %v1209
        %2299 = vmatmul.f32.gmra.mxu0 %v1188
        %v2300 = vpop.f32.mrf.mxu0
        %v2301 = vadd.f32 0.0, %v2300
        %2302 = vmatmul.f32.gmra.mxu0 %v1192
        %v2303 = vpop.f32.mrf.mxu0
        %v2304 = vadd.f32 0.0, %v2303
        %2305 = vmatmul.f32.gmra.mxu0 %v1196
        %v2306 = vpop.f32.mrf.mxu0
        %v2307 = vadd.f32 0.0, %v2306
        %2308 = vmatmul.f32.gmra.mxu0 %v1200
        %v2309 = vpop.f32.mrf.mxu0
        %v2310 = vadd.f32 0.0, %v2309
        %2311 = vdwg.mxu0
        %2312 = vmatpush.msra.mxu0 %v1488
        %2313 = vmatpush.msra.mxu0 %v1479
        %2314 = vmatpush.msra.mxu0 %v1470
        %2315 = vmatpush.msra.mxu0 %v1461
        %2316 = vmatpush.msra.mxu0 %v1452
        %2317 = vmatpush.msra.mxu0 %v1443
        %2318 = vmatpush.msra.mxu0 %v1434
        %2319 = vmatpush.msra.mxu0 %v1425
        %2320 = vmatpush.msra.mxu0 %v1416
        %2321 = vmatpush.msra.mxu0 %v1407
        %2322 = vmatpush.msra.mxu0 %v1398
        %2323 = vmatpush.msra.mxu0 %v1389
        %2324 = vmatpush.msra.mxu0 %v1380
        %2325 = vmatpush.msra.mxu0 %v1371
        %2326 = vmatpush.msra.mxu0 %v1362
        %2327 = vmatpush.msra.mxu0 %v1353
        %2328 = vmatmul.f32.gmra.mxu0 %v1189
        %v2329 = vpop.f32.mrf.mxu0
        %v2330 = vadd.f32 %v2301, %v2329
        %2331 = vmatmul.f32.gmra.mxu0 %v1193
        %v2332 = vpop.f32.mrf.mxu0
        %v2333 = vadd.f32 %v2304, %v2332
        %2334 = vmatmul.f32.gmra.mxu0 %v1197
        %v2335 = vpop.f32.mrf.mxu0
        %v2336 = vadd.f32 %v2307, %v2335
        %2337 = vmatmul.f32.gmra.mxu0 %v1201
        %v2338 = vpop.f32.mrf.mxu0
        %v2339 = vadd.f32 %v2310, %v2338
        %2340 = vdwg.mxu0
        %2341 = vmatpush.msra.mxu0 %v1632
        %2342 = vmatpush.msra.mxu0 %v1623
        %2343 = vmatpush.msra.mxu0 %v1614
        %2344 = vmatpush.msra.mxu0 %v1605
        %2345 = vmatpush.msra.mxu0 %v1596
        %2346 = vmatpush.msra.mxu0 %v1587
        %2347 = vmatpush.msra.mxu0 %v1578
        %2348 = vmatpush.msra.mxu0 %v1569
        %2349 = vmatpush.msra.mxu0 %v1560
        %2350 = vmatpush.msra.mxu0 %v1551
        %2351 = vmatpush.msra.mxu0 %v1542
        %2352 = vmatpush.msra.mxu0 %v1533
        %2353 = vmatpush.msra.mxu0 %v1524
        %2354 = vmatpush.msra.mxu0 %v1515
        %2355 = vmatpush.msra.mxu0 %v1506
        %2356 = vmatpush.msra.mxu0 %v1497
        %2357 = vmatmul.f32.gmra.mxu0 %v1190
        %v2358 = vpop.f32.mrf.mxu0
        %v2359 = vadd.f32 %v2330, %v2358
        %2360 = vmatmul.f32.gmra.mxu0 %v1194
        %v2361 = vpop.f32.mrf.mxu0
        %v2362 = vadd.f32 %v2333, %v2361
        %2363 = vmatmul.f32.gmra.mxu0 %v1198
        %v2364 = vpop.f32.mrf.mxu0
        %v2365 = vadd.f32 %v2336, %v2364
        %2366 = vmatmul.f32.gmra.mxu0 %v1202
        %v2367 = vpop.f32.mrf.mxu0
        %v2368 = vadd.f32 %v2339, %v2367
        %2369 = vdwg.mxu0
        %2370 = vmatpush.msra.mxu0 0.0
        %2371 = vmatpush.msra.mxu0 0.0
        %2372 = vmatpush.msra.mxu0 0.0
        %2373 = vmatpush.msra.mxu0 0.0
        %2374 = vmatpush.msra.mxu0 0.0
        %2375 = vmatpush.msra.mxu0 0.0
        %2376 = vmatpush.msra.mxu0 0.0
        %2377 = vmatpush.msra.mxu0 0.0
        %2378 = vmatpush.msra.mxu0 0.0
        %2379 = vmatpush.msra.mxu0 0.0
        %2380 = vmatpush.msra.mxu0 %v1686
        %2381 = vmatpush.msra.mxu0 %v1677
        %2382 = vmatpush.msra.mxu0 %v1668
        %2383 = vmatpush.msra.mxu0 %v1659
        %2384 = vmatpush.msra.mxu0 %v1650
        %2385 = vmatpush.msra.mxu0 %v1641
        %2386 = vmatmul.f32.gmra.mxu0 %v1692
        %v2387 = vpop.f32.mrf.mxu0
        %v2388 = vadd.f32 %v2359, %v2387
        %2389 = vmatmul.f32.gmra.mxu0 %v1695
        %v2390 = vpop.f32.mrf.mxu0
        %v2391 = vadd.f32 %v2362, %v2390
        %2392 = vmatmul.f32.gmra.mxu0 %v1698
        %v2393 = vpop.f32.mrf.mxu0
        %v2394 = vadd.f32 %v2365, %v2393
        %2395 = vmatmul.f32.gmra.mxu0 %v1701
        %v2396 = vpop.f32.mrf.mxu0
        %v2397 = vadd.f32 %v2368, %v2396
        %2398 = vdwg.mxu0
        %2399 = vmatpush.msra.mxu0 %v1345
        %2400 = vmatpush.msra.mxu0 %v1336
        %2401 = vmatpush.msra.mxu0 %v1327
        %2402 = vmatpush.msra.mxu0 %v1318
        %2403 = vmatpush.msra.mxu0 %v1309
        %2404 = vmatpush.msra.mxu0 %v1300
        %2405 = vmatpush.msra.mxu0 %v1291
        %2406 = vmatpush.msra.mxu0 %v1282
        %2407 = vmatpush.msra.mxu0 %v1273
        %2408 = vmatpush.msra.mxu0 %v1264
        %2409 = vmatpush.msra.mxu0 %v1255
        %2410 = vmatpush.msra.mxu0 %v1246
        %2411 = vmatpush.msra.mxu0 %v1237
        %2412 = vmatpush.msra.mxu0 %v1228
        %2413 = vmatpush.msra.mxu0 %v1219
        %2414 = vmatpush.msra.mxu0 %v1210
        %2415 = vmatmul.f32.gmra.mxu0 %v1188
        %v2416 = vpop.f32.mrf.mxu0
        %v2417 = vadd.f32 0.0, %v2416
        %2418 = vmatmul.f32.gmra.mxu0 %v1192
        %v2419 = vpop.f32.mrf.mxu0
        %v2420 = vadd.f32 0.0, %v2419
        %2421 = vmatmul.f32.gmra.mxu0 %v1196
        %v2422 = vpop.f32.mrf.mxu0
        %v2423 = vadd.f32 0.0, %v2422
        %2424 = vmatmul.f32.gmra.mxu0 %v1200
        %v2425 = vpop.f32.mrf.mxu0
        %v2426 = vadd.f32 0.0, %v2425
        %2427 = vdwg.mxu0
        %2428 = vmatpush.msra.mxu0 %v1489
        %2429 = vmatpush.msra.mxu0 %v1480
        %2430 = vmatpush.msra.mxu0 %v1471
        %2431 = vmatpush.msra.mxu0 %v1462
        %2432 = vmatpush.msra.mxu0 %v1453
        %2433 = vmatpush.msra.mxu0 %v1444
        %2434 = vmatpush.msra.mxu0 %v1435
        %2435 = vmatpush.msra.mxu0 %v1426
        %2436 = vmatpush.msra.mxu0 %v1417
        %2437 = vmatpush.msra.mxu0 %v1408
        %2438 = vmatpush.msra.mxu0 %v1399
        %2439 = vmatpush.msra.mxu0 %v1390
        %2440 = vmatpush.msra.mxu0 %v1381
        %2441 = vmatpush.msra.mxu0 %v1372
        %2442 = vmatpush.msra.mxu0 %v1363
        %2443 = vmatpush.msra.mxu0 %v1354
        %2444 = vmatmul.f32.gmra.mxu0 %v1189
        %v2445 = vpop.f32.mrf.mxu0
        %v2446 = vadd.f32 %v2417, %v2445
        %2447 = vmatmul.f32.gmra.mxu0 %v1193
        %v2448 = vpop.f32.mrf.mxu0
        %v2449 = vadd.f32 %v2420, %v2448
        %2450 = vmatmul.f32.gmra.mxu0 %v1197
        %v2451 = vpop.f32.mrf.mxu0
        %v2452 = vadd.f32 %v2423, %v2451
        %2453 = vmatmul.f32.gmra.mxu0 %v1201
        %v2454 = vpop.f32.mrf.mxu0
        %v2455 = vadd.f32 %v2426, %v2454
        %2456 = vdwg.mxu0
        %2457 = vmatpush.msra.mxu0 %v1633
        %2458 = vmatpush.msra.mxu0 %v1624
        %2459 = vmatpush.msra.mxu0 %v1615
        %2460 = vmatpush.msra.mxu0 %v1606
        %2461 = vmatpush.msra.mxu0 %v1597
        %2462 = vmatpush.msra.mxu0 %v1588
        %2463 = vmatpush.msra.mxu0 %v1579
        %2464 = vmatpush.msra.mxu0 %v1570
        %2465 = vmatpush.msra.mxu0 %v1561
        %2466 = vmatpush.msra.mxu0 %v1552
        %2467 = vmatpush.msra.mxu0 %v1543
        %2468 = vmatpush.msra.mxu0 %v1534
        %2469 = vmatpush.msra.mxu0 %v1525
        %2470 = vmatpush.msra.mxu0 %v1516
        %2471 = vmatpush.msra.mxu0 %v1507
        %2472 = vmatpush.msra.mxu0 %v1498
        %2473 = vmatmul.f32.gmra.mxu0 %v1190
        %v2474 = vpop.f32.mrf.mxu0
        %v2475 = vadd.f32 %v2446, %v2474
        %2476 = vmatmul.f32.gmra.mxu0 %v1194
        %v2477 = vpop.f32.mrf.mxu0
        %v2478 = vadd.f32 %v2449, %v2477
        %2479 = vmatmul.f32.gmra.mxu0 %v1198
        %v2480 = vpop.f32.mrf.mxu0
        %v2481 = vadd.f32 %v2452, %v2480
        %2482 = vmatmul.f32.gmra.mxu0 %v1202
        %v2483 = vpop.f32.mrf.mxu0
        %v2484 = vadd.f32 %v2455, %v2483
        %2485 = vdwg.mxu0
        %2486 = vmatpush.msra.mxu0 0.0
        %2487 = vmatpush.msra.mxu0 0.0
        %2488 = vmatpush.msra.mxu0 0.0
        %2489 = vmatpush.msra.mxu0 0.0
        %2490 = vmatpush.msra.mxu0 0.0
        %2491 = vmatpush.msra.mxu0 0.0
        %2492 = vmatpush.msra.mxu0 0.0
        %2493 = vmatpush.msra.mxu0 0.0
        %2494 = vmatpush.msra.mxu0 0.0
        %2495 = vmatpush.msra.mxu0 0.0
        %2496 = vmatpush.msra.mxu0 %v1687
        %2497 = vmatpush.msra.mxu0 %v1678
        %2498 = vmatpush.msra.mxu0 %v1669
        %2499 = vmatpush.msra.mxu0 %v1660
        %2500 = vmatpush.msra.mxu0 %v1651
        %2501 = vmatpush.msra.mxu0 %v1642
        %2502 = vmatmul.f32.gmra.mxu0 %v1692
        %v2503 = vpop.f32.mrf.mxu0
        %v2504 = vadd.f32 %v2475, %v2503
        %2505 = vmatmul.f32.gmra.mxu0 %v1695
        %v2506 = vpop.f32.mrf.mxu0
        %v2507 = vadd.f32 %v2478, %v2506
        %2508 = vmatmul.f32.gmra.mxu0 %v1698
        %v2509 = vpop.f32.mrf.mxu0
        %v2510 = vadd.f32 %v2481, %v2509
        %2511 = vmatmul.f32.gmra.mxu0 %v1701
        %v2512 = vpop.f32.mrf.mxu0
        %v2513 = vadd.f32 %v2484, %v2512
        %2514 = vdwg.mxu0
        %2515 = vmatpush.msra.mxu0 %v1346
        %2516 = vmatpush.msra.mxu0 %v1337
        %2517 = vmatpush.msra.mxu0 %v1328
        %2518 = vmatpush.msra.mxu0 %v1319
        %2519 = vmatpush.msra.mxu0 %v1310
        %2520 = vmatpush.msra.mxu0 %v1301
        %2521 = vmatpush.msra.mxu0 %v1292
        %2522 = vmatpush.msra.mxu0 %v1283
        %2523 = vmatpush.msra.mxu0 %v1274
        %2524 = vmatpush.msra.mxu0 %v1265
        %2525 = vmatpush.msra.mxu0 %v1256
        %2526 = vmatpush.msra.mxu0 %v1247
        %2527 = vmatpush.msra.mxu0 %v1238
        %2528 = vmatpush.msra.mxu0 %v1229
        %2529 = vmatpush.msra.mxu0 %v1220
        %2530 = vmatpush.msra.mxu0 %v1211
        %2531 = vmatmul.f32.gmra.mxu0 %v1188
        %v2532 = vpop.f32.mrf.mxu0
        %v2533 = vadd.f32 0.0, %v2532
        %2534 = vmatmul.f32.gmra.mxu0 %v1192
        %v2535 = vpop.f32.mrf.mxu0
        %v2536 = vadd.f32 0.0, %v2535
        %2537 = vmatmul.f32.gmra.mxu0 %v1196
        %v2538 = vpop.f32.mrf.mxu0
        %v2539 = vadd.f32 0.0, %v2538
        %2540 = vmatmul.f32.gmra.mxu0 %v1200
        %v2541 = vpop.f32.mrf.mxu0
        %v2542 = vadd.f32 0.0, %v2541
        %2543 = vdwg.mxu0
        %2544 = vmatpush.msra.mxu0 %v1490
        %2545 = vmatpush.msra.mxu0 %v1481
        %2546 = vmatpush.msra.mxu0 %v1472
        %2547 = vmatpush.msra.mxu0 %v1463
        %2548 = vmatpush.msra.mxu0 %v1454
        %2549 = vmatpush.msra.mxu0 %v1445
        %2550 = vmatpush.msra.mxu0 %v1436
        %2551 = vmatpush.msra.mxu0 %v1427
        %2552 = vmatpush.msra.mxu0 %v1418
        %2553 = vmatpush.msra.mxu0 %v1409
        %2554 = vmatpush.msra.mxu0 %v1400
        %2555 = vmatpush.msra.mxu0 %v1391
        %2556 = vmatpush.msra.mxu0 %v1382
        %2557 = vmatpush.msra.mxu0 %v1373
        %2558 = vmatpush.msra.mxu0 %v1364
        %2559 = vmatpush.msra.mxu0 %v1355
        %2560 = vmatmul.f32.gmra.mxu0 %v1189
        %v2561 = vpop.f32.mrf.mxu0
        %v2562 = vadd.f32 %v2533, %v2561
        %2563 = vmatmul.f32.gmra.mxu0 %v1193
        %v2564 = vpop.f32.mrf.mxu0
        %v2565 = vadd.f32 %v2536, %v2564
        %2566 = vmatmul.f32.gmra.mxu0 %v1197
        %v2567 = vpop.f32.mrf.mxu0
        %v2568 = vadd.f32 %v2539, %v2567
        %2569 = vmatmul.f32.gmra.mxu0 %v1201
        %v2570 = vpop.f32.mrf.mxu0
        %v2571 = vadd.f32 %v2542, %v2570
        %2572 = vdwg.mxu0
        %2573 = vmatpush.msra.mxu0 %v1634
        %2574 = vmatpush.msra.mxu0 %v1625
        %2575 = vmatpush.msra.mxu0 %v1616
        %2576 = vmatpush.msra.mxu0 %v1607
        %2577 = vmatpush.msra.mxu0 %v1598
        %2578 = vmatpush.msra.mxu0 %v1589
        %2579 = vmatpush.msra.mxu0 %v1580
        %2580 = vmatpush.msra.mxu0 %v1571
        %2581 = vmatpush.msra.mxu0 %v1562
        %2582 = vmatpush.msra.mxu0 %v1553
        %2583 = vmatpush.msra.mxu0 %v1544
        %2584 = vmatpush.msra.mxu0 %v1535
        %2585 = vmatpush.msra.mxu0 %v1526
        %2586 = vmatpush.msra.mxu0 %v1517
        %2587 = vmatpush.msra.mxu0 %v1508
        %2588 = vmatpush.msra.mxu0 %v1499
        %2589 = vmatmul.f32.gmra.mxu0 %v1190
        %v2590 = vpop.f32.mrf.mxu0
        %v2591 = vadd.f32 %v2562, %v2590
        %2592 = vmatmul.f32.gmra.mxu0 %v1194
        %v2593 = vpop.f32.mrf.mxu0
        %v2594 = vadd.f32 %v2565, %v2593
        %2595 = vmatmul.f32.gmra.mxu0 %v1198
        %v2596 = vpop.f32.mrf.mxu0
        %v2597 = vadd.f32 %v2568, %v2596
        %2598 = vmatmul.f32.gmra.mxu0 %v1202
        %v2599 = vpop.f32.mrf.mxu0
        %v2600 = vadd.f32 %v2571, %v2599
        %2601 = vdwg.mxu0
        %2602 = vmatpush.msra.mxu0 0.0
        %2603 = vmatpush.msra.mxu0 0.0
        %2604 = vmatpush.msra.mxu0 0.0
        %2605 = vmatpush.msra.mxu0 0.0
        %2606 = vmatpush.msra.mxu0 0.0
        %2607 = vmatpush.msra.mxu0 0.0
        %2608 = vmatpush.msra.mxu0 0.0
        %2609 = vmatpush.msra.mxu0 0.0
        %2610 = vmatpush.msra.mxu0 0.0
        %2611 = vmatpush.msra.mxu0 0.0
        %2612 = vmatpush.msra.mxu0 %v1688
        %2613 = vmatpush.msra.mxu0 %v1679
        %2614 = vmatpush.msra.mxu0 %v1670
        %2615 = vmatpush.msra.mxu0 %v1661
        %2616 = vmatpush.msra.mxu0 %v1652
        %2617 = vmatpush.msra.mxu0 %v1643
        %2618 = vmatmul.f32.gmra.mxu0 %v1692
        %v2619 = vpop.f32.mrf.mxu0
        %v2620 = vadd.f32 %v2591, %v2619
        %2621 = vmatmul.f32.gmra.mxu0 %v1695
        %v2622 = vpop.f32.mrf.mxu0
        %v2623 = vadd.f32 %v2594, %v2622
        %2624 = vmatmul.f32.gmra.mxu0 %v1698
        %v2625 = vpop.f32.mrf.mxu0
        %v2626 = vadd.f32 %v2597, %v2625
        %2627 = vmatmul.f32.gmra.mxu0 %v1701
        %v2628 = vpop.f32.mrf.mxu0
        %v2629 = vadd.f32 %v2600, %v2628
        %2630 = vdwg.mxu0
        %2631 = vmatpush.msra.mxu0 %v1347
        %2632 = vmatpush.msra.mxu0 %v1338
        %2633 = vmatpush.msra.mxu0 %v1329
        %2634 = vmatpush.msra.mxu0 %v1320
        %2635 = vmatpush.msra.mxu0 %v1311
        %2636 = vmatpush.msra.mxu0 %v1302
        %2637 = vmatpush.msra.mxu0 %v1293
        %2638 = vmatpush.msra.mxu0 %v1284
        %2639 = vmatpush.msra.mxu0 %v1275
        %2640 = vmatpush.msra.mxu0 %v1266
        %2641 = vmatpush.msra.mxu0 %v1257
        %2642 = vmatpush.msra.mxu0 %v1248
        %2643 = vmatpush.msra.mxu0 %v1239
        %2644 = vmatpush.msra.mxu0 %v1230
        %2645 = vmatpush.msra.mxu0 %v1221
        %2646 = vmatpush.msra.mxu0 %v1212
        %2647 = vmatmul.f32.gmra.mxu0 %v1188
        %v2648 = vpop.f32.mrf.mxu0
        %v2649 = vadd.f32 0.0, %v2648
        %2650 = vmatmul.f32.gmra.mxu0 %v1192
        %v2651 = vpop.f32.mrf.mxu0
        %v2652 = vadd.f32 0.0, %v2651
        %2653 = vmatmul.f32.gmra.mxu0 %v1196
        %v2654 = vpop.f32.mrf.mxu0
        %v2655 = vadd.f32 0.0, %v2654
        %2656 = vmatmul.f32.gmra.mxu0 %v1200
        %v2657 = vpop.f32.mrf.mxu0
        %v2658 = vadd.f32 0.0, %v2657
        %2659 = vdwg.mxu0
        %2660 = vmatpush.msra.mxu0 %v1491
        %2661 = vmatpush.msra.mxu0 %v1482
        %2662 = vmatpush.msra.mxu0 %v1473
        %2663 = vmatpush.msra.mxu0 %v1464
        %2664 = vmatpush.msra.mxu0 %v1455
        %2665 = vmatpush.msra.mxu0 %v1446
        %2666 = vmatpush.msra.mxu0 %v1437
        %2667 = vmatpush.msra.mxu0 %v1428
        %2668 = vmatpush.msra.mxu0 %v1419
        %2669 = vmatpush.msra.mxu0 %v1410
        %2670 = vmatpush.msra.mxu0 %v1401
        %2671 = vmatpush.msra.mxu0 %v1392
        %2672 = vmatpush.msra.mxu0 %v1383
        %2673 = vmatpush.msra.mxu0 %v1374
        %2674 = vmatpush.msra.mxu0 %v1365
        %2675 = vmatpush.msra.mxu0 %v1356
        %2676 = vmatmul.f32.gmra.mxu0 %v1189
        %v2677 = vpop.f32.mrf.mxu0
        %v2678 = vadd.f32 %v2649, %v2677
        %2679 = vmatmul.f32.gmra.mxu0 %v1193
        %v2680 = vpop.f32.mrf.mxu0
        %v2681 = vadd.f32 %v2652, %v2680
        %2682 = vmatmul.f32.gmra.mxu0 %v1197
        %v2683 = vpop.f32.mrf.mxu0
        %v2684 = vadd.f32 %v2655, %v2683
        %2685 = vmatmul.f32.gmra.mxu0 %v1201
        %v2686 = vpop.f32.mrf.mxu0
        %v2687 = vadd.f32 %v2658, %v2686
        %2688 = vdwg.mxu0
        %2689 = vmatpush.msra.mxu0 %v1635
        %2690 = vmatpush.msra.mxu0 %v1626
        %2691 = vmatpush.msra.mxu0 %v1617
        %2692 = vmatpush.msra.mxu0 %v1608
        %2693 = vmatpush.msra.mxu0 %v1599
        %2694 = vmatpush.msra.mxu0 %v1590
        %2695 = vmatpush.msra.mxu0 %v1581
        %2696 = vmatpush.msra.mxu0 %v1572
        %2697 = vmatpush.msra.mxu0 %v1563
        %2698 = vmatpush.msra.mxu0 %v1554
        %2699 = vmatpush.msra.mxu0 %v1545
        %2700 = vmatpush.msra.mxu0 %v1536
        %2701 = vmatpush.msra.mxu0 %v1527
        %2702 = vmatpush.msra.mxu0 %v1518
        %2703 = vmatpush.msra.mxu0 %v1509
        %2704 = vmatpush.msra.mxu0 %v1500
        %2705 = vmatmul.f32.gmra.mxu0 %v1190
        %v2706 = vpop.f32.mrf.mxu0
        %v2707 = vadd.f32 %v2678, %v2706
        %2708 = vmatmul.f32.gmra.mxu0 %v1194
        %v2709 = vpop.f32.mrf.mxu0
        %v2710 = vadd.f32 %v2681, %v2709
        %2711 = vmatmul.f32.gmra.mxu0 %v1198
        %v2712 = vpop.f32.mrf.mxu0
        %v2713 = vadd.f32 %v2684, %v2712
        %2714 = vmatmul.f32.gmra.mxu0 %v1202
        %v2715 = vpop.f32.mrf.mxu0
        %v2716 = vadd.f32 %v2687, %v2715
        %2717 = vdwg.mxu0
        %2718 = vmatpush.msra.mxu0 0.0
        %2719 = vmatpush.msra.mxu0 0.0
        %2720 = vmatpush.msra.mxu0 0.0
        %2721 = vmatpush.msra.mxu0 0.0
        %2722 = vmatpush.msra.mxu0 0.0
        %2723 = vmatpush.msra.mxu0 0.0
        %2724 = vmatpush.msra.mxu0 0.0
        %2725 = vmatpush.msra.mxu0 0.0
        %2726 = vmatpush.msra.mxu0 0.0
        %2727 = vmatpush.msra.mxu0 0.0
        %2728 = vmatpush.msra.mxu0 %v1689
        %2729 = vmatpush.msra.mxu0 %v1680
        %2730 = vmatpush.msra.mxu0 %v1671
        %2731 = vmatpush.msra.mxu0 %v1662
        %2732 = vmatpush.msra.mxu0 %v1653
        %2733 = vmatpush.msra.mxu0 %v1644
        %2734 = vmatmul.f32.gmra.mxu0 %v1692
        %v2735 = vpop.f32.mrf.mxu0
        %v2736 = vadd.f32 %v2707, %v2735
        %2737 = vmatmul.f32.gmra.mxu0 %v1695
        %v2738 = vpop.f32.mrf.mxu0
        %v2739 = vadd.f32 %v2710, %v2738
        %2740 = vmatmul.f32.gmra.mxu0 %v1698
        %v2741 = vpop.f32.mrf.mxu0
        %v2742 = vadd.f32 %v2713, %v2741
        %2743 = vmatmul.f32.gmra.mxu0 %v1701
        %v2744 = vpop.f32.mrf.mxu0
        %v2745 = vadd.f32 %v2716, %v2744
        %2746 = vdwg.mxu0
        %2747 = vst [vmem:[%s1173] sm:$0xff] %v1808
        %2748 = vst [vmem:[%s1173 + $0x8] sm:$0xff] %v1924
        %2749 = vst [vmem:[%s1173 + $0x10] sm:$0xff] %v2040
        %2750 = vst [vmem:[%s1173 + $0x18] sm:$0xff] %v2156
        %2751 = vst [vmem:[%s1173 + $0x20] sm:$0xff] %v2272
        %2752 = vst [vmem:[%s1173 + $0x28] sm:$0xff] %v2388
        %2753 = vst [vmem:[%s1173 + $0x30] sm:$0xff] %v2504
        %2754 = vst [vmem:[%s1173 + $0x38] sm:$0xff] %v2620
        %2755 = vst [vmem:[%s1173 + $0x40] sm:$0xff] %v2736
        %2756 = vst [vmem:[%s1173 + $0x48] sm:$0xff] %v1811
        %2757 = vst [vmem:[%s1173 + $0x50] sm:$0xff] %v1927
        %2758 = vst [vmem:[%s1173 + $0x58] sm:$0xff] %v2043
        %2759 = vst [vmem:[%s1173 + $0x60] sm:$0xff] %v2159
        %2760 = vst [vmem:[%s1173 + $0x68] sm:$0xff] %v2275
        %2761 = vst [vmem:[%s1173 + $0x70] sm:$0xff] %v2391
        %2762 = vst [vmem:[%s1173 + $0x78] sm:$0xff] %v2507
        %2763 = vst [vmem:[%s1173 + $0x80] sm:$0xff] %v2623
        %2764 = vst [vmem:[%s1173 + $0x88] sm:$0xff] %v2739
        %2765 = vst [vmem:[%s1173 + $0x90] sm:$0xff] %v1814
        %2766 = vst [vmem:[%s1173 + $0x98] sm:$0xff] %v1930
        %2767 = vst [vmem:[%s1173 + $0xa0] sm:$0xff] %v2046
        %2768 = vst [vmem:[%s1173 + $0xa8] sm:$0xff] %v2162
        %2769 = vst [vmem:[%s1173 + $0xb0] sm:$0xff] %v2278
        %2770 = vst [vmem:[%s1173 + $0xb8] sm:$0xff] %v2394
        %2771 = vst [vmem:[%s1173 + $0xc0] sm:$0xff] %v2510
        %2772 = vst [vmem:[%s1173 + $0xc8] sm:$0xff] %v2626
        %2773 = vst [vmem:[%s1173 + $0xd0] sm:$0xff] %v2742
        %2774 = vst [vmem:[%s1173 + $0xd8] sm:$0xff] %v1817
        %2775 = vst [vmem:[%s1173 + $0xe0] sm:$0xff] %v1933
        %2776 = vst [vmem:[%s1173 + $0xe8] sm:$0xff] %v2049
        %2777 = vst [vmem:[%s1173 + $0xf0] sm:$0xff] %v2165
        %2778 = vst [vmem:[%s1173 + $0xf8] sm:$0xff] %v2281
        %2779 = vst [vmem:[%s1173 + $0x100] sm:$0xff] %v2397
        %2780 = vst [vmem:[%s1173 + $0x108] sm:$0xff] %v2513
        %2781 = vst [vmem:[%s1173 + $0x110] sm:$0xff] %v2629
        %2782 = vst [vmem:[%s1173 + $0x118] sm:$0xff] %v2745
        %p2783 = scmp.eq.s32.totalorder %s20, 0
        // Predicated region
        $region52: #{model_forward.2} parent=46 // pred_check
          %p2784 = pneg %p2783
        $region53: #{model_forward.2} parent=46 // pred_check_branch
          %2786 = sbr.rel (%p2784) target = $region55
        $region54: #{model_forward.2} parent=46 // pred_region
          %vm2787 = vcmask 15360
          %2788 = vst.msk [vmem:[#allocation2] sm:$0xff] %vm2787, 0.0
          %2789 = vst.msk [vmem:[#allocation2 + $0x8] sm:$0xff] %vm2787, 0.0
          %2790 = vst.msk [vmem:[#allocation2 + $0x10] sm:$0xff] %vm2787, 0.0
          %2791 = vst.msk [vmem:[#allocation2 + $0x18] sm:$0xff] %vm2787, 0.0
        $region55: #{model_forward.2} parent=46 // pred_fallthru
          _
        %v2792 = vld [vmem:[#allocation2] sm:$0xff]
        %v2793 = vld [vmem:[#allocation2 + $0x8] sm:$0xff]
        %v2794 = vld [vmem:[#allocation2 + $0x10] sm:$0xff]
        %v2795 = vld [vmem:[#allocation2 + $0x18] sm:$0xff]
        %v2796 = vadd.f32 %v1808, %v1924
        %v2797 = vadd.f32 %v2796, %v2040
        %v2798 = vadd.f32 %v2797, %v2156
        %v2799 = vadd.f32 %v2798, %v2272
        %v2800 = vadd.f32 %v2799, %v2388
        %v2801 = vadd.f32 %v2800, %v2504
        %v2802 = vadd.f32 %v2801, %v2620
        %v2803 = vadd.f32 %v2802, %v2736
        %2804 = vadd.xlane.f32.xlu0 %v2803
        %v2805 = vpop.xlane.xlu0 %2804
        %v2806 = vadd.f32 %v1811, %v1927
        %v2807 = vadd.f32 %v2806, %v2043
        %v2808 = vadd.f32 %v2807, %v2159
        %v2809 = vadd.f32 %v2808, %v2275
        %v2810 = vadd.f32 %v2809, %v2391
        %v2811 = vadd.f32 %v2810, %v2507
        %v2812 = vadd.f32 %v2811, %v2623
        %v2813 = vadd.f32 %v2812, %v2739
        %2814 = vadd.xlane.f32.xlu0 %v2813
        %v2815 = vpop.xlane.xlu0 %2814
        %v2816 = vadd.f32 %v1814, %v1930
        %v2817 = vadd.f32 %v2816, %v2046
        %v2818 = vadd.f32 %v2817, %v2162
        %v2819 = vadd.f32 %v2818, %v2278
        %v2820 = vadd.f32 %v2819, %v2394
        %v2821 = vadd.f32 %v2820, %v2510
        %v2822 = vadd.f32 %v2821, %v2626
        %v2823 = vadd.f32 %v2822, %v2742
        %2824 = vadd.xlane.f32.xlu0 %v2823
        %v2825 = vpop.xlane.xlu0 %2824
        %v2826 = vadd.f32 %v1817, %v1933
        %v2827 = vadd.f32 %v2826, %v2049
        %v2828 = vadd.f32 %v2827, %v2165
        %v2829 = vadd.f32 %v2828, %v2281
        %v2830 = vadd.f32 %v2829, %v2397
        %v2831 = vadd.f32 %v2830, %v2513
        %v2832 = vadd.f32 %v2831, %v2629
        %v2833 = vadd.f32 %v2832, %v2745
        %2834 = vadd.xlane.f32.xlu0 %v2833
        %v2835 = vpop.xlane.xlu0 %2834
        %v2836 = vadd.f32 %v2792, %v2805
        %v2837 = vadd.f32 %v2793, %v2815
        %v2838 = vadd.f32 %v2794, %v2825
        %v2839 = vadd.f32 %v2795, %v2835
        %vm2840 = vcmask 7168
        %2841 = vst.msk [vmem:[#allocation2] sm:$0xff] %vm2840, %v2836
        %2842 = vst.msk [vmem:[#allocation2 + $0x8] sm:$0xff] %vm2840, %v2837
        %2843 = vst.msk [vmem:[#allocation2 + $0x10] sm:$0xff] %vm2840, %v2838
        %2844 = vst.msk [vmem:[#allocation2 + $0x18] sm:$0xff] %vm2840, %v2839
        %v2845 = vld [vmem:[#allocation2] sm:$0xff]
        %v2846 = vld [vmem:[#allocation2 + $0x8] sm:$0xff]
        %v2847 = vld [vmem:[#allocation2 + $0x10] sm:$0xff]
        %v2848 = vld [vmem:[#allocation2 + $0x18] sm:$0xff]
        %v2849 = vmul.f32 %v1808, %v1808
        %v2850 = vmul.f32 %v1924, %v1924
        %v2851 = vmul.f32 %v2040, %v2040
        %v2852 = vmul.f32 %v2156, %v2156
        %v2853 = vmul.f32 %v2272, %v2272
        %v2854 = vmul.f32 %v2388, %v2388
        %v2855 = vmul.f32 %v2504, %v2504
        %v2856 = vmul.f32 %v2620, %v2620
        %v2857 = vmul.f32 %v2736, %v2736
        %v2858 = vmul.f32 %v1811, %v1811
        %v2859 = vmul.f32 %v1927, %v1927
        %v2860 = vmul.f32 %v2043, %v2043
        %v2861 = vmul.f32 %v2159, %v2159
        %v2862 = vmul.f32 %v2275, %v2275
        %v2863 = vmul.f32 %v2391, %v2391
        %v2864 = vmul.f32 %v2507, %v2507
        %v2865 = vmul.f32 %v2623, %v2623
        %v2866 = vmul.f32 %v2739, %v2739
        %v2867 = vmul.f32 %v1814, %v1814
        %v2868 = vmul.f32 %v1930, %v1930
        %v2869 = vmul.f32 %v2046, %v2046
        %v2870 = vmul.f32 %v2162, %v2162
        %v2871 = vmul.f32 %v2278, %v2278
        %v2872 = vmul.f32 %v2394, %v2394
        %v2873 = vmul.f32 %v2510, %v2510
        %v2874 = vmul.f32 %v2626, %v2626
        %v2875 = vmul.f32 %v2742, %v2742
        %v2876 = vmul.f32 %v1817, %v1817
        %v2877 = vmul.f32 %v1933, %v1933
        %v2878 = vmul.f32 %v2049, %v2049
        %v2879 = vmul.f32 %v2165, %v2165
        %v2880 = vmul.f32 %v2281, %v2281
        %v2881 = vmul.f32 %v2397, %v2397
        %v2882 = vmul.f32 %v2513, %v2513
        %v2883 = vmul.f32 %v2629, %v2629
        %v2884 = vmul.f32 %v2745, %v2745
        %v2885 = vadd.f32 %v2849, %v2850
        %v2886 = vadd.f32 %v2885, %v2851
        %v2887 = vadd.f32 %v2886, %v2852
        %v2888 = vadd.f32 %v2887, %v2853
        %v2889 = vadd.f32 %v2888, %v2854
        %v2890 = vadd.f32 %v2889, %v2855
        %v2891 = vadd.f32 %v2890, %v2856
        %v2892 = vadd.f32 %v2891, %v2857
        %2893 = vadd.xlane.f32.xlu0 %v2892
        %v2894 = vpop.xlane.xlu0 %2893
        %v2895 = vadd.f32 %v2858, %v2859
        %v2896 = vadd.f32 %v2895, %v2860
        %v2897 = vadd.f32 %v2896, %v2861
        %v2898 = vadd.f32 %v2897, %v2862
        %v2899 = vadd.f32 %v2898, %v2863
        %v2900 = vadd.f32 %v2899, %v2864
        %v2901 = vadd.f32 %v2900, %v2865
        %v2902 = vadd.f32 %v2901, %v2866
        %2903 = vadd.xlane.f32.xlu0 %v2902
        %v2904 = vpop.xlane.xlu0 %2903
        %v2905 = vadd.f32 %v2867, %v2868
        %v2906 = vadd.f32 %v2905, %v2869
        %v2907 = vadd.f32 %v2906, %v2870
        %v2908 = vadd.f32 %v2907, %v2871
        %v2909 = vadd.f32 %v2908, %v2872
        %v2910 = vadd.f32 %v2909, %v2873
        %v2911 = vadd.f32 %v2910, %v2874
        %v2912 = vadd.f32 %v2911, %v2875
        %2913 = vadd.xlane.f32.xlu0 %v2912
        %v2914 = vpop.xlane.xlu0 %2913
        %v2915 = vadd.f32 %v2876, %v2877
        %v2916 = vadd.f32 %v2915, %v2878
        %v2917 = vadd.f32 %v2916, %v2879
        %v2918 = vadd.f32 %v2917, %v2880
        %v2919 = vadd.f32 %v2918, %v2881
        %v2920 = vadd.f32 %v2919, %v2882
        %v2921 = vadd.f32 %v2920, %v2883
        %v2922 = vadd.f32 %v2921, %v2884
        %2923 = vadd.xlane.f32.xlu0 %v2922
        %v2924 = vpop.xlane.xlu0 %2923
        %v2925 = vadd.f32 %v2845, %v2894
        %v2926 = vadd.f32 %v2846, %v2904
        %v2927 = vadd.f32 %v2847, %v2914
        %v2928 = vadd.f32 %v2848, %v2924
        %vm2929 = vcmask 15368
        %2930 = vst.msk [vmem:[#allocation2] sm:$0xff] %vm2929, %v2925
        %2931 = vst.msk [vmem:[#allocation2 + $0x8] sm:$0xff] %vm2929, %v2926
        %2932 = vst.msk [vmem:[#allocation2 + $0x10] sm:$0xff] %vm2929, %v2927
        %2933 = vst.msk [vmem:[#allocation2 + $0x18] sm:$0xff] %vm2929, %v2928
        %p2934 = scmp.eq.s32.totalorder %s20, 2
        // Predicated region
        $region56: #{model_forward.2} parent=46 // pred_check
          %p2935 = pneg %p2934
        $region57: #{model_forward.2} parent=46 // pred_check_branch
          %2937 = sbr.rel (%p2935) target = $region59
        $region58: #{model_forward.2} parent=46 // pred_region
          %v2938 = vld [vmem:[#allocation2] sm:$0xff]
          %v2939 = vld [vmem:[#allocation2 + $0x8] sm:$0xff]
          %v2940 = vld [vmem:[#allocation2 + $0x10] sm:$0xff]
          %v2941 = vld [vmem:[#allocation2 + $0x18] sm:$0xff]
          %vm2942 = vcmask 15360
          %2943 = vst.msk [vmem:[%s1187] sm:$0xff] %vm2942, %v2938
          %2944 = vst.msk [vmem:[%s1187 + $0x8] sm:$0xff] %vm2942, %v2939
          %2945 = vst.msk [vmem:[%s1187 + $0x10] sm:$0xff] %vm2942, %v2940
          %2946 = vst.msk [vmem:[%s1187 + $0x18] sm:$0xff] %vm2942, %v2941
        $region59: #{model_forward.2} parent=46 // pred_fallthru
          _
        %s2947 = sand.u32 %s86, 1
        %s2948 = sand.u32 %s86, 1
        %s2949 = smul.addr %s2948, 288
        %s2950 = scalar_lea.vmem [#allocation4], %s2949
        %p2951 = scmp.lt.s32.totalorder %s19, 1
        %s2952 = scalar_select %p2951, %s19, 1
        %s2953 = smul.addr %s2952, 4
        %s2954 = smul.addr %s2953, 8
        %s2955 = scalar_lea.vmem %s3, %s2954
        // Predicated region
        $region60: #{model_forward.2} parent=46 // pred_check
          %p2956 = pneg %p96
        $region61: #{model_forward.2} parent=46 // pred_check_branch
          %2958 = sbr.rel (%p2956) target = $region63
        $region62: #{model_forward.2} parent=46 // pred_region
          %s2959 = smul.u32 9, %s20
          %s2960 = smul.addr %s19, 108
          %s2961 = sadd.s32 %s2959, %s2960
          %s2962 = smul.addr %s2961, 8
          %s2963 = scalar_lea.vmem %s2, %s2962
          // Predicated region
          $region64: #{model_forward.2} parent=62 // pred_check
            _
          $region65: #{model_forward.2} parent=62 // pred_check_branch
            %2965 = sbr.rel (0) target = $region67
          $region66: #{model_forward.2} parent=62 // pred_region
            // Predicated region
            $region68: #{model_forward.2} parent=66 // pred_check
              _
            $region69: #{model_forward.2} parent=66 // pred_check_branch
              %2967 = sbr.rel (0) target = $region71
            $region70: #{model_forward.2} parent=66 // pred_region
              loop: start=0, step=1, limit=1
              $region72: #{model_forward.2} parent=70 // loop_pre_header
                _
              $region73: #{model_forward.2} parent=70 // loop_header
                %s2969 = sphi 0, %s2973
                %p2970 = scmp.ge.s32.totalorder %s2969, 1
                %s2974 = sphi %s2950, %s2950
                %s2975 = sphi %s2963, %s2963
              $region74: #{model_forward.2} parent=70 // loop_header_branch
                %2972 = sbr.rel (%p2970) target = $region78
              $region75: #{model_forward.2} parent=70 // loop_body
                %v2976 = vld [vmem:[%s2974] sm:$0xff]
                %2977 = vst [vmem:[%s2975] sm:$0xff] %v2976
                %v2978 = vld [vmem:[%s2974 + $0x8] sm:$0xff]
                %2979 = vst [vmem:[%s2975 + $0x8] sm:$0xff] %v2978
                %v2980 = vld [vmem:[%s2974 + $0x10] sm:$0xff]
                %2981 = vst [vmem:[%s2975 + $0x10] sm:$0xff] %v2980
                %v2982 = vld [vmem:[%s2974 + $0x18] sm:$0xff]
                %2983 = vst [vmem:[%s2975 + $0x18] sm:$0xff] %v2982
                %v2984 = vld [vmem:[%s2974 + $0x20] sm:$0xff]
                %2985 = vst [vmem:[%s2975 + $0x20] sm:$0xff] %v2984
                %v2986 = vld [vmem:[%s2974 + $0x28] sm:$0xff]
                %2987 = vst [vmem:[%s2975 + $0x28] sm:$0xff] %v2986
                %v2988 = vld [vmem:[%s2974 + $0x30] sm:$0xff]
                %2989 = vst [vmem:[%s2975 + $0x30] sm:$0xff] %v2988
                %v2990 = vld [vmem:[%s2974 + $0x38] sm:$0xff]
                %2991 = vst [vmem:[%s2975 + $0x38] sm:$0xff] %v2990
                %v2992 = vld [vmem:[%s2974 + $0x40] sm:$0xff]
                %2993 = vst [vmem:[%s2975 + $0x40] sm:$0xff] %v2992
                %v2994 = vld [vmem:[%s2974 + $0x48] sm:$0xff]
                %2995 = vst [vmem:[%s2975 + $0xd8] sm:$0xff] %v2994
                %v2996 = vld [vmem:[%s2974 + $0x50] sm:$0xff]
                %2997 = vst [vmem:[%s2975 + $0xe0] sm:$0xff] %v2996
                %v2998 = vld [vmem:[%s2974 + $0x58] sm:$0xff]
                %2999 = vst [vmem:[%s2975 + $0xe8] sm:$0xff] %v2998
                %v3000 = vld [vmem:[%s2974 + $0x60] sm:$0xff]
                %3001 = vst [vmem:[%s2975 + $0xf0] sm:$0xff] %v3000
                %v3002 = vld [vmem:[%s2974 + $0x68] sm:$0xff]
                %3003 = vst [vmem:[%s2975 + $0xf8] sm:$0xff] %v3002
                %v3004 = vld [vmem:[%s2974 + $0x70] sm:$0xff]
                %3005 = vst [vmem:[%s2975 + $0x100] sm:$0xff] %v3004
                %v3006 = vld [vmem:[%s2974 + $0x78] sm:$0xff]
                %3007 = vst [vmem:[%s2975 + $0x108] sm:$0xff] %v3006
                %v3008 = vld [vmem:[%s2974 + $0x80] sm:$0xff]
                %3009 = vst [vmem:[%s2975 + $0x110] sm:$0xff] %v3008
                %v3010 = vld [vmem:[%s2974 + $0x88] sm:$0xff]
                %3011 = vst [vmem:[%s2975 + $0x118] sm:$0xff] %v3010
                %v3012 = vld [vmem:[%s2974 + $0x90] sm:$0xff]
                %3013 = vst [vmem:[%s2975 + $0x1b0] sm:$0xff] %v3012
                %v3014 = vld [vmem:[%s2974 + $0x98] sm:$0xff]
                %3015 = vst [vmem:[%s2975 + $0x1b8] sm:$0xff] %v3014
                %v3016 = vld [vmem:[%s2974 + $0xa0] sm:$0xff]
                %3017 = vst [vmem:[%s2975 + $0x1c0] sm:$0xff] %v3016
                %v3018 = vld [vmem:[%s2974 + $0xa8] sm:$0xff]
                %3019 = vst [vmem:[%s2975 + $0x1c8] sm:$0xff] %v3018
                %v3020 = vld [vmem:[%s2974 + $0xb0] sm:$0xff]
                %3021 = vst [vmem:[%s2975 + $0x1d0] sm:$0xff] %v3020
                %v3022 = vld [vmem:[%s2974 + $0xb8] sm:$0xff]
                %3023 = vst [vmem:[%s2975 + $0x1d8] sm:$0xff] %v3022
                %v3024 = vld [vmem:[%s2974 + $0xc0] sm:$0xff]
                %3025 = vst [vmem:[%s2975 + $0x1e0] sm:$0xff] %v3024
                %v3026 = vld [vmem:[%s2974 + $0xc8] sm:$0xff]
                %3027 = vst [vmem:[%s2975 + $0x1e8] sm:$0xff] %v3026
                %v3028 = vld [vmem:[%s2974 + $0xd0] sm:$0xff]
                %3029 = vst [vmem:[%s2975 + $0x1f0] sm:$0xff] %v3028
                %v3030 = vld [vmem:[%s2974 + $0xd8] sm:$0xff]
                %3031 = vst [vmem:[%s2975 + $0x288] sm:$0xff] %v3030
                %v3032 = vld [vmem:[%s2974 + $0xe0] sm:$0xff]
                %3033 = vst [vmem:[%s2975 + $0x290] sm:$0xff] %v3032
                %v3034 = vld [vmem:[%s2974 + $0xe8] sm:$0xff]
                %3035 = vst [vmem:[%s2975 + $0x298] sm:$0xff] %v3034
                %v3036 = vld [vmem:[%s2974 + $0xf0] sm:$0xff]
                %3037 = vst [vmem:[%s2975 + $0x2a0] sm:$0xff] %v3036
                %v3038 = vld [vmem:[%s2974 + $0xf8] sm:$0xff]
                %3039 = vst [vmem:[%s2975 + $0x2a8] sm:$0xff] %v3038
                %v3040 = vld [vmem:[%s2974 + $0x100] sm:$0xff]
                %3041 = vst [vmem:[%s2975 + $0x2b0] sm:$0xff] %v3040
                %v3042 = vld [vmem:[%s2974 + $0x108] sm:$0xff]
                %3043 = vst [vmem:[%s2975 + $0x2b8] sm:$0xff] %v3042
                %v3044 = vld [vmem:[%s2974 + $0x110] sm:$0xff]
                %3045 = vst [vmem:[%s2975 + $0x2c0] sm:$0xff] %v3044
                %v3046 = vld [vmem:[%s2974 + $0x118] sm:$0xff]
                %3047 = vst [vmem:[%s2975 + $0x2c8] sm:$0xff] %v3046
              $region76: #{model_forward.2} parent=70 // loop_footer
                %s2973 = sadd.s32 1, %s2969
              $region77: #{model_forward.2} parent=70 // loop_footer_branch
                %2968 = sbr.rel target = $region73
              $region78: #{model_forward.2} parent=70 // loop_exit
                _
            $region71: #{model_forward.2} parent=66 // pred_fallthru
              _
            // Predicated region
            $region79: #{model_forward.2} parent=66 // pred_check
              _
            $region80: #{model_forward.2} parent=66 // pred_check_branch
              %3049 = sbr.rel target = $region82
            $region81: #{model_forward.2} parent=66 // pred_region
              _
            $region82: #{model_forward.2} parent=66 // pred_fallthru
              _
          $region67: #{model_forward.2} parent=62 // pred_fallthru
            _
          %3050 = vnop
        $region63: #{model_forward.2} parent=46 // pred_fallthru
          _
        // Predicated region
        $region83: #{model_forward.2} parent=46 // pred_check
          %p3051 = pneg %p122
        $region84: #{model_forward.2} parent=46 // pred_check_branch
          %3053 = sbr.rel (%p3051) target = $region86
        $region85: #{model_forward.2} parent=46 // pred_region
          _
        $region86: #{model_forward.2} parent=46 // pred_fallthru
          _
      $region47: #{model_forward.2} parent=5 // pred_fallthru
        _
      %p3054 = scmp.le.s32.totalorder 2, %s10
      // Predicated region
      $region87: #{model_forward.2} parent=5 // pred_check
        %p3055 = pneg %p3054
      $region88: #{model_forward.2} parent=5 // pred_check_branch
        %3057 = sbr.rel (%p3055) target = $region90
      $region89: #{model_forward.2} parent=5 // pred_region
        %s3058 = ssub.s32 %s10, 2
        // Predicated region
        $region91: #{model_forward.2} parent=89 // pred_check
          %p3059 = pneg %p102
        $region92: #{model_forward.2} parent=89 // pred_check_branch
          %3061 = sbr.rel (%p3059) target = $region94
        $region93: #{model_forward.2} parent=89 // pred_region
          %s3062 = sand.u32 %s87, 1
          %s3063 = sand.u32 %s87, 1
          %s3064 = smul.addr %s3063, 288
          %s3065 = scalar_lea.vmem [#allocation4], %s3064
        $region94: #{model_forward.2} parent=89 // pred_fallthru
          _
        // Predicated region
        $region95: #{model_forward.2} parent=89 // pred_check
          %p3066 = pneg %p128
        $region96: #{model_forward.2} parent=89 // pred_check_branch
          %3068 = sbr.rel (%p3066) target = $region98
        $region97: #{model_forward.2} parent=89 // pred_region
          %p3069 = scmp.lt.s32.totalorder %s21, 1
          %s3070 = scalar_select %p3069, %s21, 1
          %s3071 = smul.addr %s3070, 4
          %s3072 = smul.addr %s3071, 8
          %s3073 = scalar_lea.vmem %s3, %s3072
        $region98: #{model_forward.2} parent=89 // pred_fallthru
          _
      $region90: #{model_forward.2} parent=5 // pred_fallthru
        _
    $region6: #{model_forward.2} parent=1 // loop_footer
      %s14 = sadd.s32 1, %s10
    $region7: #{model_forward.2} parent=1 // loop_footer_branch
      %9 = sbr.rel target = $region3
    $region8: #{model_forward.2} parent=1 // loop_exit
      _

</llo_original>
